<compile_context>
chip_gen: v6e
topology: v6e:2x2x1
jax: 0.10.0
libtpu: 0.0.40
codegen_flags: <defaults>
</compile_context>

<pallas_src>
import functools

import jax
import jax.numpy as jnp
from jax.experimental import pallas as pl
from jax.experimental.pallas import tpu as pltpu


def _round_up(x, m):
    return (x + m - 1) // m * m


def _conv3d_block_kernel(x0_ref, x1_ref, x2_ref, w_ref, shift_ref, o_ref, *, H, W):
    # x{0,1,2}_ref: (H+2, W+2, Cin_p) bf16   padded input slices at depth d+0, d+1, d+2
    # w_ref:        (27, Cin_p, Cpad) bf16   folded (BN-scale * conv) weights, tap-major
    # shift_ref:    (1, Cpad)         f32    folded BN shift (+ conv bias)
    # o_ref:        (Hp*Wp, Cpad)     bf16   output depth slice after ReLU + MaxPool(1,2,2)
    Hp, Wp = H // 2, W // 2
    Cp = o_ref.shape[-1]
    M = H * W

    # In-kernel im2col: 27 taps formed from static slices, accumulated into one f32 acc.
    xs = (x0_ref[...], x1_ref[...], x2_ref[...])
    acc = jnp.zeros((M, Cp), jnp.float32)
    tap = 0
    for kd in range(3):
        xv = xs[kd]
        for kh in range(3):
            for kw in range(3):
                patch = xv[kh:kh + H, kw:kw + W, :].reshape(M, -1)   # (H*W, Cin_p) bf16
                acc = acc + jnp.dot(patch, w_ref[tap],
                                    preferred_element_type=jnp.float32)
                tap += 1

    # Folded BN shift + ReLU, all in f32 (v5e-friendly); scale already folded into weights.
    y = jnp.maximum(acc + shift_ref[...], 0.0)                       # (H*W, Cp)

    # MaxPool3d((1,2,2)) as two pairwise VPU maxima (no multi-axis reduction).
    y = y.reshape(Hp, 2, Wp, 2, Cp)
    y = jnp.maximum(y[:, 0], y[:, 1])                                # pool H pairs -> (Hp, Wp, 2, Cp)
    y = jnp.maximum(y[:, :, 0], y[:, :, 1])                          # pool W pairs -> (Hp, Wp, Cp)

    # Cast only at the final store (bf16 writeback).
    o_ref[...] = y.reshape(Hp * Wp, Cp).astype(o_ref.dtype)


def conv3d_block_pallas(x_ncdhw, w_oidhw, conv_bias, gamma, beta,
                        running_mean, running_var, eps=1e-5,
                        mxu_dtype=jnp.bfloat16):
    """Forward of Conv3DBlock (inference). x: (N, Cin, D, H, W) -> (N, Cout, D, H//2, W//2)."""
    N, Cin, D, H, W = x_ncdhw.shape
    Cout, Cin_w, KD, KH, KW = w_oidhw.shape
    assert Cin_w == Cin
    pad = 1
    assert KD == KH == KW == 3 and pad == 1, "kernel written for kernel_size=3, padding=1"
    # PyTorch MaxPool3d((1,2,2)) floor-truncates odd H/W; this path assumes even H/W.
    assert H % 2 == 0 and W % 2 == 0, "even H and W required"
    Hp, Wp = H // 2, W // 2

    Cin_p = _round_up(Cin, 8)        # sublane-align the contraction (free for Cin % 8 == 0)
    Cpad = _round_up(Cout, 128)      # lane-dense output columns

    # ---- glue (plain JAX): layout + halo pad + bf16 cast (single ~1x pass, no im2col) --------
    x_ndhwc = jnp.transpose(x_ncdhw, (0, 2, 3, 4, 1))
    x_pad = jnp.pad(
        x_ndhwc,
        ((0, 0), (pad, pad), (pad, pad), (pad, pad), (0, Cin_p - Cin)),
    ).astype(mxu_dtype)                                   # (N, D+2, H+2, W+2, Cin_p)

    # Fold BatchNorm (eval mode): scale into the weight columns (f32, before bf16 cast),
    # bias/mean/beta into a single per-channel shift.
    scale = gamma / jnp.sqrt(running_var + eps)                       # (Cout,)
    shift = beta + scale * (conv_bias - running_mean)                 # (Cout,)
    w_t = jnp.transpose(w_oidhw, (2, 3, 4, 1, 0)) * scale             # (3,3,3,Cin,Cout) scaled
    w_t = jnp.pad(w_t, ((0, 0), (0, 0), (0, 0),
                        (0, Cin_p - Cin), (0, Cpad - Cout)))
    w_taps = w_t.reshape(27, Cin_p, Cpad).astype(mxu_dtype)           # tap-major weights
    shift = jnp.pad(shift, (0, Cpad - Cout)).reshape(1, Cpad).astype(jnp.float32)

    kernel = functools.partial(_conv3d_block_kernel, H=H, W=W)

    # Three specs over the SAME padded input, depth-offset by kd: a 1-deep D halo without
    # overlapping blocks and without any wrapper-side replication.
    x_specs = [
        pl.BlockSpec((None, None, H + 2, W + 2, Cin_p),
                     lambda n, d, kd=kd: (n, d + kd, 0, 0, 0))
        for kd in range(3)
    ]

    out_flat = pl.pallas_call(
        kernel,
        out_shape=jax.ShapeDtypeStruct((N, D, Hp * Wp, Cpad), jnp.bfloat16),
        grid=(N, D),
        in_specs=x_specs + [
            pl.BlockSpec((27, Cin_p, Cpad), lambda n, d: (0, 0, 0)),   # grid-invariant weights
            pl.BlockSpec((1, Cpad), lambda n, d: (0, 0)),              # grid-invariant shift
        ],
        out_specs=pl.BlockSpec((None, None, Hp * Wp, Cpad), lambda n, d: (n, d, 0, 0)),
        compiler_params=pltpu.CompilerParams(
            dimension_semantics=("parallel", "parallel"),
            vmem_limit_bytes=48 * 1024 * 1024,   # explicit budget: safe on v7x (64 MiB), v6e, v5e
        ),
    )(x_pad, x_pad, x_pad, w_taps, shift)

    # Back to PyTorch NCDHW layout; drop channel padding; return f32.
    out = out_flat.reshape(N, D, Hp, Wp, Cpad)[..., :Cout].astype(jnp.float32)
    return jnp.transpose(out, (0, 4, 1, 2, 3))


def reference_jax(x, w, b, gamma, beta, mean, var, eps=1e-5):
    conv = jax.lax.conv_general_dilated(
        x, w, window_strides=(1, 1, 1),
        padding=((1, 1), (1, 1), (1, 1)),
        dimension_numbers=("NCDHW", "OIDHW", "NCDHW"))
    conv = conv + b[None, :, None, None, None]
    y = (gamma[None, :, None, None, None]
         * (conv - mean[None, :, None, None, None])
         / jnp.sqrt(var + eps)[None, :, None, None, None]
         + beta[None, :, None, None, None])
    y = jnp.maximum(y, 0.0)
    N, C, D, H, W = y.shape
    return y.reshape(N, C, D, H // 2, 2, W // 2, 2).max(axis=(4, 6))


if __name__ == "__main__":
    # Small shapes consistent with the module: N=2, Cin=4, Cout=8, D=4, H=W=8, k=3, pad=1
    N, Cin, Cout, D, H, W, K = 2, 4, 8, 4, 8, 8, 3

    key = jax.random.PRNGKey(0)
    k1, k2, k3, k4, k5, k6, k7 = jax.random.split(key, 7)
    x = jax.random.normal(k1, (N, Cin, D, H, W), jnp.float32)
    w = jax.random.normal(k2, (Cout, Cin, K, K, K), jnp.float32) * 0.1
    conv_bias = jax.random.normal(k3, (Cout,), jnp.float32) * 0.1
    gamma = 1.0 + 0.1 * jax.random.normal(k4, (Cout,), jnp.float32)
    beta = 0.1 * jax.random.normal(k5, (Cout,), jnp.float32)
    running_mean = 0.1 * jax.random.normal(k6, (Cout,), jnp.float32)
    running_var = jax.random.uniform(k7, (Cout,), jnp.float32, 0.5, 1.5)

    out = conv3d_block_pallas(x, w, conv_bias, gamma, beta,
                              running_mean, running_var)
    out = jax.block_until_ready(out)

    ref = reference_jax(x, w, conv_bias, gamma, beta, running_mean, running_var)
    assert out.shape == (N, Cout, D, H // 2, W // 2), out.shape
    # Tolerance relaxed vs. pure-f32: bf16 MXU operands (f32 accumulation), BN scale folded
    # into bf16 weights, and bf16 output store.
    if not jnp.allclose(out, ref, atol=4e-2, rtol=4e-2):
        raise AssertionError("Pallas output does not match JAX reference")

    print("KERNEL_OK")
</pallas_src>

<mosaic_0001>
module attributes {stable_mosaic.version = 11 : i64} {
  func.func @_conv3d_block_kernel(%arg0: i32, %arg1: i32, %arg2: memref<1x1x10x10x8xbf16, #tpu.memory_space<vmem>>, %arg3: memref<1x1x10x10x8xbf16, #tpu.memory_space<vmem>>, %arg4: memref<1x1x10x10x8xbf16, #tpu.memory_space<vmem>>, %arg5: memref<27x8x128xbf16, #tpu.memory_space<vmem>>, %arg6: memref<1x128xf32, #tpu.memory_space<vmem>>, %arg7: memref<1x1x16x128xbf16, #tpu.memory_space<vmem>>) attributes {dimension_semantics = [#tpu.dimension_semantics<parallel>, #tpu.dimension_semantics<parallel>], iteration_bounds = array<i64: 2, 4>, scalar_prefetch = 0 : i64, scratch_operands = 0 : i64, tpu.core_type = #tpu.core_type<tc>, window_params = [{transform_indices = @transform_0, window_bounds = array<i64: 1, 1, 10, 10, 8>}, {transform_indices = @transform_1, window_bounds = array<i64: 1, 1, 10, 10, 8>}, {transform_indices = @transform_2, window_bounds = array<i64: 1, 1, 10, 10, 8>}, {pipeline_mode = #tpu.pipeline_mode<synchronous>, transform_indices = @transform_3, window_bounds = array<i64: 27, 8, 128>}, {pipeline_mode = #tpu.pipeline_mode<synchronous>, transform_indices = @transform_4, window_bounds = array<i64: 1, 128>}, {transform_indices = @transform_5, window_bounds = array<i64: 1, 1, 16, 128>}]} {
    %c0 = arith.constant 0 : index
    %c0_0 = arith.constant 0 : index
    %c0_1 = arith.constant 0 : index
    %c0_2 = arith.constant 0 : index
    %c0_3 = arith.constant 0 : index
    %0 = vector.load %arg2[%c0, %c0_0, %c0_1, %c0_2, %c0_3] : memref<1x1x10x10x8xbf16, #tpu.memory_space<vmem>>, vector<1x1x10x10x8xbf16>
    %1 = vector.shape_cast %0 : vector<1x1x10x10x8xbf16> to vector<10x10x8xbf16>
    %c0_4 = arith.constant 0 : index
    %c0_5 = arith.constant 0 : index
    %c0_6 = arith.constant 0 : index
    %c0_7 = arith.constant 0 : index
    %c0_8 = arith.constant 0 : index
    %2 = vector.load %arg3[%c0_4, %c0_5, %c0_6, %c0_7, %c0_8] : memref<1x1x10x10x8xbf16, #tpu.memory_space<vmem>>, vector<1x1x10x10x8xbf16>
    %3 = vector.shape_cast %2 : vector<1x1x10x10x8xbf16> to vector<10x10x8xbf16>
    %c0_9 = arith.constant 0 : index
    %c0_10 = arith.constant 0 : index
    %c0_11 = arith.constant 0 : index
    %c0_12 = arith.constant 0 : index
    %c0_13 = arith.constant 0 : index
    %4 = vector.load %arg4[%c0_9, %c0_10, %c0_11, %c0_12, %c0_13] : memref<1x1x10x10x8xbf16, #tpu.memory_space<vmem>>, vector<1x1x10x10x8xbf16>
    %5 = vector.shape_cast %4 : vector<1x1x10x10x8xbf16> to vector<10x10x8xbf16>
    %cst = arith.constant 0.000000e+00 : f32
    %6 = vector.broadcast %cst : f32 to vector<64x128xf32>
    %7 = vector.extract_strided_slice %1 {offsets = [0, 0, 0], sizes = [8, 8, 8], strides = [1, 1, 1]} : vector<10x10x8xbf16> to vector<8x8x8xbf16>
    %8 = vector.shape_cast %7 : vector<8x8x8xbf16> to vector<64x8xbf16>
    %c0_14 = arith.constant 0 : index
    %c0_15 = arith.constant 0 : index
    %c0_16 = arith.constant 0 : index
    %9 = vector.load %arg5[%c0_14, %c0_15, %c0_16] : memref<27x8x128xbf16, #tpu.memory_space<vmem>>, vector<1x8x128xbf16>
    %10 = vector.shape_cast %9 : vector<1x8x128xbf16> to vector<8x128xbf16>
    %cst_17 = arith.constant dense<0.000000e+00> : vector<64x128xf32>
    %11 = tpu.matmul %8, %10, %cst_17 {dimension_numbers = #tpu.dot_dimension_numbers<[1], [0], [0], [1], [0, 0, 1, 1], [], []>} : vector<64x8xbf16>, vector<8x128xbf16>, vector<64x128xf32> -> vector<64x128xf32>
    %12 = arith.addf %6, %11 : vector<64x128xf32>
    %13 = vector.extract_strided_slice %1 {offsets = [0, 1, 0], sizes = [8, 8, 8], strides = [1, 1, 1]} : vector<10x10x8xbf16> to vector<8x8x8xbf16>
    %14 = vector.shape_cast %13 : vector<8x8x8xbf16> to vector<64x8xbf16>
    %c1 = arith.constant 1 : index
    %c0_18 = arith.constant 0 : index
    %c0_19 = arith.constant 0 : index
    %15 = vector.load %arg5[%c1, %c0_18, %c0_19] : memref<27x8x128xbf16, #tpu.memory_space<vmem>>, vector<1x8x128xbf16>
    %16 = vector.shape_cast %15 : vector<1x8x128xbf16> to vector<8x128xbf16>
    %cst_20 = arith.constant dense<0.000000e+00> : vector<64x128xf32>
    %17 = tpu.matmul %14, %16, %cst_20 {dimension_numbers = #tpu.dot_dimension_numbers<[1], [0], [0], [1], [0, 0, 1, 1], [], []>} : vector<64x8xbf16>, vector<8x128xbf16>, vector<64x128xf32> -> vector<64x128xf32>
    %18 = arith.addf %12, %17 : vector<64x128xf32>
    %19 = vector.extract_strided_slice %1 {offsets = [0, 2, 0], sizes = [8, 8, 8], strides = [1, 1, 1]} : vector<10x10x8xbf16> to vector<8x8x8xbf16>
    %20 = vector.shape_cast %19 : vector<8x8x8xbf16> to vector<64x8xbf16>
    %c2 = arith.constant 2 : index
    %c0_21 = arith.constant 0 : index
    %c0_22 = arith.constant 0 : index
    %21 = vector.load %arg5[%c2, %c0_21, %c0_22] : memref<27x8x128xbf16, #tpu.memory_space<vmem>>, vector<1x8x128xbf16>
    %22 = vector.shape_cast %21 : vector<1x8x128xbf16> to vector<8x128xbf16>
    %cst_23 = arith.constant dense<0.000000e+00> : vector<64x128xf32>
    %23 = tpu.matmul %20, %22, %cst_23 {dimension_numbers = #tpu.dot_dimension_numbers<[1], [0], [0], [1], [0, 0, 1, 1], [], []>} : vector<64x8xbf16>, vector<8x128xbf16>, vector<64x128xf32> -> vector<64x128xf32>
    %24 = arith.addf %18, %23 : vector<64x128xf32>
    %25 = vector.extract_strided_slice %1 {offsets = [1, 0, 0], sizes = [8, 8, 8], strides = [1, 1, 1]} : vector<10x10x8xbf16> to vector<8x8x8xbf16>
    %26 = vector.shape_cast %25 : vector<8x8x8xbf16> to vector<64x8xbf16>
    %c3 = arith.constant 3 : index
    %c0_24 = arith.constant 0 : index
    %c0_25 = arith.constant 0 : index
    %27 = vector.load %arg5[%c3, %c0_24, %c0_25] : memref<27x8x128xbf16, #tpu.memory_space<vmem>>, vector<1x8x128xbf16>
    %28 = vector.shape_cast %27 : vector<1x8x128xbf16> to vector<8x128xbf16>
    %cst_26 = arith.constant dense<0.000000e+00> : vector<64x128xf32>
    %29 = tpu.matmul %26, %28, %cst_26 {dimension_numbers = #tpu.dot_dimension_numbers<[1], [0], [0], [1], [0, 0, 1, 1], [], []>} : vector<64x8xbf16>, vector<8x128xbf16>, vector<64x128xf32> -> vector<64x128xf32>
    %30 = arith.addf %24, %29 : vector<64x128xf32>
    %31 = vector.extract_strided_slice %1 {offsets = [1, 1, 0], sizes = [8, 8, 8], strides = [1, 1, 1]} : vector<10x10x8xbf16> to vector<8x8x8xbf16>
    %32 = vector.shape_cast %31 : vector<8x8x8xbf16> to vector<64x8xbf16>
    %c4 = arith.constant 4 : index
    %c0_27 = arith.constant 0 : index
    %c0_28 = arith.constant 0 : index
    %33 = vector.load %arg5[%c4, %c0_27, %c0_28] : memref<27x8x128xbf16, #tpu.memory_space<vmem>>, vector<1x8x128xbf16>
    %34 = vector.shape_cast %33 : vector<1x8x128xbf16> to vector<8x128xbf16>
    %cst_29 = arith.constant dense<0.000000e+00> : vector<64x128xf32>
    %35 = tpu.matmul %32, %34, %cst_29 {dimension_numbers = #tpu.dot_dimension_numbers<[1], [0], [0], [1], [0, 0, 1, 1], [], []>} : vector<64x8xbf16>, vector<8x128xbf16>, vector<64x128xf32> -> vector<64x128xf32>
    %36 = arith.addf %30, %35 : vector<64x128xf32>
    %37 = vector.extract_strided_slice %1 {offsets = [1, 2, 0], sizes = [8, 8, 8], strides = [1, 1, 1]} : vector<10x10x8xbf16> to vector<8x8x8xbf16>
    %38 = vector.shape_cast %37 : vector<8x8x8xbf16> to vector<64x8xbf16>
    %c5 = arith.constant 5 : index
    %c0_30 = arith.constant 0 : index
    %c0_31 = arith.constant 0 : index
    %39 = vector.load %arg5[%c5, %c0_30, %c0_31] : memref<27x8x128xbf16, #tpu.memory_space<vmem>>, vector<1x8x128xbf16>
    %40 = vector.shape_cast %39 : vector<1x8x128xbf16> to vector<8x128xbf16>
    %cst_32 = arith.constant dense<0.000000e+00> : vector<64x128xf32>
    %41 = tpu.matmul %38, %40, %cst_32 {dimension_numbers = #tpu.dot_dimension_numbers<[1], [0], [0], [1], [0, 0, 1, 1], [], []>} : vector<64x8xbf16>, vector<8x128xbf16>, vector<64x128xf32> -> vector<64x128xf32>
    %42 = arith.addf %36, %41 : vector<64x128xf32>
    %43 = vector.extract_strided_slice %1 {offsets = [2, 0, 0], sizes = [8, 8, 8], strides = [1, 1, 1]} : vector<10x10x8xbf16> to vector<8x8x8xbf16>
    %44 = vector.shape_cast %43 : vector<8x8x8xbf16> to vector<64x8xbf16>
    %c6 = arith.constant 6 : index
    %c0_33 = arith.constant 0 : index
    %c0_34 = arith.constant 0 : index
    %45 = vector.load %arg5[%c6, %c0_33, %c0_34] : memref<27x8x128xbf16, #tpu.memory_space<vmem>>, vector<1x8x128xbf16>
    %46 = vector.shape_cast %45 : vector<1x8x128xbf16> to vector<8x128xbf16>
    %cst_35 = arith.constant dense<0.000000e+00> : vector<64x128xf32>
    %47 = tpu.matmul %44, %46, %cst_35 {dimension_numbers = #tpu.dot_dimension_numbers<[1], [0], [0], [1], [0, 0, 1, 1], [], []>} : vector<64x8xbf16>, vector<8x128xbf16>, vector<64x128xf32> -> vector<64x128xf32>
    %48 = arith.addf %42, %47 : vector<64x128xf32>
    %49 = vector.extract_strided_slice %1 {offsets = [2, 1, 0], sizes = [8, 8, 8], strides = [1, 1, 1]} : vector<10x10x8xbf16> to vector<8x8x8xbf16>
    %50 = vector.shape_cast %49 : vector<8x8x8xbf16> to vector<64x8xbf16>
    %c7 = arith.constant 7 : index
    %c0_36 = arith.constant 0 : index
    %c0_37 = arith.constant 0 : index
    %51 = vector.load %arg5[%c7, %c0_36, %c0_37] : memref<27x8x128xbf16, #tpu.memory_space<vmem>>, vector<1x8x128xbf16>
    %52 = vector.shape_cast %51 : vector<1x8x128xbf16> to vector<8x128xbf16>
    %cst_38 = arith.constant dense<0.000000e+00> : vector<64x128xf32>
    %53 = tpu.matmul %50, %52, %cst_38 {dimension_numbers = #tpu.dot_dimension_numbers<[1], [0], [0], [1], [0, 0, 1, 1], [], []>} : vector<64x8xbf16>, vector<8x128xbf16>, vector<64x128xf32> -> vector<64x128xf32>
    %54 = arith.addf %48, %53 : vector<64x128xf32>
    %55 = vector.extract_strided_slice %1 {offsets = [2, 2, 0], sizes = [8, 8, 8], strides = [1, 1, 1]} : vector<10x10x8xbf16> to vector<8x8x8xbf16>
    %56 = vector.shape_cast %55 : vector<8x8x8xbf16> to vector<64x8xbf16>
    %c8 = arith.constant 8 : index
    %c0_39 = arith.constant 0 : index
    %c0_40 = arith.constant 0 : index
    %57 = vector.load %arg5[%c8, %c0_39, %c0_40] : memref<27x8x128xbf16, #tpu.memory_space<vmem>>, vector<1x8x128xbf16>
    %58 = vector.shape_cast %57 : vector<1x8x128xbf16> to vector<8x128xbf16>
    %cst_41 = arith.constant dense<0.000000e+00> : vector<64x128xf32>
    %59 = tpu.matmul %56, %58, %cst_41 {dimension_numbers = #tpu.dot_dimension_numbers<[1], [0], [0], [1], [0, 0, 1, 1], [], []>} : vector<64x8xbf16>, vector<8x128xbf16>, vector<64x128xf32> -> vector<64x128xf32>
    %60 = arith.addf %54, %59 : vector<64x128xf32>
    %61 = vector.extract_strided_slice %3 {offsets = [0, 0, 0], sizes = [8, 8, 8], strides = [1, 1, 1]} : vector<10x10x8xbf16> to vector<8x8x8xbf16>
    %62 = vector.shape_cast %61 : vector<8x8x8xbf16> to vector<64x8xbf16>
    %c9 = arith.constant 9 : index
    %c0_42 = arith.constant 0 : index
    %c0_43 = arith.constant 0 : index
    %63 = vector.load %arg5[%c9, %c0_42, %c0_43] : memref<27x8x128xbf16, #tpu.memory_space<vmem>>, vector<1x8x128xbf16>
    %64 = vector.shape_cast %63 : vector<1x8x128xbf16> to vector<8x128xbf16>
    %cst_44 = arith.constant dense<0.000000e+00> : vector<64x128xf32>
    %65 = tpu.matmul %62, %64, %cst_44 {dimension_numbers = #tpu.dot_dimension_numbers<[1], [0], [0], [1], [0, 0, 1, 1], [], []>} : vector<64x8xbf16>, vector<8x128xbf16>, vector<64x128xf32> -> vector<64x128xf32>
    %66 = arith.addf %60, %65 : vector<64x128xf32>
    %67 = vector.extract_strided_slice %3 {offsets = [0, 1, 0], sizes = [8, 8, 8], strides = [1, 1, 1]} : vector<10x10x8xbf16> to vector<8x8x8xbf16>
    %68 = vector.shape_cast %67 : vector<8x8x8xbf16> to vector<64x8xbf16>
    %c10 = arith.constant 10 : index
    %c0_45 = arith.constant 0 : index
    %c0_46 = arith.constant 0 : index
    %69 = vector.load %arg5[%c10, %c0_45, %c0_46] : memref<27x8x128xbf16, #tpu.memory_space<vmem>>, vector<1x8x128xbf16>
    %70 = vector.shape_cast %69 : vector<1x8x128xbf16> to vector<8x128xbf16>
    %cst_47 = arith.constant dense<0.000000e+00> : vector<64x128xf32>
    %71 = tpu.matmul %68, %70, %cst_47 {dimension_numbers = #tpu.dot_dimension_numbers<[1], [0], [0], [1], [0, 0, 1, 1], [], []>} : vector<64x8xbf16>, vector<8x128xbf16>, vector<64x128xf32> -> vector<64x128xf32>
    %72 = arith.addf %66, %71 : vector<64x128xf32>
    %73 = vector.extract_strided_slice %3 {offsets = [0, 2, 0], sizes = [8, 8, 8], strides = [1, 1, 1]} : vector<10x10x8xbf16> to vector<8x8x8xbf16>
    %74 = vector.shape_cast %73 : vector<8x8x8xbf16> to vector<64x8xbf16>
    %c11 = arith.constant 11 : index
    %c0_48 = arith.constant 0 : index
    %c0_49 = arith.constant 0 : index
    %75 = vector.load %arg5[%c11, %c0_48, %c0_49] : memref<27x8x128xbf16, #tpu.memory_space<vmem>>, vector<1x8x128xbf16>
    %76 = vector.shape_cast %75 : vector<1x8x128xbf16> to vector<8x128xbf16>
    %cst_50 = arith.constant dense<0.000000e+00> : vector<64x128xf32>
    %77 = tpu.matmul %74, %76, %cst_50 {dimension_numbers = #tpu.dot_dimension_numbers<[1], [0], [0], [1], [0, 0, 1, 1], [], []>} : vector<64x8xbf16>, vector<8x128xbf16>, vector<64x128xf32> -> vector<64x128xf32>
    %78 = arith.addf %72, %77 : vector<64x128xf32>
    %79 = vector.extract_strided_slice %3 {offsets = [1, 0, 0], sizes = [8, 8, 8], strides = [1, 1, 1]} : vector<10x10x8xbf16> to vector<8x8x8xbf16>
    %80 = vector.shape_cast %79 : vector<8x8x8xbf16> to vector<64x8xbf16>
    %c12 = arith.constant 12 : index
    %c0_51 = arith.constant 0 : index
    %c0_52 = arith.constant 0 : index
    %81 = vector.load %arg5[%c12, %c0_51, %c0_52] : memref<27x8x128xbf16, #tpu.memory_space<vmem>>, vector<1x8x128xbf16>
    %82 = vector.shape_cast %81 : vector<1x8x128xbf16> to vector<8x128xbf16>
    %cst_53 = arith.constant dense<0.000000e+00> : vector<64x128xf32>
    %83 = tpu.matmul %80, %82, %cst_53 {dimension_numbers = #tpu.dot_dimension_numbers<[1], [0], [0], [1], [0, 0, 1, 1], [], []>} : vector<64x8xbf16>, vector<8x128xbf16>, vector<64x128xf32> -> vector<64x128xf32>
    %84 = arith.addf %78, %83 : vector<64x128xf32>
    %85 = vector.extract_strided_slice %3 {offsets = [1, 1, 0], sizes = [8, 8, 8], strides = [1, 1, 1]} : vector<10x10x8xbf16> to vector<8x8x8xbf16>
    %86 = vector.shape_cast %85 : vector<8x8x8xbf16> to vector<64x8xbf16>
    %c13 = arith.constant 13 : index
    %c0_54 = arith.constant 0 : index
    %c0_55 = arith.constant 0 : index
    %87 = vector.load %arg5[%c13, %c0_54, %c0_55] : memref<27x8x128xbf16, #tpu.memory_space<vmem>>, vector<1x8x128xbf16>
    %88 = vector.shape_cast %87 : vector<1x8x128xbf16> to vector<8x128xbf16>
    %cst_56 = arith.constant dense<0.000000e+00> : vector<64x128xf32>
    %89 = tpu.matmul %86, %88, %cst_56 {dimension_numbers = #tpu.dot_dimension_numbers<[1], [0], [0], [1], [0, 0, 1, 1], [], []>} : vector<64x8xbf16>, vector<8x128xbf16>, vector<64x128xf32> -> vector<64x128xf32>
    %90 = arith.addf %84, %89 : vector<64x128xf32>
    %91 = vector.extract_strided_slice %3 {offsets = [1, 2, 0], sizes = [8, 8, 8], strides = [1, 1, 1]} : vector<10x10x8xbf16> to vector<8x8x8xbf16>
    %92 = vector.shape_cast %91 : vector<8x8x8xbf16> to vector<64x8xbf16>
    %c14 = arith.constant 14 : index
    %c0_57 = arith.constant 0 : index
    %c0_58 = arith.constant 0 : index
    %93 = vector.load %arg5[%c14, %c0_57, %c0_58] : memref<27x8x128xbf16, #tpu.memory_space<vmem>>, vector<1x8x128xbf16>
    %94 = vector.shape_cast %93 : vector<1x8x128xbf16> to vector<8x128xbf16>
    %cst_59 = arith.constant dense<0.000000e+00> : vector<64x128xf32>
    %95 = tpu.matmul %92, %94, %cst_59 {dimension_numbers = #tpu.dot_dimension_numbers<[1], [0], [0], [1], [0, 0, 1, 1], [], []>} : vector<64x8xbf16>, vector<8x128xbf16>, vector<64x128xf32> -> vector<64x128xf32>
    %96 = arith.addf %90, %95 : vector<64x128xf32>
    %97 = vector.extract_strided_slice %3 {offsets = [2, 0, 0], sizes = [8, 8, 8], strides = [1, 1, 1]} : vector<10x10x8xbf16> to vector<8x8x8xbf16>
    %98 = vector.shape_cast %97 : vector<8x8x8xbf16> to vector<64x8xbf16>
    %c15 = arith.constant 15 : index
    %c0_60 = arith.constant 0 : index
    %c0_61 = arith.constant 0 : index
    %99 = vector.load %arg5[%c15, %c0_60, %c0_61] : memref<27x8x128xbf16, #tpu.memory_space<vmem>>, vector<1x8x128xbf16>
    %100 = vector.shape_cast %99 : vector<1x8x128xbf16> to vector<8x128xbf16>
    %cst_62 = arith.constant dense<0.000000e+00> : vector<64x128xf32>
    %101 = tpu.matmul %98, %100, %cst_62 {dimension_numbers = #tpu.dot_dimension_numbers<[1], [0], [0], [1], [0, 0, 1, 1], [], []>} : vector<64x8xbf16>, vector<8x128xbf16>, vector<64x128xf32> -> vector<64x128xf32>
    %102 = arith.addf %96, %101 : vector<64x128xf32>
    %103 = vector.extract_strided_slice %3 {offsets = [2, 1, 0], sizes = [8, 8, 8], strides = [1, 1, 1]} : vector<10x10x8xbf16> to vector<8x8x8xbf16>
    %104 = vector.shape_cast %103 : vector<8x8x8xbf16> to vector<64x8xbf16>
    %c16 = arith.constant 16 : index
    %c0_63 = arith.constant 0 : index
    %c0_64 = arith.constant 0 : index
    %105 = vector.load %arg5[%c16, %c0_63, %c0_64] : memref<27x8x128xbf16, #tpu.memory_space<vmem>>, vector<1x8x128xbf16>
    %106 = vector.shape_cast %105 : vector<1x8x128xbf16> to vector<8x128xbf16>
    %cst_65 = arith.constant dense<0.000000e+00> : vector<64x128xf32>
    %107 = tpu.matmul %104, %106, %cst_65 {dimension_numbers = #tpu.dot_dimension_numbers<[1], [0], [0], [1], [0, 0, 1, 1], [], []>} : vector<64x8xbf16>, vector<8x128xbf16>, vector<64x128xf32> -> vector<64x128xf32>
    %108 = arith.addf %102, %107 : vector<64x128xf32>
    %109 = vector.extract_strided_slice %3 {offsets = [2, 2, 0], sizes = [8, 8, 8], strides = [1, 1, 1]} : vector<10x10x8xbf16> to vector<8x8x8xbf16>
    %110 = vector.shape_cast %109 : vector<8x8x8xbf16> to vector<64x8xbf16>
    %c17 = arith.constant 17 : index
    %c0_66 = arith.constant 0 : index
    %c0_67 = arith.constant 0 : index
    %111 = vector.load %arg5[%c17, %c0_66, %c0_67] : memref<27x8x128xbf16, #tpu.memory_space<vmem>>, vector<1x8x128xbf16>
    %112 = vector.shape_cast %111 : vector<1x8x128xbf16> to vector<8x128xbf16>
    %cst_68 = arith.constant dense<0.000000e+00> : vector<64x128xf32>
    %113 = tpu.matmul %110, %112, %cst_68 {dimension_numbers = #tpu.dot_dimension_numbers<[1], [0], [0], [1], [0, 0, 1, 1], [], []>} : vector<64x8xbf16>, vector<8x128xbf16>, vector<64x128xf32> -> vector<64x128xf32>
    %114 = arith.addf %108, %113 : vector<64x128xf32>
    %115 = vector.extract_strided_slice %5 {offsets = [0, 0, 0], sizes = [8, 8, 8], strides = [1, 1, 1]} : vector<10x10x8xbf16> to vector<8x8x8xbf16>
    %116 = vector.shape_cast %115 : vector<8x8x8xbf16> to vector<64x8xbf16>
    %c18 = arith.constant 18 : index
    %c0_69 = arith.constant 0 : index
    %c0_70 = arith.constant 0 : index
    %117 = vector.load %arg5[%c18, %c0_69, %c0_70] : memref<27x8x128xbf16, #tpu.memory_space<vmem>>, vector<1x8x128xbf16>
    %118 = vector.shape_cast %117 : vector<1x8x128xbf16> to vector<8x128xbf16>
    %cst_71 = arith.constant dense<0.000000e+00> : vector<64x128xf32>
    %119 = tpu.matmul %116, %118, %cst_71 {dimension_numbers = #tpu.dot_dimension_numbers<[1], [0], [0], [1], [0, 0, 1, 1], [], []>} : vector<64x8xbf16>, vector<8x128xbf16>, vector<64x128xf32> -> vector<64x128xf32>
    %120 = arith.addf %114, %119 : vector<64x128xf32>
    %121 = vector.extract_strided_slice %5 {offsets = [0, 1, 0], sizes = [8, 8, 8], strides = [1, 1, 1]} : vector<10x10x8xbf16> to vector<8x8x8xbf16>
    %122 = vector.shape_cast %121 : vector<8x8x8xbf16> to vector<64x8xbf16>
    %c19 = arith.constant 19 : index
    %c0_72 = arith.constant 0 : index
    %c0_73 = arith.constant 0 : index
    %123 = vector.load %arg5[%c19, %c0_72, %c0_73] : memref<27x8x128xbf16, #tpu.memory_space<vmem>>, vector<1x8x128xbf16>
    %124 = vector.shape_cast %123 : vector<1x8x128xbf16> to vector<8x128xbf16>
    %cst_74 = arith.constant dense<0.000000e+00> : vector<64x128xf32>
    %125 = tpu.matmul %122, %124, %cst_74 {dimension_numbers = #tpu.dot_dimension_numbers<[1], [0], [0], [1], [0, 0, 1, 1], [], []>} : vector<64x8xbf16>, vector<8x128xbf16>, vector<64x128xf32> -> vector<64x128xf32>
    %126 = arith.addf %120, %125 : vector<64x128xf32>
    %127 = vector.extract_strided_slice %5 {offsets = [0, 2, 0], sizes = [8, 8, 8], strides = [1, 1, 1]} : vector<10x10x8xbf16> to vector<8x8x8xbf16>
    %128 = vector.shape_cast %127 : vector<8x8x8xbf16> to vector<64x8xbf16>
    %c20 = arith.constant 20 : index
    %c0_75 = arith.constant 0 : index
    %c0_76 = arith.constant 0 : index
    %129 = vector.load %arg5[%c20, %c0_75, %c0_76] : memref<27x8x128xbf16, #tpu.memory_space<vmem>>, vector<1x8x128xbf16>
    %130 = vector.shape_cast %129 : vector<1x8x128xbf16> to vector<8x128xbf16>
    %cst_77 = arith.constant dense<0.000000e+00> : vector<64x128xf32>
    %131 = tpu.matmul %128, %130, %cst_77 {dimension_numbers = #tpu.dot_dimension_numbers<[1], [0], [0], [1], [0, 0, 1, 1], [], []>} : vector<64x8xbf16>, vector<8x128xbf16>, vector<64x128xf32> -> vector<64x128xf32>
    %132 = arith.addf %126, %131 : vector<64x128xf32>
    %133 = vector.extract_strided_slice %5 {offsets = [1, 0, 0], sizes = [8, 8, 8], strides = [1, 1, 1]} : vector<10x10x8xbf16> to vector<8x8x8xbf16>
    %134 = vector.shape_cast %133 : vector<8x8x8xbf16> to vector<64x8xbf16>
    %c21 = arith.constant 21 : index
    %c0_78 = arith.constant 0 : index
    %c0_79 = arith.constant 0 : index
    %135 = vector.load %arg5[%c21, %c0_78, %c0_79] : memref<27x8x128xbf16, #tpu.memory_space<vmem>>, vector<1x8x128xbf16>
    %136 = vector.shape_cast %135 : vector<1x8x128xbf16> to vector<8x128xbf16>
    %cst_80 = arith.constant dense<0.000000e+00> : vector<64x128xf32>
    %137 = tpu.matmul %134, %136, %cst_80 {dimension_numbers = #tpu.dot_dimension_numbers<[1], [0], [0], [1], [0, 0, 1, 1], [], []>} : vector<64x8xbf16>, vector<8x128xbf16>, vector<64x128xf32> -> vector<64x128xf32>
    %138 = arith.addf %132, %137 : vector<64x128xf32>
    %139 = vector.extract_strided_slice %5 {offsets = [1, 1, 0], sizes = [8, 8, 8], strides = [1, 1, 1]} : vector<10x10x8xbf16> to vector<8x8x8xbf16>
    %140 = vector.shape_cast %139 : vector<8x8x8xbf16> to vector<64x8xbf16>
    %c22 = arith.constant 22 : index
    %c0_81 = arith.constant 0 : index
    %c0_82 = arith.constant 0 : index
    %141 = vector.load %arg5[%c22, %c0_81, %c0_82] : memref<27x8x128xbf16, #tpu.memory_space<vmem>>, vector<1x8x128xbf16>
    %142 = vector.shape_cast %141 : vector<1x8x128xbf16> to vector<8x128xbf16>
    %cst_83 = arith.constant dense<0.000000e+00> : vector<64x128xf32>
    %143 = tpu.matmul %140, %142, %cst_83 {dimension_numbers = #tpu.dot_dimension_numbers<[1], [0], [0], [1], [0, 0, 1, 1], [], []>} : vector<64x8xbf16>, vector<8x128xbf16>, vector<64x128xf32> -> vector<64x128xf32>
    %144 = arith.addf %138, %143 : vector<64x128xf32>
    %145 = vector.extract_strided_slice %5 {offsets = [1, 2, 0], sizes = [8, 8, 8], strides = [1, 1, 1]} : vector<10x10x8xbf16> to vector<8x8x8xbf16>
    %146 = vector.shape_cast %145 : vector<8x8x8xbf16> to vector<64x8xbf16>
    %c23 = arith.constant 23 : index
    %c0_84 = arith.constant 0 : index
    %c0_85 = arith.constant 0 : index
    %147 = vector.load %arg5[%c23, %c0_84, %c0_85] : memref<27x8x128xbf16, #tpu.memory_space<vmem>>, vector<1x8x128xbf16>
    %148 = vector.shape_cast %147 : vector<1x8x128xbf16> to vector<8x128xbf16>
    %cst_86 = arith.constant dense<0.000000e+00> : vector<64x128xf32>
    %149 = tpu.matmul %146, %148, %cst_86 {dimension_numbers = #tpu.dot_dimension_numbers<[1], [0], [0], [1], [0, 0, 1, 1], [], []>} : vector<64x8xbf16>, vector<8x128xbf16>, vector<64x128xf32> -> vector<64x128xf32>
    %150 = arith.addf %144, %149 : vector<64x128xf32>
    %151 = vector.extract_strided_slice %5 {offsets = [2, 0, 0], sizes = [8, 8, 8], strides = [1, 1, 1]} : vector<10x10x8xbf16> to vector<8x8x8xbf16>
    %152 = vector.shape_cast %151 : vector<8x8x8xbf16> to vector<64x8xbf16>
    %c24 = arith.constant 24 : index
    %c0_87 = arith.constant 0 : index
    %c0_88 = arith.constant 0 : index
    %153 = vector.load %arg5[%c24, %c0_87, %c0_88] : memref<27x8x128xbf16, #tpu.memory_space<vmem>>, vector<1x8x128xbf16>
    %154 = vector.shape_cast %153 : vector<1x8x128xbf16> to vector<8x128xbf16>
    %cst_89 = arith.constant dense<0.000000e+00> : vector<64x128xf32>
    %155 = tpu.matmul %152, %154, %cst_89 {dimension_numbers = #tpu.dot_dimension_numbers<[1], [0], [0], [1], [0, 0, 1, 1], [], []>} : vector<64x8xbf16>, vector<8x128xbf16>, vector<64x128xf32> -> vector<64x128xf32>
    %156 = arith.addf %150, %155 : vector<64x128xf32>
    %157 = vector.extract_strided_slice %5 {offsets = [2, 1, 0], sizes = [8, 8, 8], strides = [1, 1, 1]} : vector<10x10x8xbf16> to vector<8x8x8xbf16>
    %158 = vector.shape_cast %157 : vector<8x8x8xbf16> to vector<64x8xbf16>
    %c25 = arith.constant 25 : index
    %c0_90 = arith.constant 0 : index
    %c0_91 = arith.constant 0 : index
    %159 = vector.load %arg5[%c25, %c0_90, %c0_91] : memref<27x8x128xbf16, #tpu.memory_space<vmem>>, vector<1x8x128xbf16>
    %160 = vector.shape_cast %159 : vector<1x8x128xbf16> to vector<8x128xbf16>
    %cst_92 = arith.constant dense<0.000000e+00> : vector<64x128xf32>
    %161 = tpu.matmul %158, %160, %cst_92 {dimension_numbers = #tpu.dot_dimension_numbers<[1], [0], [0], [1], [0, 0, 1, 1], [], []>} : vector<64x8xbf16>, vector<8x128xbf16>, vector<64x128xf32> -> vector<64x128xf32>
    %162 = arith.addf %156, %161 : vector<64x128xf32>
    %163 = vector.extract_strided_slice %5 {offsets = [2, 2, 0], sizes = [8, 8, 8], strides = [1, 1, 1]} : vector<10x10x8xbf16> to vector<8x8x8xbf16>
    %164 = vector.shape_cast %163 : vector<8x8x8xbf16> to vector<64x8xbf16>
    %c26 = arith.constant 26 : index
    %c0_93 = arith.constant 0 : index
    %c0_94 = arith.constant 0 : index
    %165 = vector.load %arg5[%c26, %c0_93, %c0_94] : memref<27x8x128xbf16, #tpu.memory_space<vmem>>, vector<1x8x128xbf16>
    %166 = vector.shape_cast %165 : vector<1x8x128xbf16> to vector<8x128xbf16>
    %cst_95 = arith.constant dense<0.000000e+00> : vector<64x128xf32>
    %167 = tpu.matmul %164, %166, %cst_95 {dimension_numbers = #tpu.dot_dimension_numbers<[1], [0], [0], [1], [0, 0, 1, 1], [], []>} : vector<64x8xbf16>, vector<8x128xbf16>, vector<64x128xf32> -> vector<64x128xf32>
    %168 = arith.addf %162, %167 : vector<64x128xf32>
    %c0_96 = arith.constant 0 : index
    %c0_97 = arith.constant 0 : index
    %169 = vector.load %arg6[%c0_96, %c0_97] : memref<1x128xf32, #tpu.memory_space<vmem>>, vector<1x128xf32>
    %170 = vector.broadcast %169 : vector<1x128xf32> to vector<64x128xf32>
    %171 = arith.addf %168, %170 : vector<64x128xf32>
    %cst_98 = arith.constant 0.000000e+00 : f32
    %172 = vector.broadcast %cst_98 : f32 to vector<64x128xf32>
    %173 = arith.maximumf %171, %172 : vector<64x128xf32>
    %174 = vector.shape_cast %173 : vector<64x128xf32> to vector<4x2x4x2x128xf32>
    %175 = vector.extract_strided_slice %174 {offsets = [0, 0, 0, 0, 0], sizes = [4, 1, 4, 2, 128], strides = [1, 1, 1, 1, 1]} : vector<4x2x4x2x128xf32> to vector<4x1x4x2x128xf32>
    %176 = vector.shape_cast %175 : vector<4x1x4x2x128xf32> to vector<4x4x2x128xf32>
    %177 = vector.extract_strided_slice %174 {offsets = [0, 1, 0, 0, 0], sizes = [4, 1, 4, 2, 128], strides = [1, 1, 1, 1, 1]} : vector<4x2x4x2x128xf32> to vector<4x1x4x2x128xf32>
    %178 = vector.shape_cast %177 : vector<4x1x4x2x128xf32> to vector<4x4x2x128xf32>
    %179 = arith.maximumf %176, %178 : vector<4x4x2x128xf32>
    %180 = vector.extract_strided_slice %179 {offsets = [0, 0, 0, 0], sizes = [4, 4, 1, 128], strides = [1, 1, 1, 1]} : vector<4x4x2x128xf32> to vector<4x4x1x128xf32>
    %181 = vector.shape_cast %180 : vector<4x4x1x128xf32> to vector<4x4x128xf32>
    %182 = vector.extract_strided_slice %179 {offsets = [0, 0, 1, 0], sizes = [4, 4, 1, 128], strides = [1, 1, 1, 1]} : vector<4x4x2x128xf32> to vector<4x4x1x128xf32>
    %183 = vector.shape_cast %182 : vector<4x4x1x128xf32> to vector<4x4x128xf32>
    %184 = arith.maximumf %181, %183 : vector<4x4x128xf32>
    %185 = vector.shape_cast %184 : vector<4x4x128xf32> to vector<16x128xf32>
    %186 = arith.truncf %185 : vector<16x128xf32> to vector<16x128xbf16>
    %c0_99 = arith.constant 0 : index
    %c0_100 = arith.constant 0 : index
    %c0_101 = arith.constant 0 : index
    %c0_102 = arith.constant 0 : index
    %187 = vector.load %arg7[%c0_99, %c0_100, %c0_101, %c0_102] : memref<1x1x16x128xbf16, #tpu.memory_space<vmem>>, vector<1x1x16x128xbf16>
    %188 = vector.shape_cast %187 : vector<1x1x16x128xbf16> to vector<16x128xbf16>
    %189 = vector.shape_cast %186 : vector<16x128xbf16> to vector<1x1x16x128xbf16>
    tpu.vector_store %arg7[%c0_99, %c0_100, %c0_101, %c0_102], %189 {strides = array<i32>} : memref<1x1x16x128xbf16, #tpu.memory_space<vmem>>, vector<1x1x16x128xbf16>,
    return
  }
  func.func @transform_0(%arg0: i32, %arg1: i32) -> (i32, i32, i32, i32, i32) {
    %c0_i32 = arith.constant 0 : i32
    %0 = arith.addi %arg1, %c0_i32 : i32
    %c0_i32_0 = arith.constant 0 : i32
    %c0_i32_1 = arith.constant 0 : i32
    %c0_i32_2 = arith.constant 0 : i32
    %c0_i32_3 = arith.constant 0 : i32
    return %arg0, %0, %c0_i32_0, %c0_i32_1, %c0_i32_2 : i32, i32, i32, i32, i32
  }
  func.func @transform_1(%arg0: i32, %arg1: i32) -> (i32, i32, i32, i32, i32) {
    %c1_i32 = arith.constant 1 : i32
    %0 = arith.addi %arg1, %c1_i32 : i32
    %c0_i32 = arith.constant 0 : i32
    %c0_i32_0 = arith.constant 0 : i32
    %c0_i32_1 = arith.constant 0 : i32
    %c0_i32_2 = arith.constant 0 : i32
    return %arg0, %0, %c0_i32, %c0_i32_0, %c0_i32_1 : i32, i32, i32, i32, i32
  }
  func.func @transform_2(%arg0: i32, %arg1: i32) -> (i32, i32, i32, i32, i32) {
    %c2_i32 = arith.constant 2 : i32
    %0 = arith.addi %arg1, %c2_i32 : i32
    %c0_i32 = arith.constant 0 : i32
    %c0_i32_0 = arith.constant 0 : i32
    %c0_i32_1 = arith.constant 0 : i32
    %c0_i32_2 = arith.constant 0 : i32
    return %arg0, %0, %c0_i32, %c0_i32_0, %c0_i32_1 : i32, i32, i32, i32, i32
  }
  func.func @transform_3(%arg0: i32, %arg1: i32) -> (i32, i32, i32) {
    %c0_i32 = arith.constant 0 : i32
    %c0_i32_0 = arith.constant 0 : i32
    %c0_i32_1 = arith.constant 0 : i32
    %c0_i32_2 = arith.constant 0 : i32
    return %c0_i32, %c0_i32_0, %c0_i32_1 : i32, i32, i32
  }
  func.func @transform_4(%arg0: i32, %arg1: i32) -> (i32, i32) {
    %c0_i32 = arith.constant 0 : i32
    %c0_i32_0 = arith.constant 0 : i32
    %c0_i32_1 = arith.constant 0 : i32
    return %c0_i32, %c0_i32_0 : i32, i32
  }
  func.func @transform_5(%arg0: i32, %arg1: i32) -> (i32, i32, i32, i32) {
    %c0_i32 = arith.constant 0 : i32
    %c0_i32_0 = arith.constant 0 : i32
    %c0_i32_1 = arith.constant 0 : i32
    return %arg0, %arg1, %c0_i32, %c0_i32_0 : i32, i32, i32, i32
  }
}

</mosaic_0001>

<llo_original>
// kernel: tpu_custom_call.1
$region0: #{tpu_custom_call.1}
  #allocation0 [shape = 'u32[]', space=smem, size = 0x4, offset = 0x4, fixed_abs, tag = 'smem constant byte address 0x4 - core index']
  #allocation1 [shape = 'u32[144,128]{1,0:T(1,128)}', space=vmem, size = 0x12000, scoped, tag = 'internal scratch']
  %s0 = inlined_call_operand.vmem [shape: bf16[2,6,10,10,8], index: 0, kind: input, shape index: {}]
  %s1 = inlined_call_operand.vmem [shape: bf16[2,6,10,10,8], index: 1, kind: input, shape index: {}]
  %s2 = inlined_call_operand.vmem [shape: bf16[2,6,10,10,8], index: 2, kind: input, shape index: {}]
  %s3 = inlined_call_operand.vmem [shape: bf16[27,8,128], index: 3, kind: input, shape index: {}]
  %s4 = inlined_call_operand.vmem [shape: f32[1,128], index: 4, kind: input, shape index: {}]
  %s5 = inlined_call_operand.hbm [shape: bf16[2,4,16,128], index: 5, kind: output, shape index: {}]
  %s6 = sld [smem:[#allocation0]]
  $region53: #{tpu_custom_call.1} parent=0
    _
  %s8 = ssub.s32 1, %s6
  %s9 = scalar_select 0, %s8, %s6
  $region1: #{tpu_custom_call.1} parent=0
    #allocation2 [shape = 'u8[8192]{0}', space=vmem, size = 0x2000, scoped, tag = 'output window, operand 0']
    #allocation3 [shape = 's32[2]{0}', space=sflag, size = 0x8, scoped, tag = 'scoped memory for tpu_custom_call.1']
    %10 = vsyncpa [#allocation3], 0
    %s11 = scalar_lea.sflag [#allocation3], 1
    %12 = vsyncpa %s11, 0
    loop: start=0, step=1, limit=10
    $region2: #{tpu_custom_call.1} parent=1 // loop_pre_header
      _
    $region3: #{tpu_custom_call.1} parent=1 // loop_header
      %s14 = sphi 0, %s18
      %p15 = scmp.ge.s32.totalorder %s14, 10
      %s21 = sphi 0, %s33
      %s22 = sphi 0, %s29
      %s23 = sphi 0, %s21
      %s24 = sphi 0, %s22
      %s25 = sphi 0, %s23
      %s26 = sphi 0, %s24
      %s38 = sphi 0, %s40
      %s41 = sphi 0, %s38
      %s42 = sphi 0, %s41
      %s58 = sphi 0, %s42
      %s68 = sphi 0, %s70
      %s71 = sphi 0, %s68
      %s72 = sphi 0, %s71
      %s88 = sphi 0, %s72
      %s98 = sphi 0, %s100
      %s101 = sphi 0, %s98
      %s102 = sphi 0, %s101
      %s118 = sphi 0, %s102
      %s122 = sphi 0, %s122
      %s124 = sphi 0, %s122
      %s125 = sphi 0, %s124
      %s139 = sphi 0, %s125
      %s143 = sphi 0, %s143
      %s145 = sphi 0, %s143
      %s146 = sphi 0, %s145
      %s160 = sphi 0, %s146
      %s168 = sphi 0, %s170
      %s171 = sphi 0, %s168
      %s172 = sphi 0, %s171
      %s188 = sphi 0, %s172
    $region4: #{tpu_custom_call.1} parent=1 // loop_header_branch
      %17 = sbr.rel (%p15) target = $region8
    $region5: #{tpu_custom_call.1} parent=1 // loop_body
      %s19 = ssub.s32 %s14, 1
      %s20 = ssub.s32 %s14, 2
      %s27 = sadd.s32 1, %s22
      %p28 = scmp.ge.s32.totalorder %s27, 4
      %s29 = scalar_select %p28, 0, %s27
      %s30 = sadd.s32 1, %s21
      %s31 = scalar_select %p28, %s30, %s21
      %p32 = scmp.ge.s32.totalorder %s31, 2
      %s33 = scalar_select %p32, 0, %s31
      %s34 = ssub.s32 %s21, %s33
      %s35 = ssub.s32 %s22, %s29
      %s36 = sor.u32 %s34, %s35
      %p37 = scmp.eq.s32.totalorder %s36, 0
      %s39 = sadd.s32 %s38, 1
      %s40 = scalar_select %p37, %s38, %s39
      %p43 = pneg %p37
      %p44 = scmp.eq.s32.totalorder %s14, 7
      %p45 = por %p43, %p44
      %p46 = scmp.ne.s32.totalorder %s38, %s41
      %p47 = scmp.eq.s32.totalorder %s14, 0
      %p48 = por %p46, %p47
      %p49 = scmp.ne.s32.totalorder %s38, %s41
      %p50 = scmp.eq.s32.totalorder %s19, 7
      %p51 = por %p49, %p50
      %p52 = scmp.ne.s32.totalorder %s41, %s42
      %p53 = scmp.eq.s32.totalorder %s19, 0
      %p54 = por %p52, %p53
      %p55 = scmp.ne.s32.totalorder %s41, %s42
      %p56 = scmp.eq.s32.totalorder %s20, 7
      %p57 = por %p55, %p56
      %p59 = scmp.ne.s32.totalorder %s42, %s58
      %p60 = scmp.eq.s32.totalorder %s20, 0
      %p61 = por %p59, %p60
      %s62 = sadd.s32 %s22, 1
      %s63 = sadd.s32 %s29, 1
      %s64 = ssub.s32 %s21, %s33
      %s65 = ssub.s32 %s62, %s63
      %s66 = sor.u32 %s64, %s65
      %p67 = scmp.eq.s32.totalorder %s66, 0
      %s69 = sadd.s32 %s68, 1
      %s70 = scalar_select %p67, %s68, %s69
      %p73 = pneg %p67
      %p74 = scmp.eq.s32.totalorder %s14, 7
      %p75 = por %p73, %p74
      %p76 = scmp.ne.s32.totalorder %s68, %s71
      %p77 = scmp.eq.s32.totalorder %s14, 0
      %p78 = por %p76, %p77
      %p79 = scmp.ne.s32.totalorder %s68, %s71
      %p80 = scmp.eq.s32.totalorder %s19, 7
      %p81 = por %p79, %p80
      %p82 = scmp.ne.s32.totalorder %s71, %s72
      %p83 = scmp.eq.s32.totalorder %s19, 0
      %p84 = por %p82, %p83
      %p85 = scmp.ne.s32.totalorder %s71, %s72
      %p86 = scmp.eq.s32.totalorder %s20, 7
      %p87 = por %p85, %p86
      %p89 = scmp.ne.s32.totalorder %s72, %s88
      %p90 = scmp.eq.s32.totalorder %s20, 0
      %p91 = por %p89, %p90
      %s92 = sadd.s32 %s22, 2
      %s93 = sadd.s32 %s29, 2
      %s94 = ssub.s32 %s21, %s33
      %s95 = ssub.s32 %s92, %s93
      %s96 = sor.u32 %s94, %s95
      %p97 = scmp.eq.s32.totalorder %s96, 0
      %s99 = sadd.s32 %s98, 1
      %s100 = scalar_select %p97, %s98, %s99
      %p103 = pneg %p97
      %p104 = scmp.eq.s32.totalorder %s14, 7
      %p105 = por %p103, %p104
      %p106 = scmp.ne.s32.totalorder %s98, %s101
      %p107 = scmp.eq.s32.totalorder %s14, 0
      %p108 = por %p106, %p107
      %p109 = scmp.ne.s32.totalorder %s98, %s101
      %p110 = scmp.eq.s32.totalorder %s19, 7
      %p111 = por %p109, %p110
      %p112 = scmp.ne.s32.totalorder %s101, %s102
      %p113 = scmp.eq.s32.totalorder %s19, 0
      %p114 = por %p112, %p113
      %p115 = scmp.ne.s32.totalorder %s101, %s102
      %p116 = scmp.eq.s32.totalorder %s20, 7
      %p117 = por %p115, %p116
      %p119 = scmp.ne.s32.totalorder %s102, %s118
      %p120 = scmp.eq.s32.totalorder %s20, 0
      %p121 = por %p119, %p120
      %s123 = sadd.s32 %s122, 1
      %p126 = scmp.eq.s32.totalorder %s14, 7
      %p127 = scmp.ne.s32.totalorder %s122, %s124
      %p128 = scmp.eq.s32.totalorder %s14, 0
      %p129 = por %p127, %p128
      %p130 = scmp.ne.s32.totalorder %s122, %s124
      %p131 = scmp.eq.s32.totalorder %s19, 7
      %p132 = por %p130, %p131
      %p133 = scmp.ne.s32.totalorder %s124, %s125
      %p134 = scmp.eq.s32.totalorder %s19, 0
      %p135 = por %p133, %p134
      %p136 = scmp.ne.s32.totalorder %s124, %s125
      %p137 = scmp.eq.s32.totalorder %s20, 7
      %p138 = por %p136, %p137
      %p140 = scmp.ne.s32.totalorder %s125, %s139
      %p141 = scmp.eq.s32.totalorder %s20, 0
      %p142 = por %p140, %p141
      %s144 = sadd.s32 %s143, 1
      %p147 = scmp.eq.s32.totalorder %s14, 7
      %p148 = scmp.ne.s32.totalorder %s143, %s145
      %p149 = scmp.eq.s32.totalorder %s14, 0
      %p150 = por %p148, %p149
      %p151 = scmp.ne.s32.totalorder %s143, %s145
      %p152 = scmp.eq.s32.totalorder %s19, 7
      %p153 = por %p151, %p152
      %p154 = scmp.ne.s32.totalorder %s145, %s146
      %p155 = scmp.eq.s32.totalorder %s19, 0
      %p156 = por %p154, %p155
      %p157 = scmp.ne.s32.totalorder %s145, %s146
      %p158 = scmp.eq.s32.totalorder %s20, 7
      %p159 = por %p157, %p158
      %p161 = scmp.ne.s32.totalorder %s146, %s160
      %p162 = scmp.eq.s32.totalorder %s20, 0
      %p163 = por %p161, %p162
      %s164 = ssub.s32 %s21, %s33
      %s165 = ssub.s32 %s22, %s29
      %s166 = sor.u32 %s164, %s165
      %p167 = scmp.eq.s32.totalorder %s166, 0
      %s169 = sadd.s32 %s168, 1
      %s170 = scalar_select %p167, %s168, %s169
      %p173 = pneg %p167
      %p174 = scmp.eq.s32.totalorder %s14, 7
      %p175 = por %p173, %p174
      %p176 = scmp.ne.s32.totalorder %s168, %s171
      %p177 = scmp.eq.s32.totalorder %s14, 0
      %p178 = por %p176, %p177
      %p179 = scmp.ne.s32.totalorder %s168, %s171
      %p180 = scmp.eq.s32.totalorder %s19, 7
      %p181 = por %p179, %p180
      %p182 = scmp.ne.s32.totalorder %s171, %s172
      %p183 = scmp.eq.s32.totalorder %s19, 0
      %p184 = por %p182, %p183
      %p185 = scmp.ne.s32.totalorder %s171, %s172
      %p186 = scmp.eq.s32.totalorder %s20, 7
      %p187 = por %p185, %p186
      %p189 = scmp.ne.s32.totalorder %s172, %s188
      %p190 = scmp.eq.s32.totalorder %s20, 0
      %p191 = por %p189, %p190
      %p192 = scmp.le.s32.totalorder 1, %s14
      %p193 = scmp.lt.s32.totalorder %s14, 9
      %p194 = pnand %p192, %p193
      %p195 = pneg %p194
      // Predicated region
      $region9: #{tpu_custom_call.1} parent=5 // pred_check
        _
      $region10: #{tpu_custom_call.1} parent=5 // pred_check_branch
        %197 = sbr.rel (%p194) target = $region12
      $region11: #{tpu_custom_call.1} parent=5 // pred_region
        %s198 = ssub.s32 %s14, 1
        // Predicated region
        $region13: #{tpu_custom_call.1} parent=11 // pred_check
          %p199 = pneg %p135
        $region14: #{tpu_custom_call.1} parent=11 // pred_check_branch
          %201 = sbr.rel (%p199) target = $region16
        $region15: #{tpu_custom_call.1} parent=11 // pred_region
          _
        $region16: #{tpu_custom_call.1} parent=11 // pred_fallthru
          _
        // Predicated region
        $region17: #{tpu_custom_call.1} parent=11 // pred_check
          %p202 = pneg %p156
        $region18: #{tpu_custom_call.1} parent=11 // pred_check_branch
          %204 = sbr.rel (%p202) target = $region20
        $region19: #{tpu_custom_call.1} parent=11 // pred_region
          _
        $region20: #{tpu_custom_call.1} parent=11 // pred_fallthru
          _
      $region12: #{tpu_custom_call.1} parent=5 // pred_fallthru
        _
      %p205 = scmp.lt.s32.totalorder %s14, 8
      // Predicated region
      $region21: #{tpu_custom_call.1} parent=5 // pred_check
        %p206 = pneg %p205
      $region22: #{tpu_custom_call.1} parent=5 // pred_check_branch
        %208 = sbr.rel (%p206) target = $region24
      $region23: #{tpu_custom_call.1} parent=5 // pred_region
        // Predicated region
        $region25: #{tpu_custom_call.1} parent=23 // pred_check
          %p209 = pneg %p48
        $region26: #{tpu_custom_call.1} parent=23 // pred_check_branch
          %211 = sbr.rel (%p209) target = $region28
        $region27: #{tpu_custom_call.1} parent=23 // pred_region
          %p212 = scmp.lt.s32.totalorder %s21, 1
          %s213 = scalar_select %p212, %s21, 1
          %p214 = scmp.lt.s32.totalorder %s22, 5
          %s215 = scalar_select %p214, %s22, 5
          %s216 = smul.addr %s215, 20
          %s217 = smul.addr %s213, 120
          %s218 = sadd.s32 %s216, %s217
          %s219 = smul.addr %s218, 4
          %s220 = scalar_lea.vmem %s0, %s219
        $region28: #{tpu_custom_call.1} parent=23 // pred_fallthru
          _
        // Predicated region
        $region29: #{tpu_custom_call.1} parent=23 // pred_check
          %p221 = pneg %p78
        $region30: #{tpu_custom_call.1} parent=23 // pred_check_branch
          %223 = sbr.rel (%p221) target = $region32
        $region31: #{tpu_custom_call.1} parent=23 // pred_region
          %s224 = sadd.s32 %s22, 1
          %p225 = scmp.lt.s32.totalorder %s21, 1
          %s226 = scalar_select %p225, %s21, 1
          %p227 = scmp.lt.s32.totalorder %s224, 5
          %s228 = scalar_select %p227, %s224, 5
          %s229 = smul.addr %s228, 20
          %s230 = smul.addr %s226, 120
          %s231 = sadd.s32 %s229, %s230
          %s232 = smul.addr %s231, 4
          %s233 = scalar_lea.vmem %s1, %s232
          %s234 = sadd.s32 %s22, 1
        $region32: #{tpu_custom_call.1} parent=23 // pred_fallthru
          _
        // Predicated region
        $region33: #{tpu_custom_call.1} parent=23 // pred_check
          %p235 = pneg %p108
        $region34: #{tpu_custom_call.1} parent=23 // pred_check_branch
          %237 = sbr.rel (%p235) target = $region36
        $region35: #{tpu_custom_call.1} parent=23 // pred_region
          %s238 = sadd.s32 %s22, 2
          %p239 = scmp.lt.s32.totalorder %s21, 1
          %s240 = scalar_select %p239, %s21, 1
          %p241 = scmp.lt.s32.totalorder %s238, 5
          %s242 = scalar_select %p241, %s238, 5
          %s243 = smul.addr %s242, 20
          %s244 = smul.addr %s240, 120
          %s245 = sadd.s32 %s243, %s244
          %s246 = smul.addr %s245, 4
          %s247 = scalar_lea.vmem %s2, %s246
          %s248 = sadd.s32 %s22, 2
        $region36: #{tpu_custom_call.1} parent=23 // pred_fallthru
          _
      $region24: #{tpu_custom_call.1} parent=5 // pred_fallthru
        _
      %p249 = scmp.le.s32.totalorder 1, %s14
      %p250 = scmp.lt.s32.totalorder %s14, 9
      %p251 = pnand %p249, %p250
      %p252 = pneg %p251
      // Predicated region
      $region37: #{tpu_custom_call.1} parent=5 // pred_check
        _
      $region38: #{tpu_custom_call.1} parent=5 // pred_check_branch
        %254 = sbr.rel (%p251) target = $region40
      $region39: #{tpu_custom_call.1} parent=5 // pred_region
        %s255 = ssub.s32 %s14, 1
        %p256 = scmp.lt.s32.totalorder %s23, 1
        %s257 = scalar_select %p256, %s23, 1
        %p258 = scmp.lt.s32.totalorder %s24, 5
        %s259 = scalar_select %p258, %s24, 5
        %s260 = smul.addr %s259, 20
        %s261 = smul.addr %s257, 120
        %s262 = sadd.s32 %s260, %s261
        %s263 = smul.addr %s262, 4
        %s264 = scalar_lea.vmem %s0, %s263
        %p265 = pneg %p54
        %p266 = pneg %p51
        %s267 = sadd.s32 %s24, 1
        %p268 = scmp.lt.s32.totalorder %s23, 1
        %s269 = scalar_select %p268, %s23, 1
        %p270 = scmp.lt.s32.totalorder %s267, 5
        %s271 = scalar_select %p270, %s267, 5
        %s272 = smul.addr %s271, 20
        %s273 = smul.addr %s269, 120
        %s274 = sadd.s32 %s272, %s273
        %s275 = smul.addr %s274, 4
        %s276 = scalar_lea.vmem %s1, %s275
        %p277 = pneg %p84
        %p278 = pneg %p81
        %s279 = sadd.s32 %s24, 2
        %p280 = scmp.lt.s32.totalorder %s23, 1
        %s281 = scalar_select %p280, %s23, 1
        %p282 = scmp.lt.s32.totalorder %s279, 5
        %s283 = scalar_select %p282, %s279, 5
        %s284 = smul.addr %s283, 20
        %s285 = smul.addr %s281, 120
        %s286 = sadd.s32 %s284, %s285
        %s287 = smul.addr %s286, 4
        %s288 = scalar_lea.vmem %s2, %s287
        %p289 = pneg %p114
        %p290 = pneg %p111
        %p291 = pneg %p135
        %p292 = pneg %p132
        %p293 = pneg %p156
        %p294 = pneg %p153
        %p295 = pneg %p184
        %p296 = pneg %p181
        %s297 = sand.u32 %s171, 1
        %s298 = scalar_lea.sflag [#allocation3], %s297
        %s299 = sand.u32 %s171, 1
        %s300 = smul.addr %s299, 8
        %s301 = scalar_lea.vmem [#allocation2], %s300
        %p302 = scmp.lt.s32.totalorder %s23, 1
        %s303 = scalar_select %p302, %s23, 1
        %p304 = scmp.lt.s32.totalorder %s24, 5
        %s305 = scalar_select %p304, %s24, 5
        %s306 = smul.addr %s305, 20
        %s307 = smul.addr %s303, 120
        %s308 = sadd.s32 %s306, %s307
        %s309 = smul.addr %s308, 4
        %s310 = scalar_lea.vmem %s0, %s309
        %s311 = sadd.s32 %s24, 1
        %p312 = scmp.lt.s32.totalorder %s23, 1
        %s313 = scalar_select %p312, %s23, 1
        %p314 = scmp.lt.s32.totalorder %s311, 5
        %s315 = scalar_select %p314, %s311, 5
        %s316 = smul.addr %s315, 20
        %s317 = smul.addr %s313, 120
        %s318 = sadd.s32 %s316, %s317
        %s319 = smul.addr %s318, 4
        %s320 = scalar_lea.vmem %s1, %s319
        %s321 = sadd.s32 %s24, 1
        %s322 = sadd.s32 %s24, 2
        %p323 = scmp.lt.s32.totalorder %s23, 1
        %s324 = scalar_select %p323, %s23, 1
        %p325 = scmp.lt.s32.totalorder %s322, 5
        %s326 = scalar_select %p325, %s322, 5
        %s327 = smul.addr %s326, 20
        %s328 = smul.addr %s324, 120
        %s329 = sadd.s32 %s327, %s328
        %s330 = smul.addr %s329, 4
        %s331 = scalar_lea.vmem %s2, %s330
        %s332 = sadd.s32 %s24, 2
        %v334 = vld [vmem:[%s310] sm:$0xf]
        %v335 = vld [vmem:[%s310 + $0x4] sm:$0x1]
        %v336 = vld [vmem:[%s310 + $0x8] sm:$0xf]
        %v337 = vld [vmem:[%s310 + $0xc] sm:$0x1]
        %v338 = vld [vmem:[%s310 + $0x10] sm:$0xf]
        %v339 = vld [vmem:[%s310 + $0x14] sm:$0x1]
        %v340 = vld [vmem:[%s310 + $0x18] sm:$0xf]
        %v341 = vld [vmem:[%s310 + $0x1c] sm:$0x1]
        %v342 = vld [vmem:[%s310 + $0x20] sm:$0xf]
        %v343 = vld [vmem:[%s310 + $0x24] sm:$0x1]
        %v344 = vld [vmem:[%s310 + $0x28] sm:$0xf]
        %v345 = vld [vmem:[%s310 + $0x2c] sm:$0x1]
        %v346 = vld [vmem:[%s310 + $0x30] sm:$0xf]
        %v347 = vld [vmem:[%s310 + $0x34] sm:$0x1]
        %v348 = vld [vmem:[%s310 + $0x38] sm:$0xf]
        %v349 = vld [vmem:[%s310 + $0x3c] sm:$0x1]
        %v350 = vld [vmem:[%s310 + $0x40] sm:$0xf]
        %v351 = vld [vmem:[%s310 + $0x44] sm:$0x1]
        %v352 = vld [vmem:[%s310 + $0x48] sm:$0xf]
        %v353 = vld [vmem:[%s310 + $0x4c] sm:$0x1]
        %v354 = vld [vmem:[%s320] sm:$0xf]
        %v355 = vld [vmem:[%s320 + $0x4] sm:$0x1]
        %v356 = vld [vmem:[%s320 + $0x8] sm:$0xf]
        %v357 = vld [vmem:[%s320 + $0xc] sm:$0x1]
        %v358 = vld [vmem:[%s320 + $0x10] sm:$0xf]
        %v359 = vld [vmem:[%s320 + $0x14] sm:$0x1]
        %v360 = vld [vmem:[%s320 + $0x18] sm:$0xf]
        %v361 = vld [vmem:[%s320 + $0x1c] sm:$0x1]
        %v362 = vld [vmem:[%s320 + $0x20] sm:$0xf]
        %v363 = vld [vmem:[%s320 + $0x24] sm:$0x1]
        %v364 = vld [vmem:[%s320 + $0x28] sm:$0xf]
        %v365 = vld [vmem:[%s320 + $0x2c] sm:$0x1]
        %v366 = vld [vmem:[%s320 + $0x30] sm:$0xf]
        %v367 = vld [vmem:[%s320 + $0x34] sm:$0x1]
        %v368 = vld [vmem:[%s320 + $0x38] sm:$0xf]
        %v369 = vld [vmem:[%s320 + $0x3c] sm:$0x1]
        %v370 = vld [vmem:[%s320 + $0x40] sm:$0xf]
        %v371 = vld [vmem:[%s320 + $0x44] sm:$0x1]
        %v372 = vld [vmem:[%s320 + $0x48] sm:$0xf]
        %v373 = vld [vmem:[%s320 + $0x4c] sm:$0x1]
        %v374 = vld [vmem:[%s331] sm:$0xf]
        %v375 = vld [vmem:[%s331 + $0x4] sm:$0x1]
        %v376 = vld [vmem:[%s331 + $0x8] sm:$0xf]
        %v377 = vld [vmem:[%s331 + $0xc] sm:$0x1]
        %v378 = vld [vmem:[%s331 + $0x10] sm:$0xf]
        %v379 = vld [vmem:[%s331 + $0x14] sm:$0x1]
        %v380 = vld [vmem:[%s331 + $0x18] sm:$0xf]
        %v381 = vld [vmem:[%s331 + $0x1c] sm:$0x1]
        %v382 = vld [vmem:[%s331 + $0x20] sm:$0xf]
        %v383 = vld [vmem:[%s331 + $0x24] sm:$0x1]
        %v384 = vld [vmem:[%s331 + $0x28] sm:$0xf]
        %v385 = vld [vmem:[%s331 + $0x2c] sm:$0x1]
        %v386 = vld [vmem:[%s331 + $0x30] sm:$0xf]
        %v387 = vld [vmem:[%s331 + $0x34] sm:$0x1]
        %v388 = vld [vmem:[%s331 + $0x38] sm:$0xf]
        %v389 = vld [vmem:[%s331 + $0x3c] sm:$0x1]
        %v390 = vld [vmem:[%s331 + $0x40] sm:$0xf]
        %v391 = vld [vmem:[%s331 + $0x44] sm:$0x1]
        %v392 = vld [vmem:[%s331 + $0x48] sm:$0xf]
        %v393 = vld [vmem:[%s331 + $0x4c] sm:$0x1]
        %v394 = vld [vmem:[%s3] sm:$0xf]
        %vm395 = vsmask.f32 3328
        %vm396 = vsmask.f32 7440
        %vm397 = vmor %vm395, %vm396
        %v399 = vshrl.u32 %v334, 16
        %v401 = vrot.slane %v399, 4
        %v402 = vshll.u32 %v334, 16
        %v404 = vrot.slane %v402, 5
        %v405 = vor.u32 %v401, %v404
        %v406 = vrot.slane %v405, 4
        %v408 = vshll.u32 %v335, 16
        %v410 = vrot.slane %v408, 5
        %v411 = vsel %vm397, %v406, %v410
        %v413 = vshrl.u32 %v336, 16
        %v415 = vrot.slane %v413, 4
        %v416 = vshll.u32 %v336, 16
        %v418 = vrot.slane %v416, 5
        %v419 = vor.u32 %v415, %v418
        %v420 = vrot.slane %v419, 4
        %v422 = vshll.u32 %v337, 16
        %v424 = vrot.slane %v422, 5
        %v425 = vsel %vm397, %v420, %v424
        %v427 = vshrl.u32 %v338, 16
        %v429 = vrot.slane %v427, 4
        %v430 = vshll.u32 %v338, 16
        %v432 = vrot.slane %v430, 5
        %v433 = vor.u32 %v429, %v432
        %v434 = vrot.slane %v433, 4
        %v436 = vshll.u32 %v339, 16
        %v438 = vrot.slane %v436, 5
        %v439 = vsel %vm397, %v434, %v438
        %v441 = vshrl.u32 %v340, 16
        %v443 = vrot.slane %v441, 4
        %v444 = vshll.u32 %v340, 16
        %v446 = vrot.slane %v444, 5
        %v447 = vor.u32 %v443, %v446
        %v448 = vrot.slane %v447, 4
        %v450 = vshll.u32 %v341, 16
        %v452 = vrot.slane %v450, 5
        %v453 = vsel %vm397, %v448, %v452
        %v455 = vshrl.u32 %v342, 16
        %v457 = vrot.slane %v455, 4
        %v458 = vshll.u32 %v342, 16
        %v460 = vrot.slane %v458, 5
        %v461 = vor.u32 %v457, %v460
        %v462 = vrot.slane %v461, 4
        %v464 = vshll.u32 %v343, 16
        %v466 = vrot.slane %v464, 5
        %v467 = vsel %vm397, %v462, %v466
        %v469 = vshrl.u32 %v344, 16
        %v471 = vrot.slane %v469, 4
        %v472 = vshll.u32 %v344, 16
        %v474 = vrot.slane %v472, 5
        %v475 = vor.u32 %v471, %v474
        %v476 = vrot.slane %v475, 4
        %v478 = vshll.u32 %v345, 16
        %v480 = vrot.slane %v478, 5
        %v481 = vsel %vm397, %v476, %v480
        %v483 = vshrl.u32 %v346, 16
        %v485 = vrot.slane %v483, 4
        %v486 = vshll.u32 %v346, 16
        %v488 = vrot.slane %v486, 5
        %v489 = vor.u32 %v485, %v488
        %v490 = vrot.slane %v489, 4
        %v492 = vshll.u32 %v347, 16
        %v494 = vrot.slane %v492, 5
        %v495 = vsel %vm397, %v490, %v494
        %v497 = vshrl.u32 %v348, 16
        %v499 = vrot.slane %v497, 4
        %v500 = vshll.u32 %v348, 16
        %v502 = vrot.slane %v500, 5
        %v503 = vor.u32 %v499, %v502
        %v504 = vrot.slane %v503, 4
        %v506 = vshll.u32 %v349, 16
        %v508 = vrot.slane %v506, 5
        %v509 = vsel %vm397, %v504, %v508
        %s510 = scalar_lea.vmem %s3, 4
        %v511 = vld [vmem:[%s510] sm:$0xf]
        %v512 = vunpack.c.l.b16 %v411
        %v513 = vunpack.c.l.b16 %v425
        %v514 = vunpack.c.l.b16 %v439
        %v515 = vunpack.c.l.b16 %v453
        %v516 = vunpack.c.l.b16 %v467
        %v517 = vunpack.c.l.b16 %v481
        %v518 = vunpack.c.l.b16 %v495
        %v519 = vunpack.c.l.b16 %v509
        %v520 = vpack.c.b16 %v513, %v512
        %v521 = vpack.c.b16 %v515, %v514
        %v522 = vpack.c.b16 %v517, %v516
        %v523 = vpack.c.b16 %v519, %v518
        %vm524 = vcmask 64512
        %v526 = vsel %vm524, %v520, 0
        %v529 = vsel %vm524, %v521, 0
        %v532 = vsel %vm524, %v522, 0
        %v535 = vsel %vm524, %v523, 0
        %vm537 = vcmask 1043456
        %v539 = vsel %vm537, %v511, 0
        %541 = vmatprep.subr.bf16.mxu0 0
        %542 = vmatpush1.bf16.msra.mxu0 0
        %543 = vmatprep.subr.bf16.mxu0 0
        %544 = vmatpush1.bf16.msra.mxu0 0
        %545 = vmatprep.subr.bf16.mxu0 0
        %546 = vmatpush1.bf16.msra.mxu0 0
        %547 = vmatprep.subr.bf16.mxu0 0
        %548 = vmatpush1.bf16.msra.mxu0 0
        %549 = vmatprep.subr.bf16.mxu0 0
        %550 = vmatpush1.bf16.msra.mxu0 0
        %551 = vmatprep.subr.bf16.mxu0 0
        %552 = vmatpush1.bf16.msra.mxu0 0
        %553 = vmatprep.subr.bf16.mxu0 0
        %554 = vmatpush1.bf16.msra.mxu0 0
        %555 = vmatprep.subr.bf16.mxu0 0
        %556 = vmatpush1.bf16.msra.mxu0 %v539
        %557 = vmatprep.subr.bf16.mxu0 0
        %558 = vmatpush2.bf16.msra.mxu0 0
        %559 = vmatprep.subr.bf16.mxu0 0
        %560 = vmatpush2.bf16.msra.mxu0 0
        %561 = vmatprep.subr.bf16.mxu0 0
        %562 = vmatpush2.bf16.msra.mxu0 0
        %563 = vmatprep.subr.bf16.mxu0 0
        %564 = vmatpush2.bf16.msra.mxu0 0
        %565 = vmatprep.subr.bf16.mxu0 0
        %566 = vmatpush2.bf16.msra.mxu0 0
        %567 = vmatprep.subr.bf16.mxu0 0
        %568 = vmatpush2.bf16.msra.mxu0 0
        %569 = vmatprep.subr.bf16.mxu0 0
        %570 = vmatpush2.bf16.msra.mxu0 0
        %571 = vmatprep.subr.bf16.mxu0 0
        %572 = vmatpush2.bf16.msra.mxu0 0
        %573 = vmatprep.mubr.bf16.mxu0 0
        %574 = vmatmul.mubr.bf16.gmra.mxu0 %v526
        %v575 = vpop.f32.mrf.mxu0
        %v576 = vadd.f32 0.0, %v575
        %v577 = vpop.f32.mrf.mxu0
        %v578 = vpop.f32.mrf.mxu0
        %v579 = vadd.f32 0.0, %v578
        %v580 = vpop.f32.mrf.mxu0
        %581 = vmatprep.mubr.bf16.mxu0 0
        %582 = vmatmul.mubr.bf16.gmra.mxu0 %v529
        %v583 = vpop.f32.mrf.mxu0
        %v584 = vadd.f32 0.0, %v583
        %v585 = vpop.f32.mrf.mxu0
        %v586 = vpop.f32.mrf.mxu0
        %v587 = vadd.f32 0.0, %v586
        %v588 = vpop.f32.mrf.mxu0
        %589 = vmatprep.mubr.bf16.mxu0 0
        %590 = vmatmul.mubr.bf16.gmra.mxu0 %v532
        %v591 = vpop.f32.mrf.mxu0
        %v592 = vadd.f32 0.0, %v591
        %v593 = vpop.f32.mrf.mxu0
        %v594 = vpop.f32.mrf.mxu0
        %v595 = vadd.f32 0.0, %v594
        %v596 = vpop.f32.mrf.mxu0
        %597 = vmatprep.mubr.bf16.mxu0 0
        %598 = vmatmul.mubr.bf16.gmra.mxu0 %v535
        %v599 = vpop.f32.mrf.mxu0
        %v600 = vadd.f32 0.0, %v599
        %v601 = vpop.f32.mrf.mxu0
        %v602 = vpop.f32.mrf.mxu0
        %v603 = vadd.f32 0.0, %v602
        %v604 = vpop.f32.mrf.mxu0
        %605 = vdwg.mxu0
        %v614 = vunpack.c.l.b16 %v334
        %v615 = vunpack.c.l.b16 %v336
        %v616 = vunpack.c.l.b16 %v338
        %v617 = vunpack.c.l.b16 %v340
        %v618 = vunpack.c.l.b16 %v342
        %v619 = vunpack.c.l.b16 %v344
        %v620 = vunpack.c.l.b16 %v346
        %v621 = vunpack.c.l.b16 %v348
        %v622 = vpack.c.b16 %v615, %v614
        %v623 = vpack.c.b16 %v617, %v616
        %v624 = vpack.c.b16 %v619, %v618
        %v625 = vpack.c.b16 %v621, %v620
        %v627 = vsel %vm524, %v622, 0
        %v630 = vsel %vm524, %v623, 0
        %v633 = vsel %vm524, %v624, 0
        %v636 = vsel %vm524, %v625, 0
        %v639 = vsel %vm537, %v394, 0
        %641 = vmatprep.subr.bf16.mxu0 0
        %642 = vmatpush1.bf16.msra.mxu0 0
        %643 = vmatprep.subr.bf16.mxu0 0
        %644 = vmatpush1.bf16.msra.mxu0 0
        %645 = vmatprep.subr.bf16.mxu0 0
        %646 = vmatpush1.bf16.msra.mxu0 0
        %647 = vmatprep.subr.bf16.mxu0 0
        %648 = vmatpush1.bf16.msra.mxu0 0
        %649 = vmatprep.subr.bf16.mxu0 0
        %650 = vmatpush1.bf16.msra.mxu0 0
        %651 = vmatprep.subr.bf16.mxu0 0
        %652 = vmatpush1.bf16.msra.mxu0 0
        %653 = vmatprep.subr.bf16.mxu0 0
        %654 = vmatpush1.bf16.msra.mxu0 0
        %655 = vmatprep.subr.bf16.mxu0 0
        %656 = vmatpush1.bf16.msra.mxu0 %v639
        %657 = vmatprep.subr.bf16.mxu0 0
        %658 = vmatpush2.bf16.msra.mxu0 0
        %659 = vmatprep.subr.bf16.mxu0 0
        %660 = vmatpush2.bf16.msra.mxu0 0
        %661 = vmatprep.subr.bf16.mxu0 0
        %662 = vmatpush2.bf16.msra.mxu0 0
        %663 = vmatprep.subr.bf16.mxu0 0
        %664 = vmatpush2.bf16.msra.mxu0 0
        %665 = vmatprep.subr.bf16.mxu0 0
        %666 = vmatpush2.bf16.msra.mxu0 0
        %667 = vmatprep.subr.bf16.mxu0 0
        %668 = vmatpush2.bf16.msra.mxu0 0
        %669 = vmatprep.subr.bf16.mxu0 0
        %670 = vmatpush2.bf16.msra.mxu0 0
        %671 = vmatprep.subr.bf16.mxu0 0
        %672 = vmatpush2.bf16.msra.mxu0 0
        %673 = vmatprep.mubr.bf16.mxu0 0
        %674 = vmatmul.mubr.bf16.gmra.mxu0 %v627
        %v675 = vpop.f32.mrf.mxu0
        %v676 = vadd.f32 %v576, %v675
        %v677 = vpop.f32.mrf.mxu0
        %v678 = vpop.f32.mrf.mxu0
        %v679 = vadd.f32 %v579, %v678
        %v680 = vpop.f32.mrf.mxu0
        %681 = vmatprep.mubr.bf16.mxu0 0
        %682 = vmatmul.mubr.bf16.gmra.mxu0 %v630
        %v683 = vpop.f32.mrf.mxu0
        %v684 = vadd.f32 %v584, %v683
        %v685 = vpop.f32.mrf.mxu0
        %v686 = vpop.f32.mrf.mxu0
        %v687 = vadd.f32 %v587, %v686
        %v688 = vpop.f32.mrf.mxu0
        %689 = vmatprep.mubr.bf16.mxu0 0
        %690 = vmatmul.mubr.bf16.gmra.mxu0 %v633
        %v691 = vpop.f32.mrf.mxu0
        %v692 = vadd.f32 %v592, %v691
        %v693 = vpop.f32.mrf.mxu0
        %v694 = vpop.f32.mrf.mxu0
        %v695 = vadd.f32 %v595, %v694
        %v696 = vpop.f32.mrf.mxu0
        %697 = vmatprep.mubr.bf16.mxu0 0
        %698 = vmatmul.mubr.bf16.gmra.mxu0 %v636
        %v699 = vpop.f32.mrf.mxu0
        %v700 = vadd.f32 %v600, %v699
        %v701 = vpop.f32.mrf.mxu0
        %v702 = vpop.f32.mrf.mxu0
        %v703 = vadd.f32 %v603, %v702
        %v704 = vpop.f32.mrf.mxu0
        %705 = vdwg.mxu0
        %vm714 = vcmask 1042432
        %vm715 = vcmask 1046532
        %vm716 = vmor %vm714, %vm715
        %v717 = vrot.slane %v334, 5
        %v718 = vrot.slane %v717, 4
        %v719 = vrot.slane %v335, 5
        %v720 = vsel %vm716, %v718, %v719
        %v721 = vrot.slane %v336, 5
        %v722 = vrot.slane %v721, 4
        %v723 = vrot.slane %v337, 5
        %v724 = vsel %vm716, %v722, %v723
        %v725 = vrot.slane %v338, 5
        %v726 = vrot.slane %v725, 4
        %v727 = vrot.slane %v339, 5
        %v728 = vsel %vm716, %v726, %v727
        %v729 = vrot.slane %v340, 5
        %v730 = vrot.slane %v729, 4
        %v731 = vrot.slane %v341, 5
        %v732 = vsel %vm716, %v730, %v731
        %v733 = vrot.slane %v342, 5
        %v734 = vrot.slane %v733, 4
        %v735 = vrot.slane %v343, 5
        %v736 = vsel %vm716, %v734, %v735
        %v737 = vrot.slane %v344, 5
        %v738 = vrot.slane %v737, 4
        %v739 = vrot.slane %v345, 5
        %v740 = vsel %vm716, %v738, %v739
        %v741 = vrot.slane %v346, 5
        %v742 = vrot.slane %v741, 4
        %v743 = vrot.slane %v347, 5
        %v744 = vsel %vm716, %v742, %v743
        %v745 = vrot.slane %v348, 5
        %v746 = vrot.slane %v745, 4
        %v747 = vrot.slane %v349, 5
        %v748 = vsel %vm716, %v746, %v747
        %s749 = scalar_lea.vmem %s3, 8
        %v750 = vld [vmem:[%s749] sm:$0xf]
        %v751 = vunpack.c.l.b16 %v720
        %v752 = vunpack.c.l.b16 %v724
        %v753 = vunpack.c.l.b16 %v728
        %v754 = vunpack.c.l.b16 %v732
        %v755 = vunpack.c.l.b16 %v736
        %v756 = vunpack.c.l.b16 %v740
        %v757 = vunpack.c.l.b16 %v744
        %v758 = vunpack.c.l.b16 %v748
        %v759 = vpack.c.b16 %v752, %v751
        %v760 = vpack.c.b16 %v754, %v753
        %v761 = vpack.c.b16 %v756, %v755
        %v762 = vpack.c.b16 %v758, %v757
        %v764 = vsel %vm524, %v759, 0
        %v767 = vsel %vm524, %v760, 0
        %v770 = vsel %vm524, %v761, 0
        %v773 = vsel %vm524, %v762, 0
        %v776 = vsel %vm537, %v750, 0
        %778 = vmatprep.subr.bf16.mxu0 0
        %779 = vmatpush1.bf16.msra.mxu0 0
        %780 = vmatprep.subr.bf16.mxu0 0
        %781 = vmatpush1.bf16.msra.mxu0 0
        %782 = vmatprep.subr.bf16.mxu0 0
        %783 = vmatpush1.bf16.msra.mxu0 0
        %784 = vmatprep.subr.bf16.mxu0 0
        %785 = vmatpush1.bf16.msra.mxu0 0
        %786 = vmatprep.subr.bf16.mxu0 0
        %787 = vmatpush1.bf16.msra.mxu0 0
        %788 = vmatprep.subr.bf16.mxu0 0
        %789 = vmatpush1.bf16.msra.mxu0 0
        %790 = vmatprep.subr.bf16.mxu0 0
        %791 = vmatpush1.bf16.msra.mxu0 0
        %792 = vmatprep.subr.bf16.mxu0 0
        %793 = vmatpush1.bf16.msra.mxu0 %v776
        %794 = vmatprep.subr.bf16.mxu0 0
        %795 = vmatpush2.bf16.msra.mxu0 0
        %796 = vmatprep.subr.bf16.mxu0 0
        %797 = vmatpush2.bf16.msra.mxu0 0
        %798 = vmatprep.subr.bf16.mxu0 0
        %799 = vmatpush2.bf16.msra.mxu0 0
        %800 = vmatprep.subr.bf16.mxu0 0
        %801 = vmatpush2.bf16.msra.mxu0 0
        %802 = vmatprep.subr.bf16.mxu0 0
        %803 = vmatpush2.bf16.msra.mxu0 0
        %804 = vmatprep.subr.bf16.mxu0 0
        %805 = vmatpush2.bf16.msra.mxu0 0
        %806 = vmatprep.subr.bf16.mxu0 0
        %807 = vmatpush2.bf16.msra.mxu0 0
        %808 = vmatprep.subr.bf16.mxu0 0
        %809 = vmatpush2.bf16.msra.mxu0 0
        %810 = vmatprep.mubr.bf16.mxu0 0
        %811 = vmatmul.mubr.bf16.gmra.mxu0 %v764
        %v812 = vpop.f32.mrf.mxu0
        %v813 = vadd.f32 0.0, %v812
        %v814 = vpop.f32.mrf.mxu0
        %v815 = vpop.f32.mrf.mxu0
        %v816 = vadd.f32 0.0, %v815
        %v817 = vpop.f32.mrf.mxu0
        %818 = vmatprep.mubr.bf16.mxu0 0
        %819 = vmatmul.mubr.bf16.gmra.mxu0 %v767
        %v820 = vpop.f32.mrf.mxu0
        %v821 = vadd.f32 0.0, %v820
        %v822 = vpop.f32.mrf.mxu0
        %v823 = vpop.f32.mrf.mxu0
        %v824 = vadd.f32 0.0, %v823
        %v825 = vpop.f32.mrf.mxu0
        %826 = vmatprep.mubr.bf16.mxu0 0
        %827 = vmatmul.mubr.bf16.gmra.mxu0 %v770
        %v828 = vpop.f32.mrf.mxu0
        %v829 = vadd.f32 0.0, %v828
        %v830 = vpop.f32.mrf.mxu0
        %v831 = vpop.f32.mrf.mxu0
        %v832 = vadd.f32 0.0, %v831
        %v833 = vpop.f32.mrf.mxu0
        %834 = vmatprep.mubr.bf16.mxu0 0
        %835 = vmatmul.mubr.bf16.gmra.mxu0 %v773
        %v836 = vpop.f32.mrf.mxu0
        %v837 = vadd.f32 0.0, %v836
        %v838 = vpop.f32.mrf.mxu0
        %v839 = vpop.f32.mrf.mxu0
        %v840 = vadd.f32 0.0, %v839
        %v841 = vpop.f32.mrf.mxu0
        %842 = vdwg.mxu0
        %v843 = vadd.f32 %v676, %v813
        %v844 = vadd.f32 %v679, %v816
        %v845 = vadd.f32 %v684, %v821
        %v846 = vadd.f32 %v687, %v824
        %v847 = vadd.f32 %v692, %v829
        %v848 = vadd.f32 %v695, %v832
        %v849 = vadd.f32 %v700, %v837
        %v850 = vadd.f32 %v703, %v840
        %s851 = scalar_lea.vmem %s3, 12
        %v852 = vld [vmem:[%s851] sm:$0xf]
        %v854 = vunpack.c.l.b16 %v350
        %v855 = vpack.c.b16 %v616, %v615
        %v856 = vpack.c.b16 %v618, %v617
        %v857 = vpack.c.b16 %v620, %v619
        %v858 = vpack.c.b16 %v854, %v621
        %v860 = vsel %vm524, %v855, 0
        %v863 = vsel %vm524, %v856, 0
        %v866 = vsel %vm524, %v857, 0
        %v869 = vsel %vm524, %v858, 0
        %v872 = vsel %vm537, %v852, 0
        %874 = vmatprep.subr.bf16.mxu0 0
        %875 = vmatpush1.bf16.msra.mxu0 0
        %876 = vmatprep.subr.bf16.mxu0 0
        %877 = vmatpush1.bf16.msra.mxu0 0
        %878 = vmatprep.subr.bf16.mxu0 0
        %879 = vmatpush1.bf16.msra.mxu0 0
        %880 = vmatprep.subr.bf16.mxu0 0
        %881 = vmatpush1.bf16.msra.mxu0 0
        %882 = vmatprep.subr.bf16.mxu0 0
        %883 = vmatpush1.bf16.msra.mxu0 0
        %884 = vmatprep.subr.bf16.mxu0 0
        %885 = vmatpush1.bf16.msra.mxu0 0
        %886 = vmatprep.subr.bf16.mxu0 0
        %887 = vmatpush1.bf16.msra.mxu0 0
        %888 = vmatprep.subr.bf16.mxu0 0
        %889 = vmatpush1.bf16.msra.mxu0 %v872
        %890 = vmatprep.subr.bf16.mxu0 0
        %891 = vmatpush2.bf16.msra.mxu0 0
        %892 = vmatprep.subr.bf16.mxu0 0
        %893 = vmatpush2.bf16.msra.mxu0 0
        %894 = vmatprep.subr.bf16.mxu0 0
        %895 = vmatpush2.bf16.msra.mxu0 0
        %896 = vmatprep.subr.bf16.mxu0 0
        %897 = vmatpush2.bf16.msra.mxu0 0
        %898 = vmatprep.subr.bf16.mxu0 0
        %899 = vmatpush2.bf16.msra.mxu0 0
        %900 = vmatprep.subr.bf16.mxu0 0
        %901 = vmatpush2.bf16.msra.mxu0 0
        %902 = vmatprep.subr.bf16.mxu0 0
        %903 = vmatpush2.bf16.msra.mxu0 0
        %904 = vmatprep.subr.bf16.mxu0 0
        %905 = vmatpush2.bf16.msra.mxu0 0
        %906 = vmatprep.mubr.bf16.mxu0 0
        %907 = vmatmul.mubr.bf16.gmra.mxu0 %v860
        %v908 = vpop.f32.mrf.mxu0
        %v909 = vadd.f32 0.0, %v908
        %v910 = vpop.f32.mrf.mxu0
        %v911 = vpop.f32.mrf.mxu0
        %v912 = vadd.f32 0.0, %v911
        %v913 = vpop.f32.mrf.mxu0
        %914 = vmatprep.mubr.bf16.mxu0 0
        %915 = vmatmul.mubr.bf16.gmra.mxu0 %v863
        %v916 = vpop.f32.mrf.mxu0
        %v917 = vadd.f32 0.0, %v916
        %v918 = vpop.f32.mrf.mxu0
        %v919 = vpop.f32.mrf.mxu0
        %v920 = vadd.f32 0.0, %v919
        %v921 = vpop.f32.mrf.mxu0
        %922 = vmatprep.mubr.bf16.mxu0 0
        %923 = vmatmul.mubr.bf16.gmra.mxu0 %v866
        %v924 = vpop.f32.mrf.mxu0
        %v925 = vadd.f32 0.0, %v924
        %v926 = vpop.f32.mrf.mxu0
        %v927 = vpop.f32.mrf.mxu0
        %v928 = vadd.f32 0.0, %v927
        %v929 = vpop.f32.mrf.mxu0
        %930 = vmatprep.mubr.bf16.mxu0 0
        %931 = vmatmul.mubr.bf16.gmra.mxu0 %v869
        %v932 = vpop.f32.mrf.mxu0
        %v933 = vadd.f32 0.0, %v932
        %v934 = vpop.f32.mrf.mxu0
        %v935 = vpop.f32.mrf.mxu0
        %v936 = vadd.f32 0.0, %v935
        %v937 = vpop.f32.mrf.mxu0
        %938 = vdwg.mxu0
        %v939 = vadd.f32 %v843, %v909
        %v940 = vadd.f32 %v844, %v912
        %v941 = vadd.f32 %v845, %v917
        %v942 = vadd.f32 %v846, %v920
        %v943 = vadd.f32 %v847, %v925
        %v944 = vadd.f32 %v848, %v928
        %v945 = vadd.f32 %v849, %v933
        %v946 = vadd.f32 %v850, %v936
        %v948 = vshrl.u32 %v350, 16
        %v950 = vrot.slane %v948, 4
        %v951 = vshll.u32 %v350, 16
        %v953 = vrot.slane %v951, 5
        %v954 = vor.u32 %v950, %v953
        %v955 = vrot.slane %v954, 4
        %v957 = vshll.u32 %v351, 16
        %v959 = vrot.slane %v957, 5
        %v960 = vsel %vm397, %v955, %v959
        %s961 = scalar_lea.vmem %s3, 16
        %v962 = vld [vmem:[%s961] sm:$0xf]
        %v963 = vunpack.c.l.b16 %v960
        %v964 = vpack.c.b16 %v514, %v513
        %v965 = vpack.c.b16 %v516, %v515
        %v966 = vpack.c.b16 %v518, %v517
        %v967 = vpack.c.b16 %v963, %v519
        %v969 = vsel %vm524, %v964, 0
        %v972 = vsel %vm524, %v965, 0
        %v975 = vsel %vm524, %v966, 0
        %v978 = vsel %vm524, %v967, 0
        %v981 = vsel %vm537, %v962, 0
        %983 = vmatprep.subr.bf16.mxu0 0
        %984 = vmatpush1.bf16.msra.mxu0 0
        %985 = vmatprep.subr.bf16.mxu0 0
        %986 = vmatpush1.bf16.msra.mxu0 0
        %987 = vmatprep.subr.bf16.mxu0 0
        %988 = vmatpush1.bf16.msra.mxu0 0
        %989 = vmatprep.subr.bf16.mxu0 0
        %990 = vmatpush1.bf16.msra.mxu0 0
        %991 = vmatprep.subr.bf16.mxu0 0
        %992 = vmatpush1.bf16.msra.mxu0 0
        %993 = vmatprep.subr.bf16.mxu0 0
        %994 = vmatpush1.bf16.msra.mxu0 0
        %995 = vmatprep.subr.bf16.mxu0 0
        %996 = vmatpush1.bf16.msra.mxu0 0
        %997 = vmatprep.subr.bf16.mxu0 0
        %998 = vmatpush1.bf16.msra.mxu0 %v981
        %999 = vmatprep.subr.bf16.mxu0 0
        %1000 = vmatpush2.bf16.msra.mxu0 0
        %1001 = vmatprep.subr.bf16.mxu0 0
        %1002 = vmatpush2.bf16.msra.mxu0 0
        %1003 = vmatprep.subr.bf16.mxu0 0
        %1004 = vmatpush2.bf16.msra.mxu0 0
        %1005 = vmatprep.subr.bf16.mxu0 0
        %1006 = vmatpush2.bf16.msra.mxu0 0
        %1007 = vmatprep.subr.bf16.mxu0 0
        %1008 = vmatpush2.bf16.msra.mxu0 0
        %1009 = vmatprep.subr.bf16.mxu0 0
        %1010 = vmatpush2.bf16.msra.mxu0 0
        %1011 = vmatprep.subr.bf16.mxu0 0
        %1012 = vmatpush2.bf16.msra.mxu0 0
        %1013 = vmatprep.subr.bf16.mxu0 0
        %1014 = vmatpush2.bf16.msra.mxu0 0
        %1015 = vmatprep.mubr.bf16.mxu0 0
        %1016 = vmatmul.mubr.bf16.gmra.mxu0 %v969
        %v1017 = vpop.f32.mrf.mxu0
        %v1018 = vadd.f32 0.0, %v1017
        %v1019 = vpop.f32.mrf.mxu0
        %v1020 = vpop.f32.mrf.mxu0
        %v1021 = vadd.f32 0.0, %v1020
        %v1022 = vpop.f32.mrf.mxu0
        %1023 = vmatprep.mubr.bf16.mxu0 0
        %1024 = vmatmul.mubr.bf16.gmra.mxu0 %v972
        %v1025 = vpop.f32.mrf.mxu0
        %v1026 = vadd.f32 0.0, %v1025
        %v1027 = vpop.f32.mrf.mxu0
        %v1028 = vpop.f32.mrf.mxu0
        %v1029 = vadd.f32 0.0, %v1028
        %v1030 = vpop.f32.mrf.mxu0
        %1031 = vmatprep.mubr.bf16.mxu0 0
        %1032 = vmatmul.mubr.bf16.gmra.mxu0 %v975
        %v1033 = vpop.f32.mrf.mxu0
        %v1034 = vadd.f32 0.0, %v1033
        %v1035 = vpop.f32.mrf.mxu0
        %v1036 = vpop.f32.mrf.mxu0
        %v1037 = vadd.f32 0.0, %v1036
        %v1038 = vpop.f32.mrf.mxu0
        %1039 = vmatprep.mubr.bf16.mxu0 0
        %1040 = vmatmul.mubr.bf16.gmra.mxu0 %v978
        %v1041 = vpop.f32.mrf.mxu0
        %v1042 = vadd.f32 0.0, %v1041
        %v1043 = vpop.f32.mrf.mxu0
        %v1044 = vpop.f32.mrf.mxu0
        %v1045 = vadd.f32 0.0, %v1044
        %v1046 = vpop.f32.mrf.mxu0
        %1047 = vdwg.mxu0
        %v1048 = vadd.f32 %v939, %v1018
        %v1049 = vadd.f32 %v940, %v1021
        %v1050 = vadd.f32 %v941, %v1026
        %v1051 = vadd.f32 %v942, %v1029
        %v1052 = vadd.f32 %v943, %v1034
        %v1053 = vadd.f32 %v944, %v1037
        %v1054 = vadd.f32 %v945, %v1042
        %v1055 = vadd.f32 %v946, %v1045
        %v1057 = vrot.slane %v350, 5
        %v1058 = vrot.slane %v1057, 4
        %v1059 = vrot.slane %v351, 5
        %v1060 = vsel %vm716, %v1058, %v1059
        %s1061 = scalar_lea.vmem %s3, 20
        %v1062 = vld [vmem:[%s1061] sm:$0xf]
        %v1063 = vunpack.c.l.b16 %v1060
        %v1064 = vpack.c.b16 %v753, %v752
        %v1065 = vpack.c.b16 %v755, %v754
        %v1066 = vpack.c.b16 %v757, %v756
        %v1067 = vpack.c.b16 %v1063, %v758
        %v1069 = vsel %vm524, %v1064, 0
        %v1072 = vsel %vm524, %v1065, 0
        %v1075 = vsel %vm524, %v1066, 0
        %v1078 = vsel %vm524, %v1067, 0
        %v1081 = vsel %vm537, %v1062, 0
        %1083 = vmatprep.subr.bf16.mxu0 0
        %1084 = vmatpush1.bf16.msra.mxu0 0
        %1085 = vmatprep.subr.bf16.mxu0 0
        %1086 = vmatpush1.bf16.msra.mxu0 0
        %1087 = vmatprep.subr.bf16.mxu0 0
        %1088 = vmatpush1.bf16.msra.mxu0 0
        %1089 = vmatprep.subr.bf16.mxu0 0
        %1090 = vmatpush1.bf16.msra.mxu0 0
        %1091 = vmatprep.subr.bf16.mxu0 0
        %1092 = vmatpush1.bf16.msra.mxu0 0
        %1093 = vmatprep.subr.bf16.mxu0 0
        %1094 = vmatpush1.bf16.msra.mxu0 0
        %1095 = vmatprep.subr.bf16.mxu0 0
        %1096 = vmatpush1.bf16.msra.mxu0 0
        %1097 = vmatprep.subr.bf16.mxu0 0
        %1098 = vmatpush1.bf16.msra.mxu0 %v1081
        %1099 = vmatprep.subr.bf16.mxu0 0
        %1100 = vmatpush2.bf16.msra.mxu0 0
        %1101 = vmatprep.subr.bf16.mxu0 0
        %1102 = vmatpush2.bf16.msra.mxu0 0
        %1103 = vmatprep.subr.bf16.mxu0 0
        %1104 = vmatpush2.bf16.msra.mxu0 0
        %1105 = vmatprep.subr.bf16.mxu0 0
        %1106 = vmatpush2.bf16.msra.mxu0 0
        %1107 = vmatprep.subr.bf16.mxu0 0
        %1108 = vmatpush2.bf16.msra.mxu0 0
        %1109 = vmatprep.subr.bf16.mxu0 0
        %1110 = vmatpush2.bf16.msra.mxu0 0
        %1111 = vmatprep.subr.bf16.mxu0 0
        %1112 = vmatpush2.bf16.msra.mxu0 0
        %1113 = vmatprep.subr.bf16.mxu0 0
        %1114 = vmatpush2.bf16.msra.mxu0 0
        %1115 = vmatprep.mubr.bf16.mxu0 0
        %1116 = vmatmul.mubr.bf16.gmra.mxu0 %v1069
        %v1117 = vpop.f32.mrf.mxu0
        %v1118 = vadd.f32 0.0, %v1117
        %v1119 = vpop.f32.mrf.mxu0
        %v1120 = vpop.f32.mrf.mxu0
        %v1121 = vadd.f32 0.0, %v1120
        %v1122 = vpop.f32.mrf.mxu0
        %1123 = vmatprep.mubr.bf16.mxu0 0
        %1124 = vmatmul.mubr.bf16.gmra.mxu0 %v1072
        %v1125 = vpop.f32.mrf.mxu0
        %v1126 = vadd.f32 0.0, %v1125
        %v1127 = vpop.f32.mrf.mxu0
        %v1128 = vpop.f32.mrf.mxu0
        %v1129 = vadd.f32 0.0, %v1128
        %v1130 = vpop.f32.mrf.mxu0
        %1131 = vmatprep.mubr.bf16.mxu0 0
        %1132 = vmatmul.mubr.bf16.gmra.mxu0 %v1075
        %v1133 = vpop.f32.mrf.mxu0
        %v1134 = vadd.f32 0.0, %v1133
        %v1135 = vpop.f32.mrf.mxu0
        %v1136 = vpop.f32.mrf.mxu0
        %v1137 = vadd.f32 0.0, %v1136
        %v1138 = vpop.f32.mrf.mxu0
        %1139 = vmatprep.mubr.bf16.mxu0 0
        %1140 = vmatmul.mubr.bf16.gmra.mxu0 %v1078
        %v1141 = vpop.f32.mrf.mxu0
        %v1142 = vadd.f32 0.0, %v1141
        %v1143 = vpop.f32.mrf.mxu0
        %v1144 = vpop.f32.mrf.mxu0
        %v1145 = vadd.f32 0.0, %v1144
        %v1146 = vpop.f32.mrf.mxu0
        %1147 = vdwg.mxu0
        %v1148 = vadd.f32 %v1048, %v1118
        %v1149 = vadd.f32 %v1049, %v1121
        %v1150 = vadd.f32 %v1050, %v1126
        %v1151 = vadd.f32 %v1051, %v1129
        %v1152 = vadd.f32 %v1052, %v1134
        %v1153 = vadd.f32 %v1053, %v1137
        %v1154 = vadd.f32 %v1054, %v1142
        %v1155 = vadd.f32 %v1055, %v1145
        %s1156 = scalar_lea.vmem %s3, 24
        %v1157 = vld [vmem:[%s1156] sm:$0xf]
        %v1159 = vunpack.c.l.b16 %v352
        %v1160 = vpack.c.b16 %v1159, %v854
        %v1162 = vsel %vm524, %v1160, 0
        %v1165 = vsel %vm537, %v1157, 0
        %1167 = vmatprep.subr.bf16.mxu0 0
        %1168 = vmatpush1.bf16.msra.mxu0 0
        %1169 = vmatprep.subr.bf16.mxu0 0
        %1170 = vmatpush1.bf16.msra.mxu0 0
        %1171 = vmatprep.subr.bf16.mxu0 0
        %1172 = vmatpush1.bf16.msra.mxu0 0
        %1173 = vmatprep.subr.bf16.mxu0 0
        %1174 = vmatpush1.bf16.msra.mxu0 0
        %1175 = vmatprep.subr.bf16.mxu0 0
        %1176 = vmatpush1.bf16.msra.mxu0 0
        %1177 = vmatprep.subr.bf16.mxu0 0
        %1178 = vmatpush1.bf16.msra.mxu0 0
        %1179 = vmatprep.subr.bf16.mxu0 0
        %1180 = vmatpush1.bf16.msra.mxu0 0
        %1181 = vmatprep.subr.bf16.mxu0 0
        %1182 = vmatpush1.bf16.msra.mxu0 %v1165
        %1183 = vmatprep.subr.bf16.mxu0 0
        %1184 = vmatpush2.bf16.msra.mxu0 0
        %1185 = vmatprep.subr.bf16.mxu0 0
        %1186 = vmatpush2.bf16.msra.mxu0 0
        %1187 = vmatprep.subr.bf16.mxu0 0
        %1188 = vmatpush2.bf16.msra.mxu0 0
        %1189 = vmatprep.subr.bf16.mxu0 0
        %1190 = vmatpush2.bf16.msra.mxu0 0
        %1191 = vmatprep.subr.bf16.mxu0 0
        %1192 = vmatpush2.bf16.msra.mxu0 0
        %1193 = vmatprep.subr.bf16.mxu0 0
        %1194 = vmatpush2.bf16.msra.mxu0 0
        %1195 = vmatprep.subr.bf16.mxu0 0
        %1196 = vmatpush2.bf16.msra.mxu0 0
        %1197 = vmatprep.subr.bf16.mxu0 0
        %1198 = vmatpush2.bf16.msra.mxu0 0
        %1199 = vmatprep.mubr.bf16.mxu0 0
        %1200 = vmatmul.mubr.bf16.gmra.mxu0 %v630
        %v1201 = vpop.f32.mrf.mxu0
        %v1202 = vadd.f32 0.0, %v1201
        %v1203 = vpop.f32.mrf.mxu0
        %v1204 = vpop.f32.mrf.mxu0
        %v1205 = vadd.f32 0.0, %v1204
        %v1206 = vpop.f32.mrf.mxu0
        %1207 = vmatprep.mubr.bf16.mxu0 0
        %1208 = vmatmul.mubr.bf16.gmra.mxu0 %v633
        %v1209 = vpop.f32.mrf.mxu0
        %v1210 = vadd.f32 0.0, %v1209
        %v1211 = vpop.f32.mrf.mxu0
        %v1212 = vpop.f32.mrf.mxu0
        %v1213 = vadd.f32 0.0, %v1212
        %v1214 = vpop.f32.mrf.mxu0
        %1215 = vmatprep.mubr.bf16.mxu0 0
        %1216 = vmatmul.mubr.bf16.gmra.mxu0 %v636
        %v1217 = vpop.f32.mrf.mxu0
        %v1218 = vadd.f32 0.0, %v1217
        %v1219 = vpop.f32.mrf.mxu0
        %v1220 = vpop.f32.mrf.mxu0
        %v1221 = vadd.f32 0.0, %v1220
        %v1222 = vpop.f32.mrf.mxu0
        %1223 = vmatprep.mubr.bf16.mxu0 0
        %1224 = vmatmul.mubr.bf16.gmra.mxu0 %v1162
        %v1225 = vpop.f32.mrf.mxu0
        %v1226 = vadd.f32 0.0, %v1225
        %v1227 = vpop.f32.mrf.mxu0
        %v1228 = vpop.f32.mrf.mxu0
        %v1229 = vadd.f32 0.0, %v1228
        %v1230 = vpop.f32.mrf.mxu0
        %1231 = vdwg.mxu0
        %v1232 = vadd.f32 %v1148, %v1202
        %v1233 = vadd.f32 %v1149, %v1205
        %v1234 = vadd.f32 %v1150, %v1210
        %v1235 = vadd.f32 %v1151, %v1213
        %v1236 = vadd.f32 %v1152, %v1218
        %v1237 = vadd.f32 %v1153, %v1221
        %v1238 = vadd.f32 %v1154, %v1226
        %v1239 = vadd.f32 %v1155, %v1229
        %v1241 = vshrl.u32 %v352, 16
        %v1243 = vrot.slane %v1241, 4
        %v1244 = vshll.u32 %v352, 16
        %v1246 = vrot.slane %v1244, 5
        %v1247 = vor.u32 %v1243, %v1246
        %v1248 = vrot.slane %v1247, 4
        %v1250 = vshll.u32 %v353, 16
        %v1252 = vrot.slane %v1250, 5
        %v1253 = vsel %vm397, %v1248, %v1252
        %s1254 = scalar_lea.vmem %s3, 28
        %v1255 = vld [vmem:[%s1254] sm:$0xf]
        %v1256 = vunpack.c.l.b16 %v1253
        %v1257 = vpack.c.b16 %v1256, %v963
        %v1259 = vsel %vm524, %v1257, 0
        %v1262 = vsel %vm537, %v1255, 0
        %1264 = vmatprep.subr.bf16.mxu0 0
        %1265 = vmatpush1.bf16.msra.mxu0 0
        %1266 = vmatprep.subr.bf16.mxu0 0
        %1267 = vmatpush1.bf16.msra.mxu0 0
        %1268 = vmatprep.subr.bf16.mxu0 0
        %1269 = vmatpush1.bf16.msra.mxu0 0
        %1270 = vmatprep.subr.bf16.mxu0 0
        %1271 = vmatpush1.bf16.msra.mxu0 0
        %1272 = vmatprep.subr.bf16.mxu0 0
        %1273 = vmatpush1.bf16.msra.mxu0 0
        %1274 = vmatprep.subr.bf16.mxu0 0
        %1275 = vmatpush1.bf16.msra.mxu0 0
        %1276 = vmatprep.subr.bf16.mxu0 0
        %1277 = vmatpush1.bf16.msra.mxu0 0
        %1278 = vmatprep.subr.bf16.mxu0 0
        %1279 = vmatpush1.bf16.msra.mxu0 %v1262
        %1280 = vmatprep.subr.bf16.mxu0 0
        %1281 = vmatpush2.bf16.msra.mxu0 0
        %1282 = vmatprep.subr.bf16.mxu0 0
        %1283 = vmatpush2.bf16.msra.mxu0 0
        %1284 = vmatprep.subr.bf16.mxu0 0
        %1285 = vmatpush2.bf16.msra.mxu0 0
        %1286 = vmatprep.subr.bf16.mxu0 0
        %1287 = vmatpush2.bf16.msra.mxu0 0
        %1288 = vmatprep.subr.bf16.mxu0 0
        %1289 = vmatpush2.bf16.msra.mxu0 0
        %1290 = vmatprep.subr.bf16.mxu0 0
        %1291 = vmatpush2.bf16.msra.mxu0 0
        %1292 = vmatprep.subr.bf16.mxu0 0
        %1293 = vmatpush2.bf16.msra.mxu0 0
        %1294 = vmatprep.subr.bf16.mxu0 0
        %1295 = vmatpush2.bf16.msra.mxu0 0
        %1296 = vmatprep.mubr.bf16.mxu0 0
        %1297 = vmatmul.mubr.bf16.gmra.mxu0 %v529
        %v1298 = vpop.f32.mrf.mxu0
        %v1299 = vadd.f32 0.0, %v1298
        %v1300 = vpop.f32.mrf.mxu0
        %v1301 = vpop.f32.mrf.mxu0
        %v1302 = vadd.f32 0.0, %v1301
        %v1303 = vpop.f32.mrf.mxu0
        %1304 = vmatprep.mubr.bf16.mxu0 0
        %1305 = vmatmul.mubr.bf16.gmra.mxu0 %v532
        %v1306 = vpop.f32.mrf.mxu0
        %v1307 = vadd.f32 0.0, %v1306
        %v1308 = vpop.f32.mrf.mxu0
        %v1309 = vpop.f32.mrf.mxu0
        %v1310 = vadd.f32 0.0, %v1309
        %v1311 = vpop.f32.mrf.mxu0
        %1312 = vmatprep.mubr.bf16.mxu0 0
        %1313 = vmatmul.mubr.bf16.gmra.mxu0 %v535
        %v1314 = vpop.f32.mrf.mxu0
        %v1315 = vadd.f32 0.0, %v1314
        %v1316 = vpop.f32.mrf.mxu0
        %v1317 = vpop.f32.mrf.mxu0
        %v1318 = vadd.f32 0.0, %v1317
        %v1319 = vpop.f32.mrf.mxu0
        %1320 = vmatprep.mubr.bf16.mxu0 0
        %1321 = vmatmul.mubr.bf16.gmra.mxu0 %v1259
        %v1322 = vpop.f32.mrf.mxu0
        %v1323 = vadd.f32 0.0, %v1322
        %v1324 = vpop.f32.mrf.mxu0
        %v1325 = vpop.f32.mrf.mxu0
        %v1326 = vadd.f32 0.0, %v1325
        %v1327 = vpop.f32.mrf.mxu0
        %1328 = vdwg.mxu0
        %v1329 = vadd.f32 %v1232, %v1299
        %v1330 = vadd.f32 %v1233, %v1302
        %v1331 = vadd.f32 %v1234, %v1307
        %v1332 = vadd.f32 %v1235, %v1310
        %v1333 = vadd.f32 %v1236, %v1315
        %v1334 = vadd.f32 %v1237, %v1318
        %v1335 = vadd.f32 %v1238, %v1323
        %v1336 = vadd.f32 %v1239, %v1326
        %v1338 = vrot.slane %v352, 5
        %v1339 = vrot.slane %v1338, 4
        %v1340 = vrot.slane %v353, 5
        %v1341 = vsel %vm716, %v1339, %v1340
        %s1342 = scalar_lea.vmem %s3, 32
        %v1343 = vld [vmem:[%s1342] sm:$0xf]
        %v1344 = vunpack.c.l.b16 %v1341
        %v1345 = vpack.c.b16 %v1344, %v1063
        %v1347 = vsel %vm524, %v1345, 0
        %v1350 = vsel %vm537, %v1343, 0
        %1352 = vmatprep.subr.bf16.mxu0 0
        %1353 = vmatpush1.bf16.msra.mxu0 0
        %1354 = vmatprep.subr.bf16.mxu0 0
        %1355 = vmatpush1.bf16.msra.mxu0 0
        %1356 = vmatprep.subr.bf16.mxu0 0
        %1357 = vmatpush1.bf16.msra.mxu0 0
        %1358 = vmatprep.subr.bf16.mxu0 0
        %1359 = vmatpush1.bf16.msra.mxu0 0
        %1360 = vmatprep.subr.bf16.mxu0 0
        %1361 = vmatpush1.bf16.msra.mxu0 0
        %1362 = vmatprep.subr.bf16.mxu0 0
        %1363 = vmatpush1.bf16.msra.mxu0 0
        %1364 = vmatprep.subr.bf16.mxu0 0
        %1365 = vmatpush1.bf16.msra.mxu0 0
        %1366 = vmatprep.subr.bf16.mxu0 0
        %1367 = vmatpush1.bf16.msra.mxu0 %v1350
        %1368 = vmatprep.subr.bf16.mxu0 0
        %1369 = vmatpush2.bf16.msra.mxu0 0
        %1370 = vmatprep.subr.bf16.mxu0 0
        %1371 = vmatpush2.bf16.msra.mxu0 0
        %1372 = vmatprep.subr.bf16.mxu0 0
        %1373 = vmatpush2.bf16.msra.mxu0 0
        %1374 = vmatprep.subr.bf16.mxu0 0
        %1375 = vmatpush2.bf16.msra.mxu0 0
        %1376 = vmatprep.subr.bf16.mxu0 0
        %1377 = vmatpush2.bf16.msra.mxu0 0
        %1378 = vmatprep.subr.bf16.mxu0 0
        %1379 = vmatpush2.bf16.msra.mxu0 0
        %1380 = vmatprep.subr.bf16.mxu0 0
        %1381 = vmatpush2.bf16.msra.mxu0 0
        %1382 = vmatprep.subr.bf16.mxu0 0
        %1383 = vmatpush2.bf16.msra.mxu0 0
        %1384 = vmatprep.mubr.bf16.mxu0 0
        %1385 = vmatmul.mubr.bf16.gmra.mxu0 %v767
        %v1386 = vpop.f32.mrf.mxu0
        %v1387 = vadd.f32 0.0, %v1386
        %v1388 = vpop.f32.mrf.mxu0
        %v1389 = vpop.f32.mrf.mxu0
        %v1390 = vadd.f32 0.0, %v1389
        %v1391 = vpop.f32.mrf.mxu0
        %1392 = vmatprep.mubr.bf16.mxu0 0
        %1393 = vmatmul.mubr.bf16.gmra.mxu0 %v770
        %v1394 = vpop.f32.mrf.mxu0
        %v1395 = vadd.f32 0.0, %v1394
        %v1396 = vpop.f32.mrf.mxu0
        %v1397 = vpop.f32.mrf.mxu0
        %v1398 = vadd.f32 0.0, %v1397
        %v1399 = vpop.f32.mrf.mxu0
        %1400 = vmatprep.mubr.bf16.mxu0 0
        %1401 = vmatmul.mubr.bf16.gmra.mxu0 %v773
        %v1402 = vpop.f32.mrf.mxu0
        %v1403 = vadd.f32 0.0, %v1402
        %v1404 = vpop.f32.mrf.mxu0
        %v1405 = vpop.f32.mrf.mxu0
        %v1406 = vadd.f32 0.0, %v1405
        %v1407 = vpop.f32.mrf.mxu0
        %1408 = vmatprep.mubr.bf16.mxu0 0
        %1409 = vmatmul.mubr.bf16.gmra.mxu0 %v1347
        %v1410 = vpop.f32.mrf.mxu0
        %v1411 = vadd.f32 0.0, %v1410
        %v1412 = vpop.f32.mrf.mxu0
        %v1413 = vpop.f32.mrf.mxu0
        %v1414 = vadd.f32 0.0, %v1413
        %v1415 = vpop.f32.mrf.mxu0
        %1416 = vdwg.mxu0
        %v1417 = vadd.f32 %v1329, %v1387
        %v1418 = vadd.f32 %v1330, %v1390
        %v1419 = vadd.f32 %v1331, %v1395
        %v1420 = vadd.f32 %v1332, %v1398
        %v1421 = vadd.f32 %v1333, %v1403
        %v1422 = vadd.f32 %v1334, %v1406
        %v1423 = vadd.f32 %v1335, %v1411
        %v1424 = vadd.f32 %v1336, %v1414
        %s1425 = scalar_lea.vmem %s3, 36
        %v1426 = vld [vmem:[%s1425] sm:$0xf]
        %v1435 = vunpack.c.l.b16 %v354
        %v1436 = vunpack.c.l.b16 %v356
        %v1437 = vunpack.c.l.b16 %v358
        %v1438 = vunpack.c.l.b16 %v360
        %v1439 = vunpack.c.l.b16 %v362
        %v1440 = vunpack.c.l.b16 %v364
        %v1441 = vunpack.c.l.b16 %v366
        %v1442 = vunpack.c.l.b16 %v368
        %v1443 = vpack.c.b16 %v1436, %v1435
        %v1444 = vpack.c.b16 %v1438, %v1437
        %v1445 = vpack.c.b16 %v1440, %v1439
        %v1446 = vpack.c.b16 %v1442, %v1441
        %v1448 = vsel %vm524, %v1443, 0
        %v1451 = vsel %vm524, %v1444, 0
        %v1454 = vsel %vm524, %v1445, 0
        %v1457 = vsel %vm524, %v1446, 0
        %v1460 = vsel %vm537, %v1426, 0
        %1462 = vmatprep.subr.bf16.mxu0 0
        %1463 = vmatpush1.bf16.msra.mxu0 0
        %1464 = vmatprep.subr.bf16.mxu0 0
        %1465 = vmatpush1.bf16.msra.mxu0 0
        %1466 = vmatprep.subr.bf16.mxu0 0
        %1467 = vmatpush1.bf16.msra.mxu0 0
        %1468 = vmatprep.subr.bf16.mxu0 0
        %1469 = vmatpush1.bf16.msra.mxu0 0
        %1470 = vmatprep.subr.bf16.mxu0 0
        %1471 = vmatpush1.bf16.msra.mxu0 0
        %1472 = vmatprep.subr.bf16.mxu0 0
        %1473 = vmatpush1.bf16.msra.mxu0 0
        %1474 = vmatprep.subr.bf16.mxu0 0
        %1475 = vmatpush1.bf16.msra.mxu0 0
        %1476 = vmatprep.subr.bf16.mxu0 0
        %1477 = vmatpush1.bf16.msra.mxu0 %v1460
        %1478 = vmatprep.subr.bf16.mxu0 0
        %1479 = vmatpush2.bf16.msra.mxu0 0
        %1480 = vmatprep.subr.bf16.mxu0 0
        %1481 = vmatpush2.bf16.msra.mxu0 0
        %1482 = vmatprep.subr.bf16.mxu0 0
        %1483 = vmatpush2.bf16.msra.mxu0 0
        %1484 = vmatprep.subr.bf16.mxu0 0
        %1485 = vmatpush2.bf16.msra.mxu0 0
        %1486 = vmatprep.subr.bf16.mxu0 0
        %1487 = vmatpush2.bf16.msra.mxu0 0
        %1488 = vmatprep.subr.bf16.mxu0 0
        %1489 = vmatpush2.bf16.msra.mxu0 0
        %1490 = vmatprep.subr.bf16.mxu0 0
        %1491 = vmatpush2.bf16.msra.mxu0 0
        %1492 = vmatprep.subr.bf16.mxu0 0
        %1493 = vmatpush2.bf16.msra.mxu0 0
        %1494 = vmatprep.mubr.bf16.mxu0 0
        %1495 = vmatmul.mubr.bf16.gmra.mxu0 %v1448
        %v1496 = vpop.f32.mrf.mxu0
        %v1497 = vadd.f32 0.0, %v1496
        %v1498 = vpop.f32.mrf.mxu0
        %v1499 = vpop.f32.mrf.mxu0
        %v1500 = vadd.f32 0.0, %v1499
        %v1501 = vpop.f32.mrf.mxu0
        %1502 = vmatprep.mubr.bf16.mxu0 0
        %1503 = vmatmul.mubr.bf16.gmra.mxu0 %v1451
        %v1504 = vpop.f32.mrf.mxu0
        %v1505 = vadd.f32 0.0, %v1504
        %v1506 = vpop.f32.mrf.mxu0
        %v1507 = vpop.f32.mrf.mxu0
        %v1508 = vadd.f32 0.0, %v1507
        %v1509 = vpop.f32.mrf.mxu0
        %1510 = vmatprep.mubr.bf16.mxu0 0
        %1511 = vmatmul.mubr.bf16.gmra.mxu0 %v1454
        %v1512 = vpop.f32.mrf.mxu0
        %v1513 = vadd.f32 0.0, %v1512
        %v1514 = vpop.f32.mrf.mxu0
        %v1515 = vpop.f32.mrf.mxu0
        %v1516 = vadd.f32 0.0, %v1515
        %v1517 = vpop.f32.mrf.mxu0
        %1518 = vmatprep.mubr.bf16.mxu0 0
        %1519 = vmatmul.mubr.bf16.gmra.mxu0 %v1457
        %v1520 = vpop.f32.mrf.mxu0
        %v1521 = vadd.f32 0.0, %v1520
        %v1522 = vpop.f32.mrf.mxu0
        %v1523 = vpop.f32.mrf.mxu0
        %v1524 = vadd.f32 0.0, %v1523
        %v1525 = vpop.f32.mrf.mxu0
        %1526 = vdwg.mxu0
        %v1527 = vadd.f32 %v1417, %v1497
        %v1528 = vadd.f32 %v1418, %v1500
        %v1529 = vadd.f32 %v1419, %v1505
        %v1530 = vadd.f32 %v1420, %v1508
        %v1531 = vadd.f32 %v1421, %v1513
        %v1532 = vadd.f32 %v1422, %v1516
        %v1533 = vadd.f32 %v1423, %v1521
        %v1534 = vadd.f32 %v1424, %v1524
        %v1536 = vshrl.u32 %v354, 16
        %v1538 = vrot.slane %v1536, 4
        %v1539 = vshll.u32 %v354, 16
        %v1541 = vrot.slane %v1539, 5
        %v1542 = vor.u32 %v1538, %v1541
        %v1543 = vrot.slane %v1542, 4
        %v1545 = vshll.u32 %v355, 16
        %v1547 = vrot.slane %v1545, 5
        %v1548 = vsel %vm397, %v1543, %v1547
        %v1550 = vshrl.u32 %v356, 16
        %v1552 = vrot.slane %v1550, 4
        %v1553 = vshll.u32 %v356, 16
        %v1555 = vrot.slane %v1553, 5
        %v1556 = vor.u32 %v1552, %v1555
        %v1557 = vrot.slane %v1556, 4
        %v1559 = vshll.u32 %v357, 16
        %v1561 = vrot.slane %v1559, 5
        %v1562 = vsel %vm397, %v1557, %v1561
        %v1564 = vshrl.u32 %v358, 16
        %v1566 = vrot.slane %v1564, 4
        %v1567 = vshll.u32 %v358, 16
        %v1569 = vrot.slane %v1567, 5
        %v1570 = vor.u32 %v1566, %v1569
        %v1571 = vrot.slane %v1570, 4
        %v1573 = vshll.u32 %v359, 16
        %v1575 = vrot.slane %v1573, 5
        %v1576 = vsel %vm397, %v1571, %v1575
        %v1578 = vshrl.u32 %v360, 16
        %v1580 = vrot.slane %v1578, 4
        %v1581 = vshll.u32 %v360, 16
        %v1583 = vrot.slane %v1581, 5
        %v1584 = vor.u32 %v1580, %v1583
        %v1585 = vrot.slane %v1584, 4
        %v1587 = vshll.u32 %v361, 16
        %v1589 = vrot.slane %v1587, 5
        %v1590 = vsel %vm397, %v1585, %v1589
        %v1592 = vshrl.u32 %v362, 16
        %v1594 = vrot.slane %v1592, 4
        %v1595 = vshll.u32 %v362, 16
        %v1597 = vrot.slane %v1595, 5
        %v1598 = vor.u32 %v1594, %v1597
        %v1599 = vrot.slane %v1598, 4
        %v1601 = vshll.u32 %v363, 16
        %v1603 = vrot.slane %v1601, 5
        %v1604 = vsel %vm397, %v1599, %v1603
        %v1606 = vshrl.u32 %v364, 16
        %v1608 = vrot.slane %v1606, 4
        %v1609 = vshll.u32 %v364, 16
        %v1611 = vrot.slane %v1609, 5
        %v1612 = vor.u32 %v1608, %v1611
        %v1613 = vrot.slane %v1612, 4
        %v1615 = vshll.u32 %v365, 16
        %v1617 = vrot.slane %v1615, 5
        %v1618 = vsel %vm397, %v1613, %v1617
        %v1620 = vshrl.u32 %v366, 16
        %v1622 = vrot.slane %v1620, 4
        %v1623 = vshll.u32 %v366, 16
        %v1625 = vrot.slane %v1623, 5
        %v1626 = vor.u32 %v1622, %v1625
        %v1627 = vrot.slane %v1626, 4
        %v1629 = vshll.u32 %v367, 16
        %v1631 = vrot.slane %v1629, 5
        %v1632 = vsel %vm397, %v1627, %v1631
        %v1634 = vshrl.u32 %v368, 16
        %v1636 = vrot.slane %v1634, 4
        %v1637 = vshll.u32 %v368, 16
        %v1639 = vrot.slane %v1637, 5
        %v1640 = vor.u32 %v1636, %v1639
        %v1641 = vrot.slane %v1640, 4
        %v1643 = vshll.u32 %v369, 16
        %v1645 = vrot.slane %v1643, 5
        %v1646 = vsel %vm397, %v1641, %v1645
        %s1647 = scalar_lea.vmem %s3, 40
        %v1648 = vld [vmem:[%s1647] sm:$0xf]
        %v1649 = vunpack.c.l.b16 %v1548
        %v1650 = vunpack.c.l.b16 %v1562
        %v1651 = vunpack.c.l.b16 %v1576
        %v1652 = vunpack.c.l.b16 %v1590
        %v1653 = vunpack.c.l.b16 %v1604
        %v1654 = vunpack.c.l.b16 %v1618
        %v1655 = vunpack.c.l.b16 %v1632
        %v1656 = vunpack.c.l.b16 %v1646
        %v1657 = vpack.c.b16 %v1650, %v1649
        %v1658 = vpack.c.b16 %v1652, %v1651
        %v1659 = vpack.c.b16 %v1654, %v1653
        %v1660 = vpack.c.b16 %v1656, %v1655
        %v1662 = vsel %vm524, %v1657, 0
        %v1665 = vsel %vm524, %v1658, 0
        %v1668 = vsel %vm524, %v1659, 0
        %v1671 = vsel %vm524, %v1660, 0
        %v1674 = vsel %vm537, %v1648, 0
        %1676 = vmatprep.subr.bf16.mxu0 0
        %1677 = vmatpush1.bf16.msra.mxu0 0
        %1678 = vmatprep.subr.bf16.mxu0 0
        %1679 = vmatpush1.bf16.msra.mxu0 0
        %1680 = vmatprep.subr.bf16.mxu0 0
        %1681 = vmatpush1.bf16.msra.mxu0 0
        %1682 = vmatprep.subr.bf16.mxu0 0
        %1683 = vmatpush1.bf16.msra.mxu0 0
        %1684 = vmatprep.subr.bf16.mxu0 0
        %1685 = vmatpush1.bf16.msra.mxu0 0
        %1686 = vmatprep.subr.bf16.mxu0 0
        %1687 = vmatpush1.bf16.msra.mxu0 0
        %1688 = vmatprep.subr.bf16.mxu0 0
        %1689 = vmatpush1.bf16.msra.mxu0 0
        %1690 = vmatprep.subr.bf16.mxu0 0
        %1691 = vmatpush1.bf16.msra.mxu0 %v1674
        %1692 = vmatprep.subr.bf16.mxu0 0
        %1693 = vmatpush2.bf16.msra.mxu0 0
        %1694 = vmatprep.subr.bf16.mxu0 0
        %1695 = vmatpush2.bf16.msra.mxu0 0
        %1696 = vmatprep.subr.bf16.mxu0 0
        %1697 = vmatpush2.bf16.msra.mxu0 0
        %1698 = vmatprep.subr.bf16.mxu0 0
        %1699 = vmatpush2.bf16.msra.mxu0 0
        %1700 = vmatprep.subr.bf16.mxu0 0
        %1701 = vmatpush2.bf16.msra.mxu0 0
        %1702 = vmatprep.subr.bf16.mxu0 0
        %1703 = vmatpush2.bf16.msra.mxu0 0
        %1704 = vmatprep.subr.bf16.mxu0 0
        %1705 = vmatpush2.bf16.msra.mxu0 0
        %1706 = vmatprep.subr.bf16.mxu0 0
        %1707 = vmatpush2.bf16.msra.mxu0 0
        %1708 = vmatprep.mubr.bf16.mxu0 0
        %1709 = vmatmul.mubr.bf16.gmra.mxu0 %v1662
        %v1710 = vpop.f32.mrf.mxu0
        %v1711 = vadd.f32 0.0, %v1710
        %v1712 = vpop.f32.mrf.mxu0
        %v1713 = vpop.f32.mrf.mxu0
        %v1714 = vadd.f32 0.0, %v1713
        %v1715 = vpop.f32.mrf.mxu0
        %1716 = vmatprep.mubr.bf16.mxu0 0
        %1717 = vmatmul.mubr.bf16.gmra.mxu0 %v1665
        %v1718 = vpop.f32.mrf.mxu0
        %v1719 = vadd.f32 0.0, %v1718
        %v1720 = vpop.f32.mrf.mxu0
        %v1721 = vpop.f32.mrf.mxu0
        %v1722 = vadd.f32 0.0, %v1721
        %v1723 = vpop.f32.mrf.mxu0
        %1724 = vmatprep.mubr.bf16.mxu0 0
        %1725 = vmatmul.mubr.bf16.gmra.mxu0 %v1668
        %v1726 = vpop.f32.mrf.mxu0
        %v1727 = vadd.f32 0.0, %v1726
        %v1728 = vpop.f32.mrf.mxu0
        %v1729 = vpop.f32.mrf.mxu0
        %v1730 = vadd.f32 0.0, %v1729
        %v1731 = vpop.f32.mrf.mxu0
        %1732 = vmatprep.mubr.bf16.mxu0 0
        %1733 = vmatmul.mubr.bf16.gmra.mxu0 %v1671
        %v1734 = vpop.f32.mrf.mxu0
        %v1735 = vadd.f32 0.0, %v1734
        %v1736 = vpop.f32.mrf.mxu0
        %v1737 = vpop.f32.mrf.mxu0
        %v1738 = vadd.f32 0.0, %v1737
        %v1739 = vpop.f32.mrf.mxu0
        %1740 = vdwg.mxu0
        %v1741 = vadd.f32 %v1527, %v1711
        %v1742 = vadd.f32 %v1528, %v1714
        %v1743 = vadd.f32 %v1529, %v1719
        %v1744 = vadd.f32 %v1530, %v1722
        %v1745 = vadd.f32 %v1531, %v1727
        %v1746 = vadd.f32 %v1532, %v1730
        %v1747 = vadd.f32 %v1533, %v1735
        %v1748 = vadd.f32 %v1534, %v1738
        %v1757 = vrot.slane %v354, 5
        %v1758 = vrot.slane %v1757, 4
        %v1759 = vrot.slane %v355, 5
        %v1760 = vsel %vm716, %v1758, %v1759
        %v1761 = vrot.slane %v356, 5
        %v1762 = vrot.slane %v1761, 4
        %v1763 = vrot.slane %v357, 5
        %v1764 = vsel %vm716, %v1762, %v1763
        %v1765 = vrot.slane %v358, 5
        %v1766 = vrot.slane %v1765, 4
        %v1767 = vrot.slane %v359, 5
        %v1768 = vsel %vm716, %v1766, %v1767
        %v1769 = vrot.slane %v360, 5
        %v1770 = vrot.slane %v1769, 4
        %v1771 = vrot.slane %v361, 5
        %v1772 = vsel %vm716, %v1770, %v1771
        %v1773 = vrot.slane %v362, 5
        %v1774 = vrot.slane %v1773, 4
        %v1775 = vrot.slane %v363, 5
        %v1776 = vsel %vm716, %v1774, %v1775
        %v1777 = vrot.slane %v364, 5
        %v1778 = vrot.slane %v1777, 4
        %v1779 = vrot.slane %v365, 5
        %v1780 = vsel %vm716, %v1778, %v1779
        %v1781 = vrot.slane %v366, 5
        %v1782 = vrot.slane %v1781, 4
        %v1783 = vrot.slane %v367, 5
        %v1784 = vsel %vm716, %v1782, %v1783
        %v1785 = vrot.slane %v368, 5
        %v1786 = vrot.slane %v1785, 4
        %v1787 = vrot.slane %v369, 5
        %v1788 = vsel %vm716, %v1786, %v1787
        %s1789 = scalar_lea.vmem %s3, 44
        %v1790 = vld [vmem:[%s1789] sm:$0xf]
        %v1791 = vunpack.c.l.b16 %v1760
        %v1792 = vunpack.c.l.b16 %v1764
        %v1793 = vunpack.c.l.b16 %v1768
        %v1794 = vunpack.c.l.b16 %v1772
        %v1795 = vunpack.c.l.b16 %v1776
        %v1796 = vunpack.c.l.b16 %v1780
        %v1797 = vunpack.c.l.b16 %v1784
        %v1798 = vunpack.c.l.b16 %v1788
        %v1799 = vpack.c.b16 %v1792, %v1791
        %v1800 = vpack.c.b16 %v1794, %v1793
        %v1801 = vpack.c.b16 %v1796, %v1795
        %v1802 = vpack.c.b16 %v1798, %v1797
        %v1804 = vsel %vm524, %v1799, 0
        %v1807 = vsel %vm524, %v1800, 0
        %v1810 = vsel %vm524, %v1801, 0
        %v1813 = vsel %vm524, %v1802, 0
        %v1816 = vsel %vm537, %v1790, 0
        %1818 = vmatprep.subr.bf16.mxu0 0
        %1819 = vmatpush1.bf16.msra.mxu0 0
        %1820 = vmatprep.subr.bf16.mxu0 0
        %1821 = vmatpush1.bf16.msra.mxu0 0
        %1822 = vmatprep.subr.bf16.mxu0 0
        %1823 = vmatpush1.bf16.msra.mxu0 0
        %1824 = vmatprep.subr.bf16.mxu0 0
        %1825 = vmatpush1.bf16.msra.mxu0 0
        %1826 = vmatprep.subr.bf16.mxu0 0
        %1827 = vmatpush1.bf16.msra.mxu0 0
        %1828 = vmatprep.subr.bf16.mxu0 0
        %1829 = vmatpush1.bf16.msra.mxu0 0
        %1830 = vmatprep.subr.bf16.mxu0 0
        %1831 = vmatpush1.bf16.msra.mxu0 0
        %1832 = vmatprep.subr.bf16.mxu0 0
        %1833 = vmatpush1.bf16.msra.mxu0 %v1816
        %1834 = vmatprep.subr.bf16.mxu0 0
        %1835 = vmatpush2.bf16.msra.mxu0 0
        %1836 = vmatprep.subr.bf16.mxu0 0
        %1837 = vmatpush2.bf16.msra.mxu0 0
        %1838 = vmatprep.subr.bf16.mxu0 0
        %1839 = vmatpush2.bf16.msra.mxu0 0
        %1840 = vmatprep.subr.bf16.mxu0 0
        %1841 = vmatpush2.bf16.msra.mxu0 0
        %1842 = vmatprep.subr.bf16.mxu0 0
        %1843 = vmatpush2.bf16.msra.mxu0 0
        %1844 = vmatprep.subr.bf16.mxu0 0
        %1845 = vmatpush2.bf16.msra.mxu0 0
        %1846 = vmatprep.subr.bf16.mxu0 0
        %1847 = vmatpush2.bf16.msra.mxu0 0
        %1848 = vmatprep.subr.bf16.mxu0 0
        %1849 = vmatpush2.bf16.msra.mxu0 0
        %1850 = vmatprep.mubr.bf16.mxu0 0
        %1851 = vmatmul.mubr.bf16.gmra.mxu0 %v1804
        %v1852 = vpop.f32.mrf.mxu0
        %v1853 = vadd.f32 0.0, %v1852
        %v1854 = vpop.f32.mrf.mxu0
        %v1855 = vpop.f32.mrf.mxu0
        %v1856 = vadd.f32 0.0, %v1855
        %v1857 = vpop.f32.mrf.mxu0
        %1858 = vmatprep.mubr.bf16.mxu0 0
        %1859 = vmatmul.mubr.bf16.gmra.mxu0 %v1807
        %v1860 = vpop.f32.mrf.mxu0
        %v1861 = vadd.f32 0.0, %v1860
        %v1862 = vpop.f32.mrf.mxu0
        %v1863 = vpop.f32.mrf.mxu0
        %v1864 = vadd.f32 0.0, %v1863
        %v1865 = vpop.f32.mrf.mxu0
        %1866 = vmatprep.mubr.bf16.mxu0 0
        %1867 = vmatmul.mubr.bf16.gmra.mxu0 %v1810
        %v1868 = vpop.f32.mrf.mxu0
        %v1869 = vadd.f32 0.0, %v1868
        %v1870 = vpop.f32.mrf.mxu0
        %v1871 = vpop.f32.mrf.mxu0
        %v1872 = vadd.f32 0.0, %v1871
        %v1873 = vpop.f32.mrf.mxu0
        %1874 = vmatprep.mubr.bf16.mxu0 0
        %1875 = vmatmul.mubr.bf16.gmra.mxu0 %v1813
        %v1876 = vpop.f32.mrf.mxu0
        %v1877 = vadd.f32 0.0, %v1876
        %v1878 = vpop.f32.mrf.mxu0
        %v1879 = vpop.f32.mrf.mxu0
        %v1880 = vadd.f32 0.0, %v1879
        %v1881 = vpop.f32.mrf.mxu0
        %1882 = vdwg.mxu0
        %v1883 = vadd.f32 %v1741, %v1853
        %v1884 = vadd.f32 %v1742, %v1856
        %v1885 = vadd.f32 %v1743, %v1861
        %v1886 = vadd.f32 %v1744, %v1864
        %v1887 = vadd.f32 %v1745, %v1869
        %v1888 = vadd.f32 %v1746, %v1872
        %v1889 = vadd.f32 %v1747, %v1877
        %v1890 = vadd.f32 %v1748, %v1880
        %s1891 = scalar_lea.vmem %s3, 48
        %v1892 = vld [vmem:[%s1891] sm:$0xf]
        %v1894 = vunpack.c.l.b16 %v370
        %v1895 = vpack.c.b16 %v1437, %v1436
        %v1896 = vpack.c.b16 %v1439, %v1438
        %v1897 = vpack.c.b16 %v1441, %v1440
        %v1898 = vpack.c.b16 %v1894, %v1442
        %v1900 = vsel %vm524, %v1895, 0
        %v1903 = vsel %vm524, %v1896, 0
        %v1906 = vsel %vm524, %v1897, 0
        %v1909 = vsel %vm524, %v1898, 0
        %v1912 = vsel %vm537, %v1892, 0
        %1914 = vmatprep.subr.bf16.mxu0 0
        %1915 = vmatpush1.bf16.msra.mxu0 0
        %1916 = vmatprep.subr.bf16.mxu0 0
        %1917 = vmatpush1.bf16.msra.mxu0 0
        %1918 = vmatprep.subr.bf16.mxu0 0
        %1919 = vmatpush1.bf16.msra.mxu0 0
        %1920 = vmatprep.subr.bf16.mxu0 0
        %1921 = vmatpush1.bf16.msra.mxu0 0
        %1922 = vmatprep.subr.bf16.mxu0 0
        %1923 = vmatpush1.bf16.msra.mxu0 0
        %1924 = vmatprep.subr.bf16.mxu0 0
        %1925 = vmatpush1.bf16.msra.mxu0 0
        %1926 = vmatprep.subr.bf16.mxu0 0
        %1927 = vmatpush1.bf16.msra.mxu0 0
        %1928 = vmatprep.subr.bf16.mxu0 0
        %1929 = vmatpush1.bf16.msra.mxu0 %v1912
        %1930 = vmatprep.subr.bf16.mxu0 0
        %1931 = vmatpush2.bf16.msra.mxu0 0
        %1932 = vmatprep.subr.bf16.mxu0 0
        %1933 = vmatpush2.bf16.msra.mxu0 0
        %1934 = vmatprep.subr.bf16.mxu0 0
        %1935 = vmatpush2.bf16.msra.mxu0 0
        %1936 = vmatprep.subr.bf16.mxu0 0
        %1937 = vmatpush2.bf16.msra.mxu0 0
        %1938 = vmatprep.subr.bf16.mxu0 0
        %1939 = vmatpush2.bf16.msra.mxu0 0
        %1940 = vmatprep.subr.bf16.mxu0 0
        %1941 = vmatpush2.bf16.msra.mxu0 0
        %1942 = vmatprep.subr.bf16.mxu0 0
        %1943 = vmatpush2.bf16.msra.mxu0 0
        %1944 = vmatprep.subr.bf16.mxu0 0
        %1945 = vmatpush2.bf16.msra.mxu0 0
        %1946 = vmatprep.mubr.bf16.mxu0 0
        %1947 = vmatmul.mubr.bf16.gmra.mxu0 %v1900
        %v1948 = vpop.f32.mrf.mxu0
        %v1949 = vadd.f32 0.0, %v1948
        %v1950 = vpop.f32.mrf.mxu0
        %v1951 = vpop.f32.mrf.mxu0
        %v1952 = vadd.f32 0.0, %v1951
        %v1953 = vpop.f32.mrf.mxu0
        %1954 = vmatprep.mubr.bf16.mxu0 0
        %1955 = vmatmul.mubr.bf16.gmra.mxu0 %v1903
        %v1956 = vpop.f32.mrf.mxu0
        %v1957 = vadd.f32 0.0, %v1956
        %v1958 = vpop.f32.mrf.mxu0
        %v1959 = vpop.f32.mrf.mxu0
        %v1960 = vadd.f32 0.0, %v1959
        %v1961 = vpop.f32.mrf.mxu0
        %1962 = vmatprep.mubr.bf16.mxu0 0
        %1963 = vmatmul.mubr.bf16.gmra.mxu0 %v1906
        %v1964 = vpop.f32.mrf.mxu0
        %v1965 = vadd.f32 0.0, %v1964
        %v1966 = vpop.f32.mrf.mxu0
        %v1967 = vpop.f32.mrf.mxu0
        %v1968 = vadd.f32 0.0, %v1967
        %v1969 = vpop.f32.mrf.mxu0
        %1970 = vmatprep.mubr.bf16.mxu0 0
        %1971 = vmatmul.mubr.bf16.gmra.mxu0 %v1909
        %v1972 = vpop.f32.mrf.mxu0
        %v1973 = vadd.f32 0.0, %v1972
        %v1974 = vpop.f32.mrf.mxu0
        %v1975 = vpop.f32.mrf.mxu0
        %v1976 = vadd.f32 0.0, %v1975
        %v1977 = vpop.f32.mrf.mxu0
        %1978 = vdwg.mxu0
        %v1979 = vadd.f32 %v1883, %v1949
        %v1980 = vadd.f32 %v1884, %v1952
        %v1981 = vadd.f32 %v1885, %v1957
        %v1982 = vadd.f32 %v1886, %v1960
        %v1983 = vadd.f32 %v1887, %v1965
        %v1984 = vadd.f32 %v1888, %v1968
        %v1985 = vadd.f32 %v1889, %v1973
        %v1986 = vadd.f32 %v1890, %v1976
        %v1988 = vshrl.u32 %v370, 16
        %v1990 = vrot.slane %v1988, 4
        %v1991 = vshll.u32 %v370, 16
        %v1993 = vrot.slane %v1991, 5
        %v1994 = vor.u32 %v1990, %v1993
        %v1995 = vrot.slane %v1994, 4
        %v1997 = vshll.u32 %v371, 16
        %v1999 = vrot.slane %v1997, 5
        %v2000 = vsel %vm397, %v1995, %v1999
        %s2001 = scalar_lea.vmem %s3, 52
        %v2002 = vld [vmem:[%s2001] sm:$0xf]
        %v2003 = vunpack.c.l.b16 %v2000
        %v2004 = vpack.c.b16 %v1651, %v1650
        %v2005 = vpack.c.b16 %v1653, %v1652
        %v2006 = vpack.c.b16 %v1655, %v1654
        %v2007 = vpack.c.b16 %v2003, %v1656
        %v2009 = vsel %vm524, %v2004, 0
        %v2012 = vsel %vm524, %v2005, 0
        %v2015 = vsel %vm524, %v2006, 0
        %v2018 = vsel %vm524, %v2007, 0
        %v2021 = vsel %vm537, %v2002, 0
        %2023 = vmatprep.subr.bf16.mxu0 0
        %2024 = vmatpush1.bf16.msra.mxu0 0
        %2025 = vmatprep.subr.bf16.mxu0 0
        %2026 = vmatpush1.bf16.msra.mxu0 0
        %2027 = vmatprep.subr.bf16.mxu0 0
        %2028 = vmatpush1.bf16.msra.mxu0 0
        %2029 = vmatprep.subr.bf16.mxu0 0
        %2030 = vmatpush1.bf16.msra.mxu0 0
        %2031 = vmatprep.subr.bf16.mxu0 0
        %2032 = vmatpush1.bf16.msra.mxu0 0
        %2033 = vmatprep.subr.bf16.mxu0 0
        %2034 = vmatpush1.bf16.msra.mxu0 0
        %2035 = vmatprep.subr.bf16.mxu0 0
        %2036 = vmatpush1.bf16.msra.mxu0 0
        %2037 = vmatprep.subr.bf16.mxu0 0
        %2038 = vmatpush1.bf16.msra.mxu0 %v2021
        %2039 = vmatprep.subr.bf16.mxu0 0
        %2040 = vmatpush2.bf16.msra.mxu0 0
        %2041 = vmatprep.subr.bf16.mxu0 0
        %2042 = vmatpush2.bf16.msra.mxu0 0
        %2043 = vmatprep.subr.bf16.mxu0 0
        %2044 = vmatpush2.bf16.msra.mxu0 0
        %2045 = vmatprep.subr.bf16.mxu0 0
        %2046 = vmatpush2.bf16.msra.mxu0 0
        %2047 = vmatprep.subr.bf16.mxu0 0
        %2048 = vmatpush2.bf16.msra.mxu0 0
        %2049 = vmatprep.subr.bf16.mxu0 0
        %2050 = vmatpush2.bf16.msra.mxu0 0
        %2051 = vmatprep.subr.bf16.mxu0 0
        %2052 = vmatpush2.bf16.msra.mxu0 0
        %2053 = vmatprep.subr.bf16.mxu0 0
        %2054 = vmatpush2.bf16.msra.mxu0 0
        %2055 = vmatprep.mubr.bf16.mxu0 0
        %2056 = vmatmul.mubr.bf16.gmra.mxu0 %v2009
        %v2057 = vpop.f32.mrf.mxu0
        %v2058 = vadd.f32 0.0, %v2057
        %v2059 = vpop.f32.mrf.mxu0
        %v2060 = vpop.f32.mrf.mxu0
        %v2061 = vadd.f32 0.0, %v2060
        %v2062 = vpop.f32.mrf.mxu0
        %2063 = vmatprep.mubr.bf16.mxu0 0
        %2064 = vmatmul.mubr.bf16.gmra.mxu0 %v2012
        %v2065 = vpop.f32.mrf.mxu0
        %v2066 = vadd.f32 0.0, %v2065
        %v2067 = vpop.f32.mrf.mxu0
        %v2068 = vpop.f32.mrf.mxu0
        %v2069 = vadd.f32 0.0, %v2068
        %v2070 = vpop.f32.mrf.mxu0
        %2071 = vmatprep.mubr.bf16.mxu0 0
        %2072 = vmatmul.mubr.bf16.gmra.mxu0 %v2015
        %v2073 = vpop.f32.mrf.mxu0
        %v2074 = vadd.f32 0.0, %v2073
        %v2075 = vpop.f32.mrf.mxu0
        %v2076 = vpop.f32.mrf.mxu0
        %v2077 = vadd.f32 0.0, %v2076
        %v2078 = vpop.f32.mrf.mxu0
        %2079 = vmatprep.mubr.bf16.mxu0 0
        %2080 = vmatmul.mubr.bf16.gmra.mxu0 %v2018
        %v2081 = vpop.f32.mrf.mxu0
        %v2082 = vadd.f32 0.0, %v2081
        %v2083 = vpop.f32.mrf.mxu0
        %v2084 = vpop.f32.mrf.mxu0
        %v2085 = vadd.f32 0.0, %v2084
        %v2086 = vpop.f32.mrf.mxu0
        %2087 = vdwg.mxu0
        %v2088 = vadd.f32 %v1979, %v2058
        %v2089 = vadd.f32 %v1980, %v2061
        %v2090 = vadd.f32 %v1981, %v2066
        %v2091 = vadd.f32 %v1982, %v2069
        %v2092 = vadd.f32 %v1983, %v2074
        %v2093 = vadd.f32 %v1984, %v2077
        %v2094 = vadd.f32 %v1985, %v2082
        %v2095 = vadd.f32 %v1986, %v2085
        %v2097 = vrot.slane %v370, 5
        %v2098 = vrot.slane %v2097, 4
        %v2099 = vrot.slane %v371, 5
        %v2100 = vsel %vm716, %v2098, %v2099
        %s2101 = scalar_lea.vmem %s3, 56
        %v2102 = vld [vmem:[%s2101] sm:$0xf]
        %v2103 = vunpack.c.l.b16 %v2100
        %v2104 = vpack.c.b16 %v1793, %v1792
        %v2105 = vpack.c.b16 %v1795, %v1794
        %v2106 = vpack.c.b16 %v1797, %v1796
        %v2107 = vpack.c.b16 %v2103, %v1798
        %v2109 = vsel %vm524, %v2104, 0
        %v2112 = vsel %vm524, %v2105, 0
        %v2115 = vsel %vm524, %v2106, 0
        %v2118 = vsel %vm524, %v2107, 0
        %v2121 = vsel %vm537, %v2102, 0
        %2123 = vmatprep.subr.bf16.mxu0 0
        %2124 = vmatpush1.bf16.msra.mxu0 0
        %2125 = vmatprep.subr.bf16.mxu0 0
        %2126 = vmatpush1.bf16.msra.mxu0 0
        %2127 = vmatprep.subr.bf16.mxu0 0
        %2128 = vmatpush1.bf16.msra.mxu0 0
        %2129 = vmatprep.subr.bf16.mxu0 0
        %2130 = vmatpush1.bf16.msra.mxu0 0
        %2131 = vmatprep.subr.bf16.mxu0 0
        %2132 = vmatpush1.bf16.msra.mxu0 0
        %2133 = vmatprep.subr.bf16.mxu0 0
        %2134 = vmatpush1.bf16.msra.mxu0 0
        %2135 = vmatprep.subr.bf16.mxu0 0
        %2136 = vmatpush1.bf16.msra.mxu0 0
        %2137 = vmatprep.subr.bf16.mxu0 0
        %2138 = vmatpush1.bf16.msra.mxu0 %v2121
        %2139 = vmatprep.subr.bf16.mxu0 0
        %2140 = vmatpush2.bf16.msra.mxu0 0
        %2141 = vmatprep.subr.bf16.mxu0 0
        %2142 = vmatpush2.bf16.msra.mxu0 0
        %2143 = vmatprep.subr.bf16.mxu0 0
        %2144 = vmatpush2.bf16.msra.mxu0 0
        %2145 = vmatprep.subr.bf16.mxu0 0
        %2146 = vmatpush2.bf16.msra.mxu0 0
        %2147 = vmatprep.subr.bf16.mxu0 0
        %2148 = vmatpush2.bf16.msra.mxu0 0
        %2149 = vmatprep.subr.bf16.mxu0 0
        %2150 = vmatpush2.bf16.msra.mxu0 0
        %2151 = vmatprep.subr.bf16.mxu0 0
        %2152 = vmatpush2.bf16.msra.mxu0 0
        %2153 = vmatprep.subr.bf16.mxu0 0
        %2154 = vmatpush2.bf16.msra.mxu0 0
        %2155 = vmatprep.mubr.bf16.mxu0 0
        %2156 = vmatmul.mubr.bf16.gmra.mxu0 %v2109
        %v2157 = vpop.f32.mrf.mxu0
        %v2158 = vadd.f32 0.0, %v2157
        %v2159 = vpop.f32.mrf.mxu0
        %v2160 = vpop.f32.mrf.mxu0
        %v2161 = vadd.f32 0.0, %v2160
        %v2162 = vpop.f32.mrf.mxu0
        %2163 = vmatprep.mubr.bf16.mxu0 0
        %2164 = vmatmul.mubr.bf16.gmra.mxu0 %v2112
        %v2165 = vpop.f32.mrf.mxu0
        %v2166 = vadd.f32 0.0, %v2165
        %v2167 = vpop.f32.mrf.mxu0
        %v2168 = vpop.f32.mrf.mxu0
        %v2169 = vadd.f32 0.0, %v2168
        %v2170 = vpop.f32.mrf.mxu0
        %2171 = vmatprep.mubr.bf16.mxu0 0
        %2172 = vmatmul.mubr.bf16.gmra.mxu0 %v2115
        %v2173 = vpop.f32.mrf.mxu0
        %v2174 = vadd.f32 0.0, %v2173
        %v2175 = vpop.f32.mrf.mxu0
        %v2176 = vpop.f32.mrf.mxu0
        %v2177 = vadd.f32 0.0, %v2176
        %v2178 = vpop.f32.mrf.mxu0
        %2179 = vmatprep.mubr.bf16.mxu0 0
        %2180 = vmatmul.mubr.bf16.gmra.mxu0 %v2118
        %v2181 = vpop.f32.mrf.mxu0
        %v2182 = vadd.f32 0.0, %v2181
        %v2183 = vpop.f32.mrf.mxu0
        %v2184 = vpop.f32.mrf.mxu0
        %v2185 = vadd.f32 0.0, %v2184
        %v2186 = vpop.f32.mrf.mxu0
        %2187 = vdwg.mxu0
        %v2188 = vadd.f32 %v2088, %v2158
        %v2189 = vadd.f32 %v2089, %v2161
        %v2190 = vadd.f32 %v2090, %v2166
        %v2191 = vadd.f32 %v2091, %v2169
        %v2192 = vadd.f32 %v2092, %v2174
        %v2193 = vadd.f32 %v2093, %v2177
        %v2194 = vadd.f32 %v2094, %v2182
        %v2195 = vadd.f32 %v2095, %v2185
        %s2196 = scalar_lea.vmem %s3, 60
        %v2197 = vld [vmem:[%s2196] sm:$0xf]
        %v2199 = vunpack.c.l.b16 %v372
        %v2200 = vpack.c.b16 %v2199, %v1894
        %v2202 = vsel %vm524, %v2200, 0
        %v2205 = vsel %vm537, %v2197, 0
        %2207 = vmatprep.subr.bf16.mxu0 0
        %2208 = vmatpush1.bf16.msra.mxu0 0
        %2209 = vmatprep.subr.bf16.mxu0 0
        %2210 = vmatpush1.bf16.msra.mxu0 0
        %2211 = vmatprep.subr.bf16.mxu0 0
        %2212 = vmatpush1.bf16.msra.mxu0 0
        %2213 = vmatprep.subr.bf16.mxu0 0
        %2214 = vmatpush1.bf16.msra.mxu0 0
        %2215 = vmatprep.subr.bf16.mxu0 0
        %2216 = vmatpush1.bf16.msra.mxu0 0
        %2217 = vmatprep.subr.bf16.mxu0 0
        %2218 = vmatpush1.bf16.msra.mxu0 0
        %2219 = vmatprep.subr.bf16.mxu0 0
        %2220 = vmatpush1.bf16.msra.mxu0 0
        %2221 = vmatprep.subr.bf16.mxu0 0
        %2222 = vmatpush1.bf16.msra.mxu0 %v2205
        %2223 = vmatprep.subr.bf16.mxu0 0
        %2224 = vmatpush2.bf16.msra.mxu0 0
        %2225 = vmatprep.subr.bf16.mxu0 0
        %2226 = vmatpush2.bf16.msra.mxu0 0
        %2227 = vmatprep.subr.bf16.mxu0 0
        %2228 = vmatpush2.bf16.msra.mxu0 0
        %2229 = vmatprep.subr.bf16.mxu0 0
        %2230 = vmatpush2.bf16.msra.mxu0 0
        %2231 = vmatprep.subr.bf16.mxu0 0
        %2232 = vmatpush2.bf16.msra.mxu0 0
        %2233 = vmatprep.subr.bf16.mxu0 0
        %2234 = vmatpush2.bf16.msra.mxu0 0
        %2235 = vmatprep.subr.bf16.mxu0 0
        %2236 = vmatpush2.bf16.msra.mxu0 0
        %2237 = vmatprep.subr.bf16.mxu0 0
        %2238 = vmatpush2.bf16.msra.mxu0 0
        %2239 = vmatprep.mubr.bf16.mxu0 0
        %2240 = vmatmul.mubr.bf16.gmra.mxu0 %v1451
        %v2241 = vpop.f32.mrf.mxu0
        %v2242 = vadd.f32 0.0, %v2241
        %v2243 = vpop.f32.mrf.mxu0
        %v2244 = vpop.f32.mrf.mxu0
        %v2245 = vadd.f32 0.0, %v2244
        %v2246 = vpop.f32.mrf.mxu0
        %2247 = vmatprep.mubr.bf16.mxu0 0
        %2248 = vmatmul.mubr.bf16.gmra.mxu0 %v1454
        %v2249 = vpop.f32.mrf.mxu0
        %v2250 = vadd.f32 0.0, %v2249
        %v2251 = vpop.f32.mrf.mxu0
        %v2252 = vpop.f32.mrf.mxu0
        %v2253 = vadd.f32 0.0, %v2252
        %v2254 = vpop.f32.mrf.mxu0
        %2255 = vmatprep.mubr.bf16.mxu0 0
        %2256 = vmatmul.mubr.bf16.gmra.mxu0 %v1457
        %v2257 = vpop.f32.mrf.mxu0
        %v2258 = vadd.f32 0.0, %v2257
        %v2259 = vpop.f32.mrf.mxu0
        %v2260 = vpop.f32.mrf.mxu0
        %v2261 = vadd.f32 0.0, %v2260
        %v2262 = vpop.f32.mrf.mxu0
        %2263 = vmatprep.mubr.bf16.mxu0 0
        %2264 = vmatmul.mubr.bf16.gmra.mxu0 %v2202
        %v2265 = vpop.f32.mrf.mxu0
        %v2266 = vadd.f32 0.0, %v2265
        %v2267 = vpop.f32.mrf.mxu0
        %v2268 = vpop.f32.mrf.mxu0
        %v2269 = vadd.f32 0.0, %v2268
        %v2270 = vpop.f32.mrf.mxu0
        %2271 = vdwg.mxu0
        %v2272 = vadd.f32 %v2188, %v2242
        %v2273 = vadd.f32 %v2189, %v2245
        %v2274 = vadd.f32 %v2190, %v2250
        %v2275 = vadd.f32 %v2191, %v2253
        %v2276 = vadd.f32 %v2192, %v2258
        %v2277 = vadd.f32 %v2193, %v2261
        %v2278 = vadd.f32 %v2194, %v2266
        %v2279 = vadd.f32 %v2195, %v2269
        %v2281 = vshrl.u32 %v372, 16
        %v2283 = vrot.slane %v2281, 4
        %v2284 = vshll.u32 %v372, 16
        %v2286 = vrot.slane %v2284, 5
        %v2287 = vor.u32 %v2283, %v2286
        %v2288 = vrot.slane %v2287, 4
        %v2290 = vshll.u32 %v373, 16
        %v2292 = vrot.slane %v2290, 5
        %v2293 = vsel %vm397, %v2288, %v2292
        %s2294 = scalar_lea.vmem %s3, 64
        %v2295 = vld [vmem:[%s2294] sm:$0xf]
        %v2296 = vunpack.c.l.b16 %v2293
        %v2297 = vpack.c.b16 %v2296, %v2003
        %v2299 = vsel %vm524, %v2297, 0
        %v2302 = vsel %vm537, %v2295, 0
        %2304 = vmatprep.subr.bf16.mxu0 0
        %2305 = vmatpush1.bf16.msra.mxu0 0
        %2306 = vmatprep.subr.bf16.mxu0 0
        %2307 = vmatpush1.bf16.msra.mxu0 0
        %2308 = vmatprep.subr.bf16.mxu0 0
        %2309 = vmatpush1.bf16.msra.mxu0 0
        %2310 = vmatprep.subr.bf16.mxu0 0
        %2311 = vmatpush1.bf16.msra.mxu0 0
        %2312 = vmatprep.subr.bf16.mxu0 0
        %2313 = vmatpush1.bf16.msra.mxu0 0
        %2314 = vmatprep.subr.bf16.mxu0 0
        %2315 = vmatpush1.bf16.msra.mxu0 0
        %2316 = vmatprep.subr.bf16.mxu0 0
        %2317 = vmatpush1.bf16.msra.mxu0 0
        %2318 = vmatprep.subr.bf16.mxu0 0
        %2319 = vmatpush1.bf16.msra.mxu0 %v2302
        %2320 = vmatprep.subr.bf16.mxu0 0
        %2321 = vmatpush2.bf16.msra.mxu0 0
        %2322 = vmatprep.subr.bf16.mxu0 0
        %2323 = vmatpush2.bf16.msra.mxu0 0
        %2324 = vmatprep.subr.bf16.mxu0 0
        %2325 = vmatpush2.bf16.msra.mxu0 0
        %2326 = vmatprep.subr.bf16.mxu0 0
        %2327 = vmatpush2.bf16.msra.mxu0 0
        %2328 = vmatprep.subr.bf16.mxu0 0
        %2329 = vmatpush2.bf16.msra.mxu0 0
        %2330 = vmatprep.subr.bf16.mxu0 0
        %2331 = vmatpush2.bf16.msra.mxu0 0
        %2332 = vmatprep.subr.bf16.mxu0 0
        %2333 = vmatpush2.bf16.msra.mxu0 0
        %2334 = vmatprep.subr.bf16.mxu0 0
        %2335 = vmatpush2.bf16.msra.mxu0 0
        %2336 = vmatprep.mubr.bf16.mxu0 0
        %2337 = vmatmul.mubr.bf16.gmra.mxu0 %v1665
        %v2338 = vpop.f32.mrf.mxu0
        %v2339 = vadd.f32 0.0, %v2338
        %v2340 = vpop.f32.mrf.mxu0
        %v2341 = vpop.f32.mrf.mxu0
        %v2342 = vadd.f32 0.0, %v2341
        %v2343 = vpop.f32.mrf.mxu0
        %2344 = vmatprep.mubr.bf16.mxu0 0
        %2345 = vmatmul.mubr.bf16.gmra.mxu0 %v1668
        %v2346 = vpop.f32.mrf.mxu0
        %v2347 = vadd.f32 0.0, %v2346
        %v2348 = vpop.f32.mrf.mxu0
        %v2349 = vpop.f32.mrf.mxu0
        %v2350 = vadd.f32 0.0, %v2349
        %v2351 = vpop.f32.mrf.mxu0
        %2352 = vmatprep.mubr.bf16.mxu0 0
        %2353 = vmatmul.mubr.bf16.gmra.mxu0 %v1671
        %v2354 = vpop.f32.mrf.mxu0
        %v2355 = vadd.f32 0.0, %v2354
        %v2356 = vpop.f32.mrf.mxu0
        %v2357 = vpop.f32.mrf.mxu0
        %v2358 = vadd.f32 0.0, %v2357
        %v2359 = vpop.f32.mrf.mxu0
        %2360 = vmatprep.mubr.bf16.mxu0 0
        %2361 = vmatmul.mubr.bf16.gmra.mxu0 %v2299
        %v2362 = vpop.f32.mrf.mxu0
        %v2363 = vadd.f32 0.0, %v2362
        %v2364 = vpop.f32.mrf.mxu0
        %v2365 = vpop.f32.mrf.mxu0
        %v2366 = vadd.f32 0.0, %v2365
        %v2367 = vpop.f32.mrf.mxu0
        %2368 = vdwg.mxu0
        %v2369 = vadd.f32 %v2272, %v2339
        %v2370 = vadd.f32 %v2273, %v2342
        %v2371 = vadd.f32 %v2274, %v2347
        %v2372 = vadd.f32 %v2275, %v2350
        %v2373 = vadd.f32 %v2276, %v2355
        %v2374 = vadd.f32 %v2277, %v2358
        %v2375 = vadd.f32 %v2278, %v2363
        %v2376 = vadd.f32 %v2279, %v2366
        %v2378 = vrot.slane %v372, 5
        %v2379 = vrot.slane %v2378, 4
        %v2380 = vrot.slane %v373, 5
        %v2381 = vsel %vm716, %v2379, %v2380
        %s2382 = scalar_lea.vmem %s3, 68
        %v2383 = vld [vmem:[%s2382] sm:$0xf]
        %v2384 = vunpack.c.l.b16 %v2381
        %v2385 = vpack.c.b16 %v2384, %v2103
        %v2387 = vsel %vm524, %v2385, 0
        %v2390 = vsel %vm537, %v2383, 0
        %2392 = vmatprep.subr.bf16.mxu0 0
        %2393 = vmatpush1.bf16.msra.mxu0 0
        %2394 = vmatprep.subr.bf16.mxu0 0
        %2395 = vmatpush1.bf16.msra.mxu0 0
        %2396 = vmatprep.subr.bf16.mxu0 0
        %2397 = vmatpush1.bf16.msra.mxu0 0
        %2398 = vmatprep.subr.bf16.mxu0 0
        %2399 = vmatpush1.bf16.msra.mxu0 0
        %2400 = vmatprep.subr.bf16.mxu0 0
        %2401 = vmatpush1.bf16.msra.mxu0 0
        %2402 = vmatprep.subr.bf16.mxu0 0
        %2403 = vmatpush1.bf16.msra.mxu0 0
        %2404 = vmatprep.subr.bf16.mxu0 0
        %2405 = vmatpush1.bf16.msra.mxu0 0
        %2406 = vmatprep.subr.bf16.mxu0 0
        %2407 = vmatpush1.bf16.msra.mxu0 %v2390
        %2408 = vmatprep.subr.bf16.mxu0 0
        %2409 = vmatpush2.bf16.msra.mxu0 0
        %2410 = vmatprep.subr.bf16.mxu0 0
        %2411 = vmatpush2.bf16.msra.mxu0 0
        %2412 = vmatprep.subr.bf16.mxu0 0
        %2413 = vmatpush2.bf16.msra.mxu0 0
        %2414 = vmatprep.subr.bf16.mxu0 0
        %2415 = vmatpush2.bf16.msra.mxu0 0
        %2416 = vmatprep.subr.bf16.mxu0 0
        %2417 = vmatpush2.bf16.msra.mxu0 0
        %2418 = vmatprep.subr.bf16.mxu0 0
        %2419 = vmatpush2.bf16.msra.mxu0 0
        %2420 = vmatprep.subr.bf16.mxu0 0
        %2421 = vmatpush2.bf16.msra.mxu0 0
        %2422 = vmatprep.subr.bf16.mxu0 0
        %2423 = vmatpush2.bf16.msra.mxu0 0
        %2424 = vmatprep.mubr.bf16.mxu0 0
        %2425 = vmatmul.mubr.bf16.gmra.mxu0 %v1807
        %v2426 = vpop.f32.mrf.mxu0
        %v2427 = vadd.f32 0.0, %v2426
        %v2428 = vpop.f32.mrf.mxu0
        %v2429 = vpop.f32.mrf.mxu0
        %v2430 = vadd.f32 0.0, %v2429
        %v2431 = vpop.f32.mrf.mxu0
        %2432 = vmatprep.mubr.bf16.mxu0 0
        %2433 = vmatmul.mubr.bf16.gmra.mxu0 %v1810
        %v2434 = vpop.f32.mrf.mxu0
        %v2435 = vadd.f32 0.0, %v2434
        %v2436 = vpop.f32.mrf.mxu0
        %v2437 = vpop.f32.mrf.mxu0
        %v2438 = vadd.f32 0.0, %v2437
        %v2439 = vpop.f32.mrf.mxu0
        %2440 = vmatprep.mubr.bf16.mxu0 0
        %2441 = vmatmul.mubr.bf16.gmra.mxu0 %v1813
        %v2442 = vpop.f32.mrf.mxu0
        %v2443 = vadd.f32 0.0, %v2442
        %v2444 = vpop.f32.mrf.mxu0
        %v2445 = vpop.f32.mrf.mxu0
        %v2446 = vadd.f32 0.0, %v2445
        %v2447 = vpop.f32.mrf.mxu0
        %2448 = vmatprep.mubr.bf16.mxu0 0
        %2449 = vmatmul.mubr.bf16.gmra.mxu0 %v2387
        %v2450 = vpop.f32.mrf.mxu0
        %v2451 = vadd.f32 0.0, %v2450
        %v2452 = vpop.f32.mrf.mxu0
        %v2453 = vpop.f32.mrf.mxu0
        %v2454 = vadd.f32 0.0, %v2453
        %v2455 = vpop.f32.mrf.mxu0
        %2456 = vdwg.mxu0
        %v2457 = vadd.f32 %v2369, %v2427
        %v2458 = vadd.f32 %v2370, %v2430
        %v2459 = vadd.f32 %v2371, %v2435
        %v2460 = vadd.f32 %v2372, %v2438
        %v2461 = vadd.f32 %v2373, %v2443
        %v2462 = vadd.f32 %v2374, %v2446
        %v2463 = vadd.f32 %v2375, %v2451
        %v2464 = vadd.f32 %v2376, %v2454
        %s2465 = scalar_lea.vmem %s3, 72
        %v2466 = vld [vmem:[%s2465] sm:$0xf]
        %v2475 = vunpack.c.l.b16 %v374
        %v2476 = vunpack.c.l.b16 %v376
        %v2477 = vunpack.c.l.b16 %v378
        %v2478 = vunpack.c.l.b16 %v380
        %v2479 = vunpack.c.l.b16 %v382
        %v2480 = vunpack.c.l.b16 %v384
        %v2481 = vunpack.c.l.b16 %v386
        %v2482 = vunpack.c.l.b16 %v388
        %v2483 = vpack.c.b16 %v2476, %v2475
        %v2484 = vpack.c.b16 %v2478, %v2477
        %v2485 = vpack.c.b16 %v2480, %v2479
        %v2486 = vpack.c.b16 %v2482, %v2481
        %v2488 = vsel %vm524, %v2483, 0
        %v2491 = vsel %vm524, %v2484, 0
        %v2494 = vsel %vm524, %v2485, 0
        %v2497 = vsel %vm524, %v2486, 0
        %v2500 = vsel %vm537, %v2466, 0
        %2502 = vmatprep.subr.bf16.mxu0 0
        %2503 = vmatpush1.bf16.msra.mxu0 0
        %2504 = vmatprep.subr.bf16.mxu0 0
        %2505 = vmatpush1.bf16.msra.mxu0 0
        %2506 = vmatprep.subr.bf16.mxu0 0
        %2507 = vmatpush1.bf16.msra.mxu0 0
        %2508 = vmatprep.subr.bf16.mxu0 0
        %2509 = vmatpush1.bf16.msra.mxu0 0
        %2510 = vmatprep.subr.bf16.mxu0 0
        %2511 = vmatpush1.bf16.msra.mxu0 0
        %2512 = vmatprep.subr.bf16.mxu0 0
        %2513 = vmatpush1.bf16.msra.mxu0 0
        %2514 = vmatprep.subr.bf16.mxu0 0
        %2515 = vmatpush1.bf16.msra.mxu0 0
        %2516 = vmatprep.subr.bf16.mxu0 0
        %2517 = vmatpush1.bf16.msra.mxu0 %v2500
        %2518 = vmatprep.subr.bf16.mxu0 0
        %2519 = vmatpush2.bf16.msra.mxu0 0
        %2520 = vmatprep.subr.bf16.mxu0 0
        %2521 = vmatpush2.bf16.msra.mxu0 0
        %2522 = vmatprep.subr.bf16.mxu0 0
        %2523 = vmatpush2.bf16.msra.mxu0 0
        %2524 = vmatprep.subr.bf16.mxu0 0
        %2525 = vmatpush2.bf16.msra.mxu0 0
        %2526 = vmatprep.subr.bf16.mxu0 0
        %2527 = vmatpush2.bf16.msra.mxu0 0
        %2528 = vmatprep.subr.bf16.mxu0 0
        %2529 = vmatpush2.bf16.msra.mxu0 0
        %2530 = vmatprep.subr.bf16.mxu0 0
        %2531 = vmatpush2.bf16.msra.mxu0 0
        %2532 = vmatprep.subr.bf16.mxu0 0
        %2533 = vmatpush2.bf16.msra.mxu0 0
        %2534 = vmatprep.mubr.bf16.mxu0 0
        %2535 = vmatmul.mubr.bf16.gmra.mxu0 %v2488
        %v2536 = vpop.f32.mrf.mxu0
        %v2537 = vadd.f32 0.0, %v2536
        %v2538 = vpop.f32.mrf.mxu0
        %v2539 = vpop.f32.mrf.mxu0
        %v2540 = vadd.f32 0.0, %v2539
        %v2541 = vpop.f32.mrf.mxu0
        %2542 = vmatprep.mubr.bf16.mxu0 0
        %2543 = vmatmul.mubr.bf16.gmra.mxu0 %v2491
        %v2544 = vpop.f32.mrf.mxu0
        %v2545 = vadd.f32 0.0, %v2544
        %v2546 = vpop.f32.mrf.mxu0
        %v2547 = vpop.f32.mrf.mxu0
        %v2548 = vadd.f32 0.0, %v2547
        %v2549 = vpop.f32.mrf.mxu0
        %2550 = vmatprep.mubr.bf16.mxu0 0
        %2551 = vmatmul.mubr.bf16.gmra.mxu0 %v2494
        %v2552 = vpop.f32.mrf.mxu0
        %v2553 = vadd.f32 0.0, %v2552
        %v2554 = vpop.f32.mrf.mxu0
        %v2555 = vpop.f32.mrf.mxu0
        %v2556 = vadd.f32 0.0, %v2555
        %v2557 = vpop.f32.mrf.mxu0
        %2558 = vmatprep.mubr.bf16.mxu0 0
        %2559 = vmatmul.mubr.bf16.gmra.mxu0 %v2497
        %v2560 = vpop.f32.mrf.mxu0
        %v2561 = vadd.f32 0.0, %v2560
        %v2562 = vpop.f32.mrf.mxu0
        %v2563 = vpop.f32.mrf.mxu0
        %v2564 = vadd.f32 0.0, %v2563
        %v2565 = vpop.f32.mrf.mxu0
        %2566 = vdwg.mxu0
        %v2567 = vadd.f32 %v2457, %v2537
        %v2568 = vadd.f32 %v2458, %v2540
        %v2569 = vadd.f32 %v2459, %v2545
        %v2570 = vadd.f32 %v2460, %v2548
        %v2571 = vadd.f32 %v2461, %v2553
        %v2572 = vadd.f32 %v2462, %v2556
        %v2573 = vadd.f32 %v2463, %v2561
        %v2574 = vadd.f32 %v2464, %v2564
        %v2576 = vshrl.u32 %v374, 16
        %v2578 = vrot.slane %v2576, 4
        %v2579 = vshll.u32 %v374, 16
        %v2581 = vrot.slane %v2579, 5
        %v2582 = vor.u32 %v2578, %v2581
        %v2583 = vrot.slane %v2582, 4
        %v2585 = vshll.u32 %v375, 16
        %v2587 = vrot.slane %v2585, 5
        %v2588 = vsel %vm397, %v2583, %v2587
        %v2590 = vshrl.u32 %v376, 16
        %v2592 = vrot.slane %v2590, 4
        %v2593 = vshll.u32 %v376, 16
        %v2595 = vrot.slane %v2593, 5
        %v2596 = vor.u32 %v2592, %v2595
        %v2597 = vrot.slane %v2596, 4
        %v2599 = vshll.u32 %v377, 16
        %v2601 = vrot.slane %v2599, 5
        %v2602 = vsel %vm397, %v2597, %v2601
        %v2604 = vshrl.u32 %v378, 16
        %v2606 = vrot.slane %v2604, 4
        %v2607 = vshll.u32 %v378, 16
        %v2609 = vrot.slane %v2607, 5
        %v2610 = vor.u32 %v2606, %v2609
        %v2611 = vrot.slane %v2610, 4
        %v2613 = vshll.u32 %v379, 16
        %v2615 = vrot.slane %v2613, 5
        %v2616 = vsel %vm397, %v2611, %v2615
        %v2618 = vshrl.u32 %v380, 16
        %v2620 = vrot.slane %v2618, 4
        %v2621 = vshll.u32 %v380, 16
        %v2623 = vrot.slane %v2621, 5
        %v2624 = vor.u32 %v2620, %v2623
        %v2625 = vrot.slane %v2624, 4
        %v2627 = vshll.u32 %v381, 16
        %v2629 = vrot.slane %v2627, 5
        %v2630 = vsel %vm397, %v2625, %v2629
        %v2632 = vshrl.u32 %v382, 16
        %v2634 = vrot.slane %v2632, 4
        %v2635 = vshll.u32 %v382, 16
        %v2637 = vrot.slane %v2635, 5
        %v2638 = vor.u32 %v2634, %v2637
        %v2639 = vrot.slane %v2638, 4
        %v2641 = vshll.u32 %v383, 16
        %v2643 = vrot.slane %v2641, 5
        %v2644 = vsel %vm397, %v2639, %v2643
        %v2646 = vshrl.u32 %v384, 16
        %v2648 = vrot.slane %v2646, 4
        %v2649 = vshll.u32 %v384, 16
        %v2651 = vrot.slane %v2649, 5
        %v2652 = vor.u32 %v2648, %v2651
        %v2653 = vrot.slane %v2652, 4
        %v2655 = vshll.u32 %v385, 16
        %v2657 = vrot.slane %v2655, 5
        %v2658 = vsel %vm397, %v2653, %v2657
        %v2660 = vshrl.u32 %v386, 16
        %v2662 = vrot.slane %v2660, 4
        %v2663 = vshll.u32 %v386, 16
        %v2665 = vrot.slane %v2663, 5
        %v2666 = vor.u32 %v2662, %v2665
        %v2667 = vrot.slane %v2666, 4
        %v2669 = vshll.u32 %v387, 16
        %v2671 = vrot.slane %v2669, 5
        %v2672 = vsel %vm397, %v2667, %v2671
        %v2674 = vshrl.u32 %v388, 16
        %v2676 = vrot.slane %v2674, 4
        %v2677 = vshll.u32 %v388, 16
        %v2679 = vrot.slane %v2677, 5
        %v2680 = vor.u32 %v2676, %v2679
        %v2681 = vrot.slane %v2680, 4
        %v2683 = vshll.u32 %v389, 16
        %v2685 = vrot.slane %v2683, 5
        %v2686 = vsel %vm397, %v2681, %v2685
        %s2687 = scalar_lea.vmem %s3, 76
        %v2688 = vld [vmem:[%s2687] sm:$0xf]
        %v2689 = vunpack.c.l.b16 %v2588
        %v2690 = vunpack.c.l.b16 %v2602
        %v2691 = vunpack.c.l.b16 %v2616
        %v2692 = vunpack.c.l.b16 %v2630
        %v2693 = vunpack.c.l.b16 %v2644
        %v2694 = vunpack.c.l.b16 %v2658
        %v2695 = vunpack.c.l.b16 %v2672
        %v2696 = vunpack.c.l.b16 %v2686
        %v2697 = vpack.c.b16 %v2690, %v2689
        %v2698 = vpack.c.b16 %v2692, %v2691
        %v2699 = vpack.c.b16 %v2694, %v2693
        %v2700 = vpack.c.b16 %v2696, %v2695
        %v2702 = vsel %vm524, %v2697, 0
        %v2705 = vsel %vm524, %v2698, 0
        %v2708 = vsel %vm524, %v2699, 0
        %v2711 = vsel %vm524, %v2700, 0
        %v2714 = vsel %vm537, %v2688, 0
        %2716 = vmatprep.subr.bf16.mxu0 0
        %2717 = vmatpush1.bf16.msra.mxu0 0
        %2718 = vmatprep.subr.bf16.mxu0 0
        %2719 = vmatpush1.bf16.msra.mxu0 0
        %2720 = vmatprep.subr.bf16.mxu0 0
        %2721 = vmatpush1.bf16.msra.mxu0 0
        %2722 = vmatprep.subr.bf16.mxu0 0
        %2723 = vmatpush1.bf16.msra.mxu0 0
        %2724 = vmatprep.subr.bf16.mxu0 0
        %2725 = vmatpush1.bf16.msra.mxu0 0
        %2726 = vmatprep.subr.bf16.mxu0 0
        %2727 = vmatpush1.bf16.msra.mxu0 0
        %2728 = vmatprep.subr.bf16.mxu0 0
        %2729 = vmatpush1.bf16.msra.mxu0 0
        %2730 = vmatprep.subr.bf16.mxu0 0
        %2731 = vmatpush1.bf16.msra.mxu0 %v2714
        %2732 = vmatprep.subr.bf16.mxu0 0
        %2733 = vmatpush2.bf16.msra.mxu0 0
        %2734 = vmatprep.subr.bf16.mxu0 0
        %2735 = vmatpush2.bf16.msra.mxu0 0
        %2736 = vmatprep.subr.bf16.mxu0 0
        %2737 = vmatpush2.bf16.msra.mxu0 0
        %2738 = vmatprep.subr.bf16.mxu0 0
        %2739 = vmatpush2.bf16.msra.mxu0 0
        %2740 = vmatprep.subr.bf16.mxu0 0
        %2741 = vmatpush2.bf16.msra.mxu0 0
        %2742 = vmatprep.subr.bf16.mxu0 0
        %2743 = vmatpush2.bf16.msra.mxu0 0
        %2744 = vmatprep.subr.bf16.mxu0 0
        %2745 = vmatpush2.bf16.msra.mxu0 0
        %2746 = vmatprep.subr.bf16.mxu0 0
        %2747 = vmatpush2.bf16.msra.mxu0 0
        %2748 = vmatprep.mubr.bf16.mxu0 0
        %2749 = vmatmul.mubr.bf16.gmra.mxu0 %v2702
        %v2750 = vpop.f32.mrf.mxu0
        %v2751 = vadd.f32 0.0, %v2750
        %v2752 = vpop.f32.mrf.mxu0
        %v2753 = vpop.f32.mrf.mxu0
        %v2754 = vadd.f32 0.0, %v2753
        %v2755 = vpop.f32.mrf.mxu0
        %2756 = vmatprep.mubr.bf16.mxu0 0
        %2757 = vmatmul.mubr.bf16.gmra.mxu0 %v2705
        %v2758 = vpop.f32.mrf.mxu0
        %v2759 = vadd.f32 0.0, %v2758
        %v2760 = vpop.f32.mrf.mxu0
        %v2761 = vpop.f32.mrf.mxu0
        %v2762 = vadd.f32 0.0, %v2761
        %v2763 = vpop.f32.mrf.mxu0
        %2764 = vmatprep.mubr.bf16.mxu0 0
        %2765 = vmatmul.mubr.bf16.gmra.mxu0 %v2708
        %v2766 = vpop.f32.mrf.mxu0
        %v2767 = vadd.f32 0.0, %v2766
        %v2768 = vpop.f32.mrf.mxu0
        %v2769 = vpop.f32.mrf.mxu0
        %v2770 = vadd.f32 0.0, %v2769
        %v2771 = vpop.f32.mrf.mxu0
        %2772 = vmatprep.mubr.bf16.mxu0 0
        %2773 = vmatmul.mubr.bf16.gmra.mxu0 %v2711
        %v2774 = vpop.f32.mrf.mxu0
        %v2775 = vadd.f32 0.0, %v2774
        %v2776 = vpop.f32.mrf.mxu0
        %v2777 = vpop.f32.mrf.mxu0
        %v2778 = vadd.f32 0.0, %v2777
        %v2779 = vpop.f32.mrf.mxu0
        %2780 = vdwg.mxu0
        %v2781 = vadd.f32 %v2567, %v2751
        %v2782 = vadd.f32 %v2568, %v2754
        %v2783 = vadd.f32 %v2569, %v2759
        %v2784 = vadd.f32 %v2570, %v2762
        %v2785 = vadd.f32 %v2571, %v2767
        %v2786 = vadd.f32 %v2572, %v2770
        %v2787 = vadd.f32 %v2573, %v2775
        %v2788 = vadd.f32 %v2574, %v2778
        %v2797 = vrot.slane %v374, 5
        %v2798 = vrot.slane %v2797, 4
        %v2799 = vrot.slane %v375, 5
        %v2800 = vsel %vm716, %v2798, %v2799
        %v2801 = vrot.slane %v376, 5
        %v2802 = vrot.slane %v2801, 4
        %v2803 = vrot.slane %v377, 5
        %v2804 = vsel %vm716, %v2802, %v2803
        %v2805 = vrot.slane %v378, 5
        %v2806 = vrot.slane %v2805, 4
        %v2807 = vrot.slane %v379, 5
        %v2808 = vsel %vm716, %v2806, %v2807
        %v2809 = vrot.slane %v380, 5
        %v2810 = vrot.slane %v2809, 4
        %v2811 = vrot.slane %v381, 5
        %v2812 = vsel %vm716, %v2810, %v2811
        %v2813 = vrot.slane %v382, 5
        %v2814 = vrot.slane %v2813, 4
        %v2815 = vrot.slane %v383, 5
        %v2816 = vsel %vm716, %v2814, %v2815
        %v2817 = vrot.slane %v384, 5
        %v2818 = vrot.slane %v2817, 4
        %v2819 = vrot.slane %v385, 5
        %v2820 = vsel %vm716, %v2818, %v2819
        %v2821 = vrot.slane %v386, 5
        %v2822 = vrot.slane %v2821, 4
        %v2823 = vrot.slane %v387, 5
        %v2824 = vsel %vm716, %v2822, %v2823
        %v2825 = vrot.slane %v388, 5
        %v2826 = vrot.slane %v2825, 4
        %v2827 = vrot.slane %v389, 5
        %v2828 = vsel %vm716, %v2826, %v2827
        %s2829 = scalar_lea.vmem %s3, 80
        %v2830 = vld [vmem:[%s2829] sm:$0xf]
        %v2831 = vunpack.c.l.b16 %v2800
        %v2832 = vunpack.c.l.b16 %v2804
        %v2833 = vunpack.c.l.b16 %v2808
        %v2834 = vunpack.c.l.b16 %v2812
        %v2835 = vunpack.c.l.b16 %v2816
        %v2836 = vunpack.c.l.b16 %v2820
        %v2837 = vunpack.c.l.b16 %v2824
        %v2838 = vunpack.c.l.b16 %v2828
        %v2839 = vpack.c.b16 %v2832, %v2831
        %v2840 = vpack.c.b16 %v2834, %v2833
        %v2841 = vpack.c.b16 %v2836, %v2835
        %v2842 = vpack.c.b16 %v2838, %v2837
        %v2844 = vsel %vm524, %v2839, 0
        %v2847 = vsel %vm524, %v2840, 0
        %v2850 = vsel %vm524, %v2841, 0
        %v2853 = vsel %vm524, %v2842, 0
        %v2856 = vsel %vm537, %v2830, 0
        %2858 = vmatprep.subr.bf16.mxu0 0
        %2859 = vmatpush1.bf16.msra.mxu0 0
        %2860 = vmatprep.subr.bf16.mxu0 0
        %2861 = vmatpush1.bf16.msra.mxu0 0
        %2862 = vmatprep.subr.bf16.mxu0 0
        %2863 = vmatpush1.bf16.msra.mxu0 0
        %2864 = vmatprep.subr.bf16.mxu0 0
        %2865 = vmatpush1.bf16.msra.mxu0 0
        %2866 = vmatprep.subr.bf16.mxu0 0
        %2867 = vmatpush1.bf16.msra.mxu0 0
        %2868 = vmatprep.subr.bf16.mxu0 0
        %2869 = vmatpush1.bf16.msra.mxu0 0
        %2870 = vmatprep.subr.bf16.mxu0 0
        %2871 = vmatpush1.bf16.msra.mxu0 0
        %2872 = vmatprep.subr.bf16.mxu0 0
        %2873 = vmatpush1.bf16.msra.mxu0 %v2856
        %2874 = vmatprep.subr.bf16.mxu0 0
        %2875 = vmatpush2.bf16.msra.mxu0 0
        %2876 = vmatprep.subr.bf16.mxu0 0
        %2877 = vmatpush2.bf16.msra.mxu0 0
        %2878 = vmatprep.subr.bf16.mxu0 0
        %2879 = vmatpush2.bf16.msra.mxu0 0
        %2880 = vmatprep.subr.bf16.mxu0 0
        %2881 = vmatpush2.bf16.msra.mxu0 0
        %2882 = vmatprep.subr.bf16.mxu0 0
        %2883 = vmatpush2.bf16.msra.mxu0 0
        %2884 = vmatprep.subr.bf16.mxu0 0
        %2885 = vmatpush2.bf16.msra.mxu0 0
        %2886 = vmatprep.subr.bf16.mxu0 0
        %2887 = vmatpush2.bf16.msra.mxu0 0
        %2888 = vmatprep.subr.bf16.mxu0 0
        %2889 = vmatpush2.bf16.msra.mxu0 0
        %2890 = vmatprep.mubr.bf16.mxu0 0
        %2891 = vmatmul.mubr.bf16.gmra.mxu0 %v2844
        %v2892 = vpop.f32.mrf.mxu0
        %v2893 = vadd.f32 0.0, %v2892
        %v2894 = vpop.f32.mrf.mxu0
        %v2895 = vpop.f32.mrf.mxu0
        %v2896 = vadd.f32 0.0, %v2895
        %v2897 = vpop.f32.mrf.mxu0
        %2898 = vmatprep.mubr.bf16.mxu0 0
        %2899 = vmatmul.mubr.bf16.gmra.mxu0 %v2847
        %v2900 = vpop.f32.mrf.mxu0
        %v2901 = vadd.f32 0.0, %v2900
        %v2902 = vpop.f32.mrf.mxu0
        %v2903 = vpop.f32.mrf.mxu0
        %v2904 = vadd.f32 0.0, %v2903
        %v2905 = vpop.f32.mrf.mxu0
        %2906 = vmatprep.mubr.bf16.mxu0 0
        %2907 = vmatmul.mubr.bf16.gmra.mxu0 %v2850
        %v2908 = vpop.f32.mrf.mxu0
        %v2909 = vadd.f32 0.0, %v2908
        %v2910 = vpop.f32.mrf.mxu0
        %v2911 = vpop.f32.mrf.mxu0
        %v2912 = vadd.f32 0.0, %v2911
        %v2913 = vpop.f32.mrf.mxu0
        %2914 = vmatprep.mubr.bf16.mxu0 0
        %2915 = vmatmul.mubr.bf16.gmra.mxu0 %v2853
        %v2916 = vpop.f32.mrf.mxu0
        %v2917 = vadd.f32 0.0, %v2916
        %v2918 = vpop.f32.mrf.mxu0
        %v2919 = vpop.f32.mrf.mxu0
        %v2920 = vadd.f32 0.0, %v2919
        %v2921 = vpop.f32.mrf.mxu0
        %2922 = vdwg.mxu0
        %v2923 = vadd.f32 %v2781, %v2893
        %v2924 = vadd.f32 %v2782, %v2896
        %v2925 = vadd.f32 %v2783, %v2901
        %v2926 = vadd.f32 %v2784, %v2904
        %v2927 = vadd.f32 %v2785, %v2909
        %v2928 = vadd.f32 %v2786, %v2912
        %v2929 = vadd.f32 %v2787, %v2917
        %v2930 = vadd.f32 %v2788, %v2920
        %s2931 = scalar_lea.vmem %s3, 84
        %v2932 = vld [vmem:[%s2931] sm:$0xf]
        %v2934 = vunpack.c.l.b16 %v390
        %v2935 = vpack.c.b16 %v2477, %v2476
        %v2936 = vpack.c.b16 %v2479, %v2478
        %v2937 = vpack.c.b16 %v2481, %v2480
        %v2938 = vpack.c.b16 %v2934, %v2482
        %v2940 = vsel %vm524, %v2935, 0
        %v2943 = vsel %vm524, %v2936, 0
        %v2946 = vsel %vm524, %v2937, 0
        %v2949 = vsel %vm524, %v2938, 0
        %v2952 = vsel %vm537, %v2932, 0
        %2954 = vmatprep.subr.bf16.mxu0 0
        %2955 = vmatpush1.bf16.msra.mxu0 0
        %2956 = vmatprep.subr.bf16.mxu0 0
        %2957 = vmatpush1.bf16.msra.mxu0 0
        %2958 = vmatprep.subr.bf16.mxu0 0
        %2959 = vmatpush1.bf16.msra.mxu0 0
        %2960 = vmatprep.subr.bf16.mxu0 0
        %2961 = vmatpush1.bf16.msra.mxu0 0
        %2962 = vmatprep.subr.bf16.mxu0 0
        %2963 = vmatpush1.bf16.msra.mxu0 0
        %2964 = vmatprep.subr.bf16.mxu0 0
        %2965 = vmatpush1.bf16.msra.mxu0 0
        %2966 = vmatprep.subr.bf16.mxu0 0
        %2967 = vmatpush1.bf16.msra.mxu0 0
        %2968 = vmatprep.subr.bf16.mxu0 0
        %2969 = vmatpush1.bf16.msra.mxu0 %v2952
        %2970 = vmatprep.subr.bf16.mxu0 0
        %2971 = vmatpush2.bf16.msra.mxu0 0
        %2972 = vmatprep.subr.bf16.mxu0 0
        %2973 = vmatpush2.bf16.msra.mxu0 0
        %2974 = vmatprep.subr.bf16.mxu0 0
        %2975 = vmatpush2.bf16.msra.mxu0 0
        %2976 = vmatprep.subr.bf16.mxu0 0
        %2977 = vmatpush2.bf16.msra.mxu0 0
        %2978 = vmatprep.subr.bf16.mxu0 0
        %2979 = vmatpush2.bf16.msra.mxu0 0
        %2980 = vmatprep.subr.bf16.mxu0 0
        %2981 = vmatpush2.bf16.msra.mxu0 0
        %2982 = vmatprep.subr.bf16.mxu0 0
        %2983 = vmatpush2.bf16.msra.mxu0 0
        %2984 = vmatprep.subr.bf16.mxu0 0
        %2985 = vmatpush2.bf16.msra.mxu0 0
        %2986 = vmatprep.mubr.bf16.mxu0 0
        %2987 = vmatmul.mubr.bf16.gmra.mxu0 %v2940
        %v2988 = vpop.f32.mrf.mxu0
        %v2989 = vadd.f32 0.0, %v2988
        %v2990 = vpop.f32.mrf.mxu0
        %v2991 = vpop.f32.mrf.mxu0
        %v2992 = vadd.f32 0.0, %v2991
        %v2993 = vpop.f32.mrf.mxu0
        %2994 = vmatprep.mubr.bf16.mxu0 0
        %2995 = vmatmul.mubr.bf16.gmra.mxu0 %v2943
        %v2996 = vpop.f32.mrf.mxu0
        %v2997 = vadd.f32 0.0, %v2996
        %v2998 = vpop.f32.mrf.mxu0
        %v2999 = vpop.f32.mrf.mxu0
        %v3000 = vadd.f32 0.0, %v2999
        %v3001 = vpop.f32.mrf.mxu0
        %3002 = vmatprep.mubr.bf16.mxu0 0
        %3003 = vmatmul.mubr.bf16.gmra.mxu0 %v2946
        %v3004 = vpop.f32.mrf.mxu0
        %v3005 = vadd.f32 0.0, %v3004
        %v3006 = vpop.f32.mrf.mxu0
        %v3007 = vpop.f32.mrf.mxu0
        %v3008 = vadd.f32 0.0, %v3007
        %v3009 = vpop.f32.mrf.mxu0
        %3010 = vmatprep.mubr.bf16.mxu0 0
        %3011 = vmatmul.mubr.bf16.gmra.mxu0 %v2949
        %v3012 = vpop.f32.mrf.mxu0
        %v3013 = vadd.f32 0.0, %v3012
        %v3014 = vpop.f32.mrf.mxu0
        %v3015 = vpop.f32.mrf.mxu0
        %v3016 = vadd.f32 0.0, %v3015
        %v3017 = vpop.f32.mrf.mxu0
        %3018 = vdwg.mxu0
        %v3019 = vadd.f32 %v2923, %v2989
        %v3020 = vadd.f32 %v2924, %v2992
        %v3021 = vadd.f32 %v2925, %v2997
        %v3022 = vadd.f32 %v2926, %v3000
        %v3023 = vadd.f32 %v2927, %v3005
        %v3024 = vadd.f32 %v2928, %v3008
        %v3025 = vadd.f32 %v2929, %v3013
        %v3026 = vadd.f32 %v2930, %v3016
        %v3028 = vshrl.u32 %v390, 16
        %v3030 = vrot.slane %v3028, 4
        %v3031 = vshll.u32 %v390, 16
        %v3033 = vrot.slane %v3031, 5
        %v3034 = vor.u32 %v3030, %v3033
        %v3035 = vrot.slane %v3034, 4
        %v3037 = vshll.u32 %v391, 16
        %v3039 = vrot.slane %v3037, 5
        %v3040 = vsel %vm397, %v3035, %v3039
        %s3041 = scalar_lea.vmem %s3, 88
        %v3042 = vld [vmem:[%s3041] sm:$0xf]
        %v3043 = vunpack.c.l.b16 %v3040
        %v3044 = vpack.c.b16 %v2691, %v2690
        %v3045 = vpack.c.b16 %v2693, %v2692
        %v3046 = vpack.c.b16 %v2695, %v2694
        %v3047 = vpack.c.b16 %v3043, %v2696
        %v3049 = vsel %vm524, %v3044, 0
        %v3052 = vsel %vm524, %v3045, 0
        %v3055 = vsel %vm524, %v3046, 0
        %v3058 = vsel %vm524, %v3047, 0
        %v3061 = vsel %vm537, %v3042, 0
        %3063 = vmatprep.subr.bf16.mxu0 0
        %3064 = vmatpush1.bf16.msra.mxu0 0
        %3065 = vmatprep.subr.bf16.mxu0 0
        %3066 = vmatpush1.bf16.msra.mxu0 0
        %3067 = vmatprep.subr.bf16.mxu0 0
        %3068 = vmatpush1.bf16.msra.mxu0 0
        %3069 = vmatprep.subr.bf16.mxu0 0
        %3070 = vmatpush1.bf16.msra.mxu0 0
        %3071 = vmatprep.subr.bf16.mxu0 0
        %3072 = vmatpush1.bf16.msra.mxu0 0
        %3073 = vmatprep.subr.bf16.mxu0 0
        %3074 = vmatpush1.bf16.msra.mxu0 0
        %3075 = vmatprep.subr.bf16.mxu0 0
        %3076 = vmatpush1.bf16.msra.mxu0 0
        %3077 = vmatprep.subr.bf16.mxu0 0
        %3078 = vmatpush1.bf16.msra.mxu0 %v3061
        %3079 = vmatprep.subr.bf16.mxu0 0
        %3080 = vmatpush2.bf16.msra.mxu0 0
        %3081 = vmatprep.subr.bf16.mxu0 0
        %3082 = vmatpush2.bf16.msra.mxu0 0
        %3083 = vmatprep.subr.bf16.mxu0 0
        %3084 = vmatpush2.bf16.msra.mxu0 0
        %3085 = vmatprep.subr.bf16.mxu0 0
        %3086 = vmatpush2.bf16.msra.mxu0 0
        %3087 = vmatprep.subr.bf16.mxu0 0
        %3088 = vmatpush2.bf16.msra.mxu0 0
        %3089 = vmatprep.subr.bf16.mxu0 0
        %3090 = vmatpush2.bf16.msra.mxu0 0
        %3091 = vmatprep.subr.bf16.mxu0 0
        %3092 = vmatpush2.bf16.msra.mxu0 0
        %3093 = vmatprep.subr.bf16.mxu0 0
        %3094 = vmatpush2.bf16.msra.mxu0 0
        %3095 = vmatprep.mubr.bf16.mxu0 0
        %3096 = vmatmul.mubr.bf16.gmra.mxu0 %v3049
        %v3097 = vpop.f32.mrf.mxu0
        %v3098 = vadd.f32 0.0, %v3097
        %v3099 = vpop.f32.mrf.mxu0
        %v3100 = vpop.f32.mrf.mxu0
        %v3101 = vadd.f32 0.0, %v3100
        %v3102 = vpop.f32.mrf.mxu0
        %3103 = vmatprep.mubr.bf16.mxu0 0
        %3104 = vmatmul.mubr.bf16.gmra.mxu0 %v3052
        %v3105 = vpop.f32.mrf.mxu0
        %v3106 = vadd.f32 0.0, %v3105
        %v3107 = vpop.f32.mrf.mxu0
        %v3108 = vpop.f32.mrf.mxu0
        %v3109 = vadd.f32 0.0, %v3108
        %v3110 = vpop.f32.mrf.mxu0
        %3111 = vmatprep.mubr.bf16.mxu0 0
        %3112 = vmatmul.mubr.bf16.gmra.mxu0 %v3055
        %v3113 = vpop.f32.mrf.mxu0
        %v3114 = vadd.f32 0.0, %v3113
        %v3115 = vpop.f32.mrf.mxu0
        %v3116 = vpop.f32.mrf.mxu0
        %v3117 = vadd.f32 0.0, %v3116
        %v3118 = vpop.f32.mrf.mxu0
        %3119 = vmatprep.mubr.bf16.mxu0 0
        %3120 = vmatmul.mubr.bf16.gmra.mxu0 %v3058
        %v3121 = vpop.f32.mrf.mxu0
        %v3122 = vadd.f32 0.0, %v3121
        %v3123 = vpop.f32.mrf.mxu0
        %v3124 = vpop.f32.mrf.mxu0
        %v3125 = vadd.f32 0.0, %v3124
        %v3126 = vpop.f32.mrf.mxu0
        %3127 = vdwg.mxu0
        %v3128 = vadd.f32 %v3019, %v3098
        %v3129 = vadd.f32 %v3020, %v3101
        %v3130 = vadd.f32 %v3021, %v3106
        %v3131 = vadd.f32 %v3022, %v3109
        %v3132 = vadd.f32 %v3023, %v3114
        %v3133 = vadd.f32 %v3024, %v3117
        %v3134 = vadd.f32 %v3025, %v3122
        %v3135 = vadd.f32 %v3026, %v3125
        %v3137 = vrot.slane %v390, 5
        %v3138 = vrot.slane %v3137, 4
        %v3139 = vrot.slane %v391, 5
        %v3140 = vsel %vm716, %v3138, %v3139
        %s3141 = scalar_lea.vmem %s3, 92
        %v3142 = vld [vmem:[%s3141] sm:$0xf]
        %v3143 = vunpack.c.l.b16 %v3140
        %v3144 = vpack.c.b16 %v2833, %v2832
        %v3145 = vpack.c.b16 %v2835, %v2834
        %v3146 = vpack.c.b16 %v2837, %v2836
        %v3147 = vpack.c.b16 %v3143, %v2838
        %v3149 = vsel %vm524, %v3144, 0
        %v3152 = vsel %vm524, %v3145, 0
        %v3155 = vsel %vm524, %v3146, 0
        %v3158 = vsel %vm524, %v3147, 0
        %v3161 = vsel %vm537, %v3142, 0
        %3163 = vmatprep.subr.bf16.mxu0 0
        %3164 = vmatpush1.bf16.msra.mxu0 0
        %3165 = vmatprep.subr.bf16.mxu0 0
        %3166 = vmatpush1.bf16.msra.mxu0 0
        %3167 = vmatprep.subr.bf16.mxu0 0
        %3168 = vmatpush1.bf16.msra.mxu0 0
        %3169 = vmatprep.subr.bf16.mxu0 0
        %3170 = vmatpush1.bf16.msra.mxu0 0
        %3171 = vmatprep.subr.bf16.mxu0 0
        %3172 = vmatpush1.bf16.msra.mxu0 0
        %3173 = vmatprep.subr.bf16.mxu0 0
        %3174 = vmatpush1.bf16.msra.mxu0 0
        %3175 = vmatprep.subr.bf16.mxu0 0
        %3176 = vmatpush1.bf16.msra.mxu0 0
        %3177 = vmatprep.subr.bf16.mxu0 0
        %3178 = vmatpush1.bf16.msra.mxu0 %v3161
        %3179 = vmatprep.subr.bf16.mxu0 0
        %3180 = vmatpush2.bf16.msra.mxu0 0
        %3181 = vmatprep.subr.bf16.mxu0 0
        %3182 = vmatpush2.bf16.msra.mxu0 0
        %3183 = vmatprep.subr.bf16.mxu0 0
        %3184 = vmatpush2.bf16.msra.mxu0 0
        %3185 = vmatprep.subr.bf16.mxu0 0
        %3186 = vmatpush2.bf16.msra.mxu0 0
        %3187 = vmatprep.subr.bf16.mxu0 0
        %3188 = vmatpush2.bf16.msra.mxu0 0
        %3189 = vmatprep.subr.bf16.mxu0 0
        %3190 = vmatpush2.bf16.msra.mxu0 0
        %3191 = vmatprep.subr.bf16.mxu0 0
        %3192 = vmatpush2.bf16.msra.mxu0 0
        %3193 = vmatprep.subr.bf16.mxu0 0
        %3194 = vmatpush2.bf16.msra.mxu0 0
        %3195 = vmatprep.mubr.bf16.mxu0 0
        %3196 = vmatmul.mubr.bf16.gmra.mxu0 %v3149
        %v3197 = vpop.f32.mrf.mxu0
        %v3198 = vadd.f32 0.0, %v3197
        %v3199 = vpop.f32.mrf.mxu0
        %v3200 = vpop.f32.mrf.mxu0
        %v3201 = vadd.f32 0.0, %v3200
        %v3202 = vpop.f32.mrf.mxu0
        %3203 = vmatprep.mubr.bf16.mxu0 0
        %3204 = vmatmul.mubr.bf16.gmra.mxu0 %v3152
        %v3205 = vpop.f32.mrf.mxu0
        %v3206 = vadd.f32 0.0, %v3205
        %v3207 = vpop.f32.mrf.mxu0
        %v3208 = vpop.f32.mrf.mxu0
        %v3209 = vadd.f32 0.0, %v3208
        %v3210 = vpop.f32.mrf.mxu0
        %3211 = vmatprep.mubr.bf16.mxu0 0
        %3212 = vmatmul.mubr.bf16.gmra.mxu0 %v3155
        %v3213 = vpop.f32.mrf.mxu0
        %v3214 = vadd.f32 0.0, %v3213
        %v3215 = vpop.f32.mrf.mxu0
        %v3216 = vpop.f32.mrf.mxu0
        %v3217 = vadd.f32 0.0, %v3216
        %v3218 = vpop.f32.mrf.mxu0
        %3219 = vmatprep.mubr.bf16.mxu0 0
        %3220 = vmatmul.mubr.bf16.gmra.mxu0 %v3158
        %v3221 = vpop.f32.mrf.mxu0
        %v3222 = vadd.f32 0.0, %v3221
        %v3223 = vpop.f32.mrf.mxu0
        %v3224 = vpop.f32.mrf.mxu0
        %v3225 = vadd.f32 0.0, %v3224
        %v3226 = vpop.f32.mrf.mxu0
        %3227 = vdwg.mxu0
        %v3228 = vadd.f32 %v3128, %v3198
        %v3229 = vadd.f32 %v3129, %v3201
        %v3230 = vadd.f32 %v3130, %v3206
        %v3231 = vadd.f32 %v3131, %v3209
        %v3232 = vadd.f32 %v3132, %v3214
        %v3233 = vadd.f32 %v3133, %v3217
        %v3234 = vadd.f32 %v3134, %v3222
        %v3235 = vadd.f32 %v3135, %v3225
        %s3236 = scalar_lea.vmem %s3, 96
        %v3237 = vld [vmem:[%s3236] sm:$0xf]
        %v3239 = vunpack.c.l.b16 %v392
        %v3240 = vpack.c.b16 %v3239, %v2934
        %v3242 = vsel %vm524, %v3240, 0
        %v3245 = vsel %vm537, %v3237, 0
        %3247 = vmatprep.subr.bf16.mxu0 0
        %3248 = vmatpush1.bf16.msra.mxu0 0
        %3249 = vmatprep.subr.bf16.mxu0 0
        %3250 = vmatpush1.bf16.msra.mxu0 0
        %3251 = vmatprep.subr.bf16.mxu0 0
        %3252 = vmatpush1.bf16.msra.mxu0 0
        %3253 = vmatprep.subr.bf16.mxu0 0
        %3254 = vmatpush1.bf16.msra.mxu0 0
        %3255 = vmatprep.subr.bf16.mxu0 0
        %3256 = vmatpush1.bf16.msra.mxu0 0
        %3257 = vmatprep.subr.bf16.mxu0 0
        %3258 = vmatpush1.bf16.msra.mxu0 0
        %3259 = vmatprep.subr.bf16.mxu0 0
        %3260 = vmatpush1.bf16.msra.mxu0 0
        %3261 = vmatprep.subr.bf16.mxu0 0
        %3262 = vmatpush1.bf16.msra.mxu0 %v3245
        %3263 = vmatprep.subr.bf16.mxu0 0
        %3264 = vmatpush2.bf16.msra.mxu0 0
        %3265 = vmatprep.subr.bf16.mxu0 0
        %3266 = vmatpush2.bf16.msra.mxu0 0
        %3267 = vmatprep.subr.bf16.mxu0 0
        %3268 = vmatpush2.bf16.msra.mxu0 0
        %3269 = vmatprep.subr.bf16.mxu0 0
        %3270 = vmatpush2.bf16.msra.mxu0 0
        %3271 = vmatprep.subr.bf16.mxu0 0
        %3272 = vmatpush2.bf16.msra.mxu0 0
        %3273 = vmatprep.subr.bf16.mxu0 0
        %3274 = vmatpush2.bf16.msra.mxu0 0
        %3275 = vmatprep.subr.bf16.mxu0 0
        %3276 = vmatpush2.bf16.msra.mxu0 0
        %3277 = vmatprep.subr.bf16.mxu0 0
        %3278 = vmatpush2.bf16.msra.mxu0 0
        %3279 = vmatprep.mubr.bf16.mxu0 0
        %3280 = vmatmul.mubr.bf16.gmra.mxu0 %v2491
        %v3281 = vpop.f32.mrf.mxu0
        %v3282 = vadd.f32 0.0, %v3281
        %v3283 = vpop.f32.mrf.mxu0
        %v3284 = vpop.f32.mrf.mxu0
        %v3285 = vadd.f32 0.0, %v3284
        %v3286 = vpop.f32.mrf.mxu0
        %3287 = vmatprep.mubr.bf16.mxu0 0
        %3288 = vmatmul.mubr.bf16.gmra.mxu0 %v2494
        %v3289 = vpop.f32.mrf.mxu0
        %v3290 = vadd.f32 0.0, %v3289
        %v3291 = vpop.f32.mrf.mxu0
        %v3292 = vpop.f32.mrf.mxu0
        %v3293 = vadd.f32 0.0, %v3292
        %v3294 = vpop.f32.mrf.mxu0
        %3295 = vmatprep.mubr.bf16.mxu0 0
        %3296 = vmatmul.mubr.bf16.gmra.mxu0 %v2497
        %v3297 = vpop.f32.mrf.mxu0
        %v3298 = vadd.f32 0.0, %v3297
        %v3299 = vpop.f32.mrf.mxu0
        %v3300 = vpop.f32.mrf.mxu0
        %v3301 = vadd.f32 0.0, %v3300
        %v3302 = vpop.f32.mrf.mxu0
        %3303 = vmatprep.mubr.bf16.mxu0 0
        %3304 = vmatmul.mubr.bf16.gmra.mxu0 %v3242
        %v3305 = vpop.f32.mrf.mxu0
        %v3306 = vadd.f32 0.0, %v3305
        %v3307 = vpop.f32.mrf.mxu0
        %v3308 = vpop.f32.mrf.mxu0
        %v3309 = vadd.f32 0.0, %v3308
        %v3310 = vpop.f32.mrf.mxu0
        %3311 = vdwg.mxu0
        %v3312 = vadd.f32 %v3228, %v3282
        %v3313 = vadd.f32 %v3229, %v3285
        %v3314 = vadd.f32 %v3230, %v3290
        %v3315 = vadd.f32 %v3231, %v3293
        %v3316 = vadd.f32 %v3232, %v3298
        %v3317 = vadd.f32 %v3233, %v3301
        %v3318 = vadd.f32 %v3234, %v3306
        %v3319 = vadd.f32 %v3235, %v3309
        %v3321 = vshrl.u32 %v392, 16
        %v3323 = vrot.slane %v3321, 4
        %v3324 = vshll.u32 %v392, 16
        %v3326 = vrot.slane %v3324, 5
        %v3327 = vor.u32 %v3323, %v3326
        %v3328 = vrot.slane %v3327, 4
        %v3330 = vshll.u32 %v393, 16
        %v3332 = vrot.slane %v3330, 5
        %v3333 = vsel %vm397, %v3328, %v3332
        %s3334 = scalar_lea.vmem %s3, 100
        %v3335 = vld [vmem:[%s3334] sm:$0xf]
        %v3336 = vunpack.c.l.b16 %v3333
        %v3337 = vpack.c.b16 %v3336, %v3043
        %v3339 = vsel %vm524, %v3337, 0
        %v3342 = vsel %vm537, %v3335, 0
        %3344 = vmatprep.subr.bf16.mxu0 0
        %3345 = vmatpush1.bf16.msra.mxu0 0
        %3346 = vmatprep.subr.bf16.mxu0 0
        %3347 = vmatpush1.bf16.msra.mxu0 0
        %3348 = vmatprep.subr.bf16.mxu0 0
        %3349 = vmatpush1.bf16.msra.mxu0 0
        %3350 = vmatprep.subr.bf16.mxu0 0
        %3351 = vmatpush1.bf16.msra.mxu0 0
        %3352 = vmatprep.subr.bf16.mxu0 0
        %3353 = vmatpush1.bf16.msra.mxu0 0
        %3354 = vmatprep.subr.bf16.mxu0 0
        %3355 = vmatpush1.bf16.msra.mxu0 0
        %3356 = vmatprep.subr.bf16.mxu0 0
        %3357 = vmatpush1.bf16.msra.mxu0 0
        %3358 = vmatprep.subr.bf16.mxu0 0
        %3359 = vmatpush1.bf16.msra.mxu0 %v3342
        %3360 = vmatprep.subr.bf16.mxu0 0
        %3361 = vmatpush2.bf16.msra.mxu0 0
        %3362 = vmatprep.subr.bf16.mxu0 0
        %3363 = vmatpush2.bf16.msra.mxu0 0
        %3364 = vmatprep.subr.bf16.mxu0 0
        %3365 = vmatpush2.bf16.msra.mxu0 0
        %3366 = vmatprep.subr.bf16.mxu0 0
        %3367 = vmatpush2.bf16.msra.mxu0 0
        %3368 = vmatprep.subr.bf16.mxu0 0
        %3369 = vmatpush2.bf16.msra.mxu0 0
        %3370 = vmatprep.subr.bf16.mxu0 0
        %3371 = vmatpush2.bf16.msra.mxu0 0
        %3372 = vmatprep.subr.bf16.mxu0 0
        %3373 = vmatpush2.bf16.msra.mxu0 0
        %3374 = vmatprep.subr.bf16.mxu0 0
        %3375 = vmatpush2.bf16.msra.mxu0 0
        %3376 = vmatprep.mubr.bf16.mxu0 0
        %3377 = vmatmul.mubr.bf16.gmra.mxu0 %v2705
        %v3378 = vpop.f32.mrf.mxu0
        %v3379 = vadd.f32 0.0, %v3378
        %v3380 = vpop.f32.mrf.mxu0
        %v3381 = vpop.f32.mrf.mxu0
        %v3382 = vadd.f32 0.0, %v3381
        %v3383 = vpop.f32.mrf.mxu0
        %3384 = vmatprep.mubr.bf16.mxu0 0
        %3385 = vmatmul.mubr.bf16.gmra.mxu0 %v2708
        %v3386 = vpop.f32.mrf.mxu0
        %v3387 = vadd.f32 0.0, %v3386
        %v3388 = vpop.f32.mrf.mxu0
        %v3389 = vpop.f32.mrf.mxu0
        %v3390 = vadd.f32 0.0, %v3389
        %v3391 = vpop.f32.mrf.mxu0
        %3392 = vmatprep.mubr.bf16.mxu0 0
        %3393 = vmatmul.mubr.bf16.gmra.mxu0 %v2711
        %v3394 = vpop.f32.mrf.mxu0
        %v3395 = vadd.f32 0.0, %v3394
        %v3396 = vpop.f32.mrf.mxu0
        %v3397 = vpop.f32.mrf.mxu0
        %v3398 = vadd.f32 0.0, %v3397
        %v3399 = vpop.f32.mrf.mxu0
        %3400 = vmatprep.mubr.bf16.mxu0 0
        %3401 = vmatmul.mubr.bf16.gmra.mxu0 %v3339
        %v3402 = vpop.f32.mrf.mxu0
        %v3403 = vadd.f32 0.0, %v3402
        %v3404 = vpop.f32.mrf.mxu0
        %v3405 = vpop.f32.mrf.mxu0
        %v3406 = vadd.f32 0.0, %v3405
        %v3407 = vpop.f32.mrf.mxu0
        %3408 = vdwg.mxu0
        %v3409 = vadd.f32 %v3312, %v3379
        %v3410 = vadd.f32 %v3313, %v3382
        %v3411 = vadd.f32 %v3314, %v3387
        %v3412 = vadd.f32 %v3315, %v3390
        %v3413 = vadd.f32 %v3316, %v3395
        %v3414 = vadd.f32 %v3317, %v3398
        %v3415 = vadd.f32 %v3318, %v3403
        %v3416 = vadd.f32 %v3319, %v3406
        %v3418 = vrot.slane %v392, 5
        %v3419 = vrot.slane %v3418, 4
        %v3420 = vrot.slane %v393, 5
        %v3421 = vsel %vm716, %v3419, %v3420
        %s3422 = scalar_lea.vmem %s3, 104
        %v3423 = vld [vmem:[%s3422] sm:$0xf]
        %v3424 = vunpack.c.l.b16 %v3421
        %v3425 = vpack.c.b16 %v3424, %v3143
        %v3427 = vsel %vm524, %v3425, 0
        %v3430 = vsel %vm537, %v3423, 0
        %3432 = vmatprep.subr.bf16.mxu0 0
        %3433 = vmatpush1.bf16.msra.mxu0 0
        %3434 = vmatprep.subr.bf16.mxu0 0
        %3435 = vmatpush1.bf16.msra.mxu0 0
        %3436 = vmatprep.subr.bf16.mxu0 0
        %3437 = vmatpush1.bf16.msra.mxu0 0
        %3438 = vmatprep.subr.bf16.mxu0 0
        %3439 = vmatpush1.bf16.msra.mxu0 0
        %3440 = vmatprep.subr.bf16.mxu0 0
        %3441 = vmatpush1.bf16.msra.mxu0 0
        %3442 = vmatprep.subr.bf16.mxu0 0
        %3443 = vmatpush1.bf16.msra.mxu0 0
        %3444 = vmatprep.subr.bf16.mxu0 0
        %3445 = vmatpush1.bf16.msra.mxu0 0
        %3446 = vmatprep.subr.bf16.mxu0 0
        %3447 = vmatpush1.bf16.msra.mxu0 %v3430
        %3448 = vmatprep.subr.bf16.mxu0 0
        %3449 = vmatpush2.bf16.msra.mxu0 0
        %3450 = vmatprep.subr.bf16.mxu0 0
        %3451 = vmatpush2.bf16.msra.mxu0 0
        %3452 = vmatprep.subr.bf16.mxu0 0
        %3453 = vmatpush2.bf16.msra.mxu0 0
        %3454 = vmatprep.subr.bf16.mxu0 0
        %3455 = vmatpush2.bf16.msra.mxu0 0
        %3456 = vmatprep.subr.bf16.mxu0 0
        %3457 = vmatpush2.bf16.msra.mxu0 0
        %3458 = vmatprep.subr.bf16.mxu0 0
        %3459 = vmatpush2.bf16.msra.mxu0 0
        %3460 = vmatprep.subr.bf16.mxu0 0
        %3461 = vmatpush2.bf16.msra.mxu0 0
        %3462 = vmatprep.subr.bf16.mxu0 0
        %3463 = vmatpush2.bf16.msra.mxu0 0
        %3464 = vmatprep.mubr.bf16.mxu0 0
        %3465 = vmatmul.mubr.bf16.gmra.mxu0 %v2847
        %v3466 = vpop.f32.mrf.mxu0
        %v3467 = vadd.f32 0.0, %v3466
        %v3468 = vpop.f32.mrf.mxu0
        %v3469 = vpop.f32.mrf.mxu0
        %v3470 = vadd.f32 0.0, %v3469
        %v3471 = vpop.f32.mrf.mxu0
        %3472 = vmatprep.mubr.bf16.mxu0 0
        %3473 = vmatmul.mubr.bf16.gmra.mxu0 %v2850
        %v3474 = vpop.f32.mrf.mxu0
        %v3475 = vadd.f32 0.0, %v3474
        %v3476 = vpop.f32.mrf.mxu0
        %v3477 = vpop.f32.mrf.mxu0
        %v3478 = vadd.f32 0.0, %v3477
        %v3479 = vpop.f32.mrf.mxu0
        %3480 = vmatprep.mubr.bf16.mxu0 0
        %3481 = vmatmul.mubr.bf16.gmra.mxu0 %v2853
        %v3482 = vpop.f32.mrf.mxu0
        %v3483 = vadd.f32 0.0, %v3482
        %v3484 = vpop.f32.mrf.mxu0
        %v3485 = vpop.f32.mrf.mxu0
        %v3486 = vadd.f32 0.0, %v3485
        %v3487 = vpop.f32.mrf.mxu0
        %3488 = vmatprep.mubr.bf16.mxu0 0
        %3489 = vmatmul.mubr.bf16.gmra.mxu0 %v3427
        %v3490 = vpop.f32.mrf.mxu0
        %v3491 = vadd.f32 0.0, %v3490
        %v3492 = vpop.f32.mrf.mxu0
        %v3493 = vpop.f32.mrf.mxu0
        %v3494 = vadd.f32 0.0, %v3493
        %v3495 = vpop.f32.mrf.mxu0
        %3496 = vdwg.mxu0
        %v3497 = vadd.f32 %v3409, %v3467
        %v3498 = vadd.f32 %v3410, %v3470
        %v3499 = vadd.f32 %v3411, %v3475
        %v3500 = vadd.f32 %v3412, %v3478
        %v3501 = vadd.f32 %v3413, %v3483
        %v3502 = vadd.f32 %v3414, %v3486
        %v3503 = vadd.f32 %v3415, %v3491
        %v3504 = vadd.f32 %v3416, %v3494
        %v3505 = vld [vmem:[%s4] sm:$0x1]
        %v3507 = vlaneseq
        %v3508 = vshrl.u32 %v3507, 7
        %v3509 = vsub.s32 0, %v3508
        %v3510 = vrot.slane %v3505, %v3509
        %v3512 = vadd.f32 %v3497, %v3510
        %v3513 = vadd.f32 %v3498, %v3510
        %v3514 = vadd.f32 %v3499, %v3510
        %v3515 = vadd.f32 %v3500, %v3510
        %v3516 = vadd.f32 %v3501, %v3510
        %v3517 = vadd.f32 %v3502, %v3510
        %v3518 = vadd.f32 %v3503, %v3510
        %v3519 = vadd.f32 %v3504, %v3510
        %v3520 = vmax.f32 %v3512, 0.0
        %v3521 = vmax.f32 %v3513, 0.0
        %v3522 = vmax.f32 %v3514, 0.0
        %v3523 = vmax.f32 %v3515, 0.0
        %v3524 = vmax.f32 %v3516, 0.0
        %v3525 = vmax.f32 %v3517, 0.0
        %v3526 = vmax.f32 %v3518, 0.0
        %v3527 = vmax.f32 %v3519, 0.0
        %v3536 = vcombine.high %v3520, %v3520
        %v3538 = vunpack.c.l.s4 1983009808
        %v3539 = vunpack.c.0.s8 %v3538
        %v3540 = vlaneseq
        %v3541 = vshrl.u32 %v3540, 7
        %v3542 = vsub.s32 %v3539, %v3541
        %v3543 = vrot.slane %v3520, %v3542
        %v3545 = vunpack.c.l.s4 1983009808
        %v3546 = vunpack.c.0.s8 %v3545
        %v3547 = vlaneseq
        %v3548 = vshrl.u32 %v3547, 7
        %v3549 = vsub.s32 %v3546, %v3548
        %v3550 = vrot.slane %v3536, %v3549
        %v3551 = vcombine.high %v3543, %v3543
        %v3552 = vcombine.high %v3550, %v3550
        %v3553 = vcombine.high %v3521, %v3521
        %v3555 = vunpack.c.l.s4 1983009808
        %v3556 = vunpack.c.0.s8 %v3555
        %v3557 = vlaneseq
        %v3558 = vshrl.u32 %v3557, 7
        %v3559 = vsub.s32 %v3556, %v3558
        %v3560 = vrot.slane %v3521, %v3559
        %v3562 = vunpack.c.l.s4 1983009808
        %v3563 = vunpack.c.0.s8 %v3562
        %v3564 = vlaneseq
        %v3565 = vshrl.u32 %v3564, 7
        %v3566 = vsub.s32 %v3563, %v3565
        %v3567 = vrot.slane %v3553, %v3566
        %v3568 = vcombine.high %v3560, %v3560
        %v3569 = vcombine.high %v3567, %v3567
        %v3570 = vcombine.high %v3522, %v3522
        %v3572 = vunpack.c.l.s4 1983009808
        %v3573 = vunpack.c.0.s8 %v3572
        %v3574 = vlaneseq
        %v3575 = vshrl.u32 %v3574, 7
        %v3576 = vsub.s32 %v3573, %v3575
        %v3577 = vrot.slane %v3522, %v3576
        %v3579 = vunpack.c.l.s4 1983009808
        %v3580 = vunpack.c.0.s8 %v3579
        %v3581 = vlaneseq
        %v3582 = vshrl.u32 %v3581, 7
        %v3583 = vsub.s32 %v3580, %v3582
        %v3584 = vrot.slane %v3570, %v3583
        %v3585 = vcombine.high %v3577, %v3577
        %v3586 = vcombine.high %v3584, %v3584
        %v3587 = vcombine.high %v3523, %v3523
        %v3589 = vunpack.c.l.s4 1983009808
        %v3590 = vunpack.c.0.s8 %v3589
        %v3591 = vlaneseq
        %v3592 = vshrl.u32 %v3591, 7
        %v3593 = vsub.s32 %v3590, %v3592
        %v3594 = vrot.slane %v3523, %v3593
        %v3596 = vunpack.c.l.s4 1983009808
        %v3597 = vunpack.c.0.s8 %v3596
        %v3598 = vlaneseq
        %v3599 = vshrl.u32 %v3598, 7
        %v3600 = vsub.s32 %v3597, %v3599
        %v3601 = vrot.slane %v3587, %v3600
        %v3602 = vcombine.high %v3594, %v3594
        %v3603 = vcombine.high %v3601, %v3601
        %v3604 = vcombine.high %v3524, %v3524
        %v3606 = vunpack.c.l.s4 1983009808
        %v3607 = vunpack.c.0.s8 %v3606
        %v3608 = vlaneseq
        %v3609 = vshrl.u32 %v3608, 7
        %v3610 = vsub.s32 %v3607, %v3609
        %v3611 = vrot.slane %v3524, %v3610
        %v3613 = vunpack.c.l.s4 1983009808
        %v3614 = vunpack.c.0.s8 %v3613
        %v3615 = vlaneseq
        %v3616 = vshrl.u32 %v3615, 7
        %v3617 = vsub.s32 %v3614, %v3616
        %v3618 = vrot.slane %v3604, %v3617
        %v3619 = vcombine.high %v3611, %v3611
        %v3620 = vcombine.high %v3618, %v3618
        %v3621 = vcombine.high %v3525, %v3525
        %v3623 = vunpack.c.l.s4 1983009808
        %v3624 = vunpack.c.0.s8 %v3623
        %v3625 = vlaneseq
        %v3626 = vshrl.u32 %v3625, 7
        %v3627 = vsub.s32 %v3624, %v3626
        %v3628 = vrot.slane %v3525, %v3627
        %v3630 = vunpack.c.l.s4 1983009808
        %v3631 = vunpack.c.0.s8 %v3630
        %v3632 = vlaneseq
        %v3633 = vshrl.u32 %v3632, 7
        %v3634 = vsub.s32 %v3631, %v3633
        %v3635 = vrot.slane %v3621, %v3634
        %v3636 = vcombine.high %v3628, %v3628
        %v3637 = vcombine.high %v3635, %v3635
        %v3638 = vcombine.high %v3526, %v3526
        %v3640 = vunpack.c.l.s4 1983009808
        %v3641 = vunpack.c.0.s8 %v3640
        %v3642 = vlaneseq
        %v3643 = vshrl.u32 %v3642, 7
        %v3644 = vsub.s32 %v3641, %v3643
        %v3645 = vrot.slane %v3526, %v3644
        %v3647 = vunpack.c.l.s4 1983009808
        %v3648 = vunpack.c.0.s8 %v3647
        %v3649 = vlaneseq
        %v3650 = vshrl.u32 %v3649, 7
        %v3651 = vsub.s32 %v3648, %v3650
        %v3652 = vrot.slane %v3638, %v3651
        %v3653 = vcombine.high %v3645, %v3645
        %v3654 = vcombine.high %v3652, %v3652
        %v3655 = vcombine.high %v3527, %v3527
        %v3657 = vunpack.c.l.s4 1983009808
        %v3658 = vunpack.c.0.s8 %v3657
        %v3659 = vlaneseq
        %v3660 = vshrl.u32 %v3659, 7
        %v3661 = vsub.s32 %v3658, %v3660
        %v3662 = vrot.slane %v3527, %v3661
        %v3664 = vunpack.c.l.s4 1983009808
        %v3665 = vunpack.c.0.s8 %v3664
        %v3666 = vlaneseq
        %v3667 = vshrl.u32 %v3666, 7
        %v3668 = vsub.s32 %v3665, %v3667
        %v3669 = vrot.slane %v3655, %v3668
        %v3670 = vcombine.high %v3662, %v3662
        %v3671 = vcombine.high %v3669, %v3669
        %v3704 = vmax.f32 %v3543, %v3560
        %v3705 = vmax.f32 %v3551, %v3568
        %v3706 = vmax.f32 %v3550, %v3567
        %v3707 = vmax.f32 %v3552, %v3569
        %v3708 = vmax.f32 %v3577, %v3594
        %v3709 = vmax.f32 %v3585, %v3602
        %v3710 = vmax.f32 %v3584, %v3601
        %v3711 = vmax.f32 %v3586, %v3603
        %v3712 = vmax.f32 %v3611, %v3628
        %v3713 = vmax.f32 %v3619, %v3636
        %v3714 = vmax.f32 %v3618, %v3635
        %v3715 = vmax.f32 %v3620, %v3637
        %v3716 = vmax.f32 %v3645, %v3662
        %v3717 = vmax.f32 %v3653, %v3670
        %v3718 = vmax.f32 %v3652, %v3669
        %v3719 = vmax.f32 %v3654, %v3671
        %v3736 = vrot.slane %v3704, 7
        %v3737 = vrot.slane %v3736, 2
        %v3738 = vrot.slane %v3705, 7
        %v3739 = vrot.slane %v3738, 2
        %v3740 = vrot.slane %v3706, 7
        %v3741 = vrot.slane %v3740, 2
        %v3742 = vrot.slane %v3707, 7
        %v3743 = vrot.slane %v3742, 2
        %v3744 = vrot.slane %v3708, 7
        %v3745 = vrot.slane %v3744, 2
        %v3746 = vrot.slane %v3709, 7
        %v3747 = vrot.slane %v3746, 2
        %v3748 = vrot.slane %v3710, 7
        %v3749 = vrot.slane %v3748, 2
        %v3750 = vrot.slane %v3711, 7
        %v3751 = vrot.slane %v3750, 2
        %v3752 = vrot.slane %v3712, 7
        %v3753 = vrot.slane %v3752, 2
        %v3754 = vrot.slane %v3713, 7
        %v3755 = vrot.slane %v3754, 2
        %v3756 = vrot.slane %v3714, 7
        %v3757 = vrot.slane %v3756, 2
        %v3758 = vrot.slane %v3715, 7
        %v3759 = vrot.slane %v3758, 2
        %v3760 = vrot.slane %v3716, 7
        %v3761 = vrot.slane %v3760, 2
        %v3762 = vrot.slane %v3717, 7
        %v3763 = vrot.slane %v3762, 2
        %v3764 = vrot.slane %v3718, 7
        %v3765 = vrot.slane %v3764, 2
        %v3766 = vrot.slane %v3719, 7
        %v3767 = vrot.slane %v3766, 2
        %v3784 = vmax.f32 %v3704, %v3737
        %v3785 = vmax.f32 %v3705, %v3739
        %v3786 = vmax.f32 %v3706, %v3741
        %v3787 = vmax.f32 %v3707, %v3743
        %v3788 = vmax.f32 %v3708, %v3745
        %v3789 = vmax.f32 %v3709, %v3747
        %v3790 = vmax.f32 %v3710, %v3749
        %v3791 = vmax.f32 %v3711, %v3751
        %v3792 = vmax.f32 %v3712, %v3753
        %v3793 = vmax.f32 %v3713, %v3755
        %v3794 = vmax.f32 %v3714, %v3757
        %v3795 = vmax.f32 %v3715, %v3759
        %v3796 = vmax.f32 %v3716, %v3761
        %v3797 = vmax.f32 %v3717, %v3763
        %v3798 = vmax.f32 %v3718, %v3765
        %v3799 = vmax.f32 %v3719, %v3767
        %v3800 = vpack.c.bf16 %v3784, %v3784
        %v3801 = vpack.c.bf16 %v3785, %v3785
        %v3802 = vpack.c.bf16 %v3786, %v3786
        %v3803 = vpack.c.bf16 %v3787, %v3787
        %v3804 = vpack.c.bf16 %v3788, %v3788
        %v3805 = vpack.c.bf16 %v3789, %v3789
        %v3806 = vpack.c.bf16 %v3790, %v3790
        %v3807 = vpack.c.bf16 %v3791, %v3791
        %v3808 = vpack.c.bf16 %v3792, %v3792
        %v3809 = vpack.c.bf16 %v3793, %v3793
        %v3810 = vpack.c.bf16 %v3794, %v3794
        %v3811 = vpack.c.bf16 %v3795, %v3795
        %v3812 = vpack.c.bf16 %v3796, %v3796
        %v3813 = vpack.c.bf16 %v3797, %v3797
        %v3814 = vpack.c.bf16 %v3798, %v3798
        %v3815 = vpack.c.bf16 %v3799, %v3799
        %v3832 = vunpack.c.l.b16 %v3800
        %v3833 = vunpack.c.l.b16 %v3801
        %v3834 = vunpack.c.l.b16 %v3802
        %v3835 = vunpack.c.l.b16 %v3803
        %v3836 = vunpack.c.l.b16 %v3804
        %v3837 = vunpack.c.l.b16 %v3805
        %v3838 = vunpack.c.l.b16 %v3806
        %v3839 = vunpack.c.l.b16 %v3807
        %v3840 = vunpack.c.l.b16 %v3808
        %v3841 = vunpack.c.l.b16 %v3809
        %v3842 = vunpack.c.l.b16 %v3810
        %v3843 = vunpack.c.l.b16 %v3811
        %v3844 = vunpack.c.l.b16 %v3812
        %v3845 = vunpack.c.l.b16 %v3813
        %v3846 = vunpack.c.l.b16 %v3814
        %v3847 = vunpack.c.l.b16 %v3815
        %v3848 = vpack.c.b16 %v3832, %v3832
        %v3849 = vpack.c.b16 %v3833, %v3833
        %v3850 = vpack.c.b16 %v3834, %v3834
        %v3851 = vpack.c.b16 %v3835, %v3835
        %v3852 = vpack.c.b16 %v3836, %v3836
        %v3853 = vpack.c.b16 %v3837, %v3837
        %v3854 = vpack.c.b16 %v3838, %v3838
        %v3855 = vpack.c.b16 %v3839, %v3839
        %v3856 = vpack.c.b16 %v3840, %v3840
        %v3857 = vpack.c.b16 %v3841, %v3841
        %v3858 = vpack.c.b16 %v3842, %v3842
        %v3859 = vpack.c.b16 %v3843, %v3843
        %v3860 = vpack.c.b16 %v3844, %v3844
        %v3861 = vpack.c.b16 %v3845, %v3845
        %v3862 = vpack.c.b16 %v3846, %v3846
        %v3863 = vpack.c.b16 %v3847, %v3847
        %v3864 = vunpack.c.l.b16 %v3848
        %v3865 = vunpack.c.l.b16 %v3849
        %v3866 = vunpack.c.l.b16 %v3850
        %v3867 = vunpack.c.l.b16 %v3851
        %v3868 = vunpack.c.l.b16 %v3852
        %v3869 = vunpack.c.l.b16 %v3853
        %v3870 = vunpack.c.l.b16 %v3854
        %v3871 = vunpack.c.l.b16 %v3855
        %v3872 = vunpack.c.l.b16 %v3856
        %v3873 = vunpack.c.l.b16 %v3857
        %v3874 = vunpack.c.l.b16 %v3858
        %v3875 = vunpack.c.l.b16 %v3859
        %v3876 = vunpack.c.l.b16 %v3860
        %v3877 = vunpack.c.l.b16 %v3861
        %v3878 = vunpack.c.l.b16 %v3862
        %v3879 = vunpack.c.l.b16 %v3863
        %v3880 = vrot.slane %v3865, 7
        %vm3881 = vcmask 1041409
        %v3882 = vsel %vm3881, %v3880, %v3864
        %v3883 = vrot.slane %v3866, 6
        %vm3884 = vcmask 1042434
        %v3885 = vsel %vm3884, %v3883, %v3882
        %v3886 = vrot.slane %v3867, 5
        %vm3887 = vcmask 1043459
        %v3888 = vsel %vm3887, %v3886, %v3885
        %v3889 = vrot.slane %v3868, 4
        %vm3890 = vcmask 1044484
        %v3891 = vsel %vm3890, %v3889, %v3888
        %v3892 = vrot.slane %v3869, 3
        %vm3893 = vcmask 1045509
        %v3894 = vsel %vm3893, %v3892, %v3891
        %v3895 = vrot.slane %v3870, 2
        %vm3896 = vcmask 1046534
        %v3897 = vsel %vm3896, %v3895, %v3894
        %v3898 = vrot.slane %v3871, 1
        %vm3899 = vcmask 1047559
        %v3900 = vsel %vm3899, %v3898, %v3897
        %v3901 = vrot.slane %v3873, 7
        %v3902 = vsel %vm3881, %v3901, %v3872
        %v3903 = vrot.slane %v3874, 6
        %v3904 = vsel %vm3884, %v3903, %v3902
        %v3905 = vrot.slane %v3875, 5
        %v3906 = vsel %vm3887, %v3905, %v3904
        %v3907 = vrot.slane %v3876, 4
        %v3908 = vsel %vm3890, %v3907, %v3906
        %v3909 = vrot.slane %v3877, 3
        %v3910 = vsel %vm3893, %v3909, %v3908
        %v3911 = vrot.slane %v3878, 2
        %v3912 = vsel %vm3896, %v3911, %v3910
        %v3913 = vrot.slane %v3879, 1
        %v3914 = vsel %vm3899, %v3913, %v3912
        %v3915 = vpack.c.b16 %v3900, %v3900
        %v3916 = vpack.c.b16 %v3914, %v3914
        %3919 = vst [vmem:[%s301] sm:$0xf] %v3915
        %3920 = vst [vmem:[%s301 + $0x4] sm:$0xf] %v3916
        %s3921 = sand.u32 %s171, 1
        %s3922 = scalar_lea.sflag [#allocation3], %s3921
        %s3923 = sand.u32 %s171, 1
        %s3924 = smul.addr %s3923, 8
        %s3925 = scalar_lea.vmem [#allocation2], %s3924
        // Predicated region
        $region41: #{tpu_custom_call.1} parent=39 // pred_check
          %p3926 = pneg %p181
        $region42: #{tpu_custom_call.1} parent=39 // pred_check_branch
          %3928 = sbr.rel (%p3926) target = $region44
        $region43: #{tpu_custom_call.1} parent=39 // pred_region
          %s3930 = ssub.s32 128, 128
          %3931 = vsyncadd %s3922, %s3930
          %s3932 = smul.addr %s24, 2
          %s3933 = smul.addr %s23, 8
          %s3934 = sadd.s32 %s3932, %s3933
          %s3935 = smul.addr %s3934, 64
          %s3936 = scalar_lea.hbm %s5, %s3935
          %s3937 = sshll.u32 %s3925, 4
          %s3938 = int_to_ptr.vmem [resolvable:$true] %s3937
          %3943 = dma.vmem_to_hbm [thread:$0]  %s3938, 128, %s3936, %s3922, 64, 64, 4
        $region44: #{tpu_custom_call.1} parent=39 // pred_fallthru
          _
      $region40: #{tpu_custom_call.1} parent=5 // pred_fallthru
        _
      %p3944 = scmp.le.s32.totalorder 2, %s14
      // Predicated region
      $region45: #{tpu_custom_call.1} parent=5 // pred_check
        %p3945 = pneg %p3944
      $region46: #{tpu_custom_call.1} parent=5 // pred_check_branch
        %3947 = sbr.rel (%p3945) target = $region48
      $region47: #{tpu_custom_call.1} parent=5 // pred_region
        %s3948 = ssub.s32 %s14, 2
        // Predicated region
        $region49: #{tpu_custom_call.1} parent=47 // pred_check
          %p3949 = pneg %p187
        $region50: #{tpu_custom_call.1} parent=47 // pred_check_branch
          %3951 = sbr.rel (%p3949) target = $region52
        $region51: #{tpu_custom_call.1} parent=47 // pred_region
          %s3952 = sand.u32 %s172, 1
          %s3953 = scalar_lea.sflag [#allocation3], %s3952
          %s3954 = sand.u32 %s172, 1
          %s3955 = smul.addr %s3954, 8
          %s3956 = scalar_lea.vmem [#allocation2], %s3955
          %3957 = dma.done %s3953, 128
        $region52: #{tpu_custom_call.1} parent=47 // pred_fallthru
          _
      $region48: #{tpu_custom_call.1} parent=5 // pred_fallthru
        _
    $region6: #{tpu_custom_call.1} parent=1 // loop_footer
      %s18 = sadd.s32 1, %s14
    $region7: #{tpu_custom_call.1} parent=1 // loop_footer_branch
      %13 = sbr.rel target = $region3
    $region8: #{tpu_custom_call.1} parent=1 // loop_exit
      _
    %3958 = vsyncpa [#allocation3], 1
    %s3959 = scalar_lea.sflag [#allocation3], 1
    %3960 = vsyncpa %s3959, 1

</llo_original>
